<compile_context>
chip_gen: v7x
topology: tpu7x:2x2x1
jax: 0.10.0
libtpu: 0.0.40
codegen_flags: <defaults>
</compile_context>

<pallas_src>
import jax
import jax.numpy as jnp
from jax import lax
from jax.experimental import pallas as pl
from jax.experimental.pallas import tpu as pltpu

K = 4               # kernel_size of both convs
LEAKY_SLOPE = 0.2   # nn.LeakyReLU(0.2)
BN_EPS = 1e-5       # nn.BatchNorm2d default eps
LANE = 128          # TPU lane width


def _round_up(x, m):
    return (x + m - 1) // m * m


# ------------------------------- down kernel --------------------------------
def _down_kernel(x_ref, w_ref, o_ref):
    """LeakyReLU(0.2) -> Conv2d(k=4, s=2, p=1, bias=False) -> ReLU, one image.

    x_ref: (1, oh, ow, 16*cin) bf16  tap-folded (im2col) parity-packed patches
    w_ref: (16*cin, cpad)      bf16  folded conv weight, out-channels zero-padded to cpad
    o_ref: (1, oh+2, ow+2, cpad) f32 ReLU(conv) surrounded by a zero ring (for the up conv)
    """
    oh, ow, kc = x_ref.shape[1], x_ref.shape[2], x_ref.shape[3]
    cpad = o_ref.shape[3]

    xv = x_ref[0].astype(jnp.float32)
    # LeakyReLU(0) == 0, so applying it to zero-padded taps is equivalent (note: only
    # valid for zero padding; reflect padding in other blocks would break this fusion).
    xv = jnp.where(xv >= 0.0, xv, LEAKY_SLOPE * xv)
    patch = xv.reshape(oh * ow, kc).astype(jnp.bfloat16)          # (oh*ow, 16*cin)

    # single matmul, contraction = K*K*cin (tap-folded), f32 accumulation on the MXU
    acc = jnp.dot(patch, w_ref[...], preferred_element_type=jnp.float32)
    feat = jnp.maximum(acc, 0.0)                                  # fused "uprelu"

    # emit the zero ring + interior so the up kernel needs no separate pad pass
    o_ref[...] = jnp.zeros(o_ref.shape, o_ref.dtype)
    o_ref[0, 1:1 + oh, 1:1 + ow, :] = feat.reshape(oh, ow, cpad)


# -------------------------------- up kernel ---------------------------------
def _up_kernel(d_ref, w_ref, g_ref, b_ref, o_ref):
    """ConvTranspose2d(k=4, s=2, p=1, bias=False) via sub-pixel decomposition, fused with
    BatchNorm2d (training-mode batch statistics, two-pass centered variance).

    d_ref: (1, oh+2, ow+2, cpad) f32  padded down feature of one image
    w_ref: (2, 2, 4*cpad, C)     bf16 per-output-parity folded ConvT weight
    g_ref, b_ref: (1, C)         f32  BN affine parameters
    o_ref: (4*N, oh*ow, C)       f32  resident across the batch grid;
                                      row 4*b + 2*r + s holds output parity (r, s) of image b
    """
    b = pl.program_id(0)
    nb = pl.num_programs(0)
    oh = d_ref.shape[1] - 2
    ow = d_ref.shape[2] - 2
    cpad = d_ref.shape[3]

    for r in range(2):
        for s in range(2):
            pieces = []
            for dy in range(2):
                for dx in range(2):
                    p = d_ref[0, r + dy:r + dy + oh, s + dx:s + dx + ow, :]
                    pieces.append(p.reshape(oh * ow, cpad).astype(jnp.bfloat16))
            # 128-lane-aligned concat -> one matmul per parity, contraction 4*cpad
            patch = jnp.concatenate(pieces, axis=-1)              # (oh*ow, 4*cpad)
            acc = jnp.dot(patch, w_ref[r, s], preferred_element_type=jnp.float32)
            o_ref[4 * b + 2 * r + s] = acc                        # raw (pre-BN) conv output

    # BatchNorm2d finalize: batch stats need every image, so normalize in place once the
    # last grid step has written its slabs (the output block is resident in VMEM).
    @pl.when(b == nb - 1)
    def _():
        v = o_ref[...]                                            # (4N, oh*ow, C) f32
        mean = jnp.mean(v, axis=(0, 1), keepdims=True)
        var = jnp.mean(jnp.square(v - mean), axis=(0, 1), keepdims=True)  # centered, stable
        g = g_ref[...].reshape(1, 1, -1)
        bb = b_ref[...].reshape(1, 1, -1)
        o_ref[...] = (v - mean) * lax.rsqrt(var + BN_EPS) * g + bb


# --------------------------------- wrapper ----------------------------------
def unet_skip_innermost(x_nchw, params):
    """UnetSkipConnectionBlock(outer_nc, inner_nc, innermost=True) forward (NCHW in/out)."""
    w_down = params["down_w"]          # (inner_nc, input_nc, 4, 4)  Conv2d OIHW
    w_up = params["up_w"]              # (inner_nc, outer_nc, 4, 4)  ConvTranspose2d IOHW
    gamma = params["bn_gamma"].astype(jnp.float32).reshape(1, -1)
    beta = params["bn_beta"].astype(jnp.float32).reshape(1, -1)

    n, cin, h, w = x_nchw.shape
    inner_nc = w_down.shape[0]
    outer_nc = w_up.shape[1]
    assert h % 2 == 0 and w % 2 == 0
    oh, ow = h // 2, w // 2
    hh, wh = oh + 1, ow + 1
    cpad = _round_up(inner_nc, LANE)   # lane-dense intermediate channel count

    x32 = x_nchw.astype(jnp.float32)
    xb = x32.astype(jnp.bfloat16)      # bf16 matmul inputs (halves input DMA bytes)

    # ---- layout glue: pad + 2x2 parity pack + tap concat (tiny, done once) ----
    # channel of xq = (2a+b)*cin + c  with  a = h-parity, b = w-parity of the padded input
    xpad = jnp.pad(xb, ((0, 0), (0, 0), (1, 1), (1, 1)))
    xq = (xpad.reshape(n, cin, hh, 2, wh, 2)
              .transpose(0, 2, 4, 3, 5, 1)
              .reshape(n, hh, wh, 4 * cin))
    # column of xpatch = ((2dh+dw)*4 + 2a+b)*cin + c   (tap-folded im2col, K=16*cin)
    xpatch = jnp.concatenate(
        [xq[:, dh:dh + oh, dw:dw + ow, :] for dh in range(2) for dw in range(2)],
        axis=-1)                                                  # (n, oh, ow, 16*cin)

    # folded down-conv weight, rows match xpatch columns; out-channels zero-padded to cpad
    wd = (w_down.reshape(inner_nc, cin, 2, 2, 2, 2)               # (o, c, dh, a, dw, b)
                .transpose(2, 4, 3, 5, 1, 0)                      # (dh, dw, a, b, c, o)
                .reshape(K * K * cin, inner_nc))
    wd = jnp.pad(wd, ((0, 0), (0, cpad - inner_nc))).astype(jnp.bfloat16)

    down_flops = 2 * n * oh * ow * (K * K * cin) * cpad
    down_bytes = xpatch.size * 2 + wd.size * 2 + n * (oh + 2) * (ow + 2) * cpad * 4
    down_padded = pl.pallas_call(
        _down_kernel,
        grid=(n,),
        in_specs=[
            pl.BlockSpec((1, oh, ow, K * K * cin), lambda b: (b, 0, 0, 0)),
            pl.BlockSpec((K * K * cin, cpad), lambda b: (0, 0)),
        ],
        out_specs=pl.BlockSpec((1, oh + 2, ow + 2, cpad), lambda b: (b, 0, 0, 0)),
        out_shape=jax.ShapeDtypeStruct((n, oh + 2, ow + 2, cpad), jnp.float32),
        compiler_params=pltpu.CompilerParams(
            dimension_semantics=("parallel",),          # independent per image (megacore)
            vmem_limit_bytes=32 * 1024 * 1024),
        cost_estimate=pl.CostEstimate(flops=int(down_flops), transcendentals=0,
                                      bytes_accessed=int(down_bytes)),
    )(xpatch, wd)

    # folded up-conv weight per output parity (r, s): row = (2dy+dx)*cpad + ci,
    # tap index ky = 3 - 2*dy - r, kx = 3 - 2*dx - s ; padded input channels -> zero rows
    wu = (jnp.flip(w_up, axis=(2, 3))
             .reshape(inner_nc, outer_nc, 2, 2, 2, 2)             # (ci, o, dy, r, dx, s)
             .transpose(3, 5, 2, 4, 0, 1))                        # (r, s, dy, dx, ci, o)
    wu = jnp.pad(wu, ((0, 0), (0, 0), (0, 0), (0, 0), (0, cpad - inner_nc), (0, 0)))
    wu = wu.reshape(2, 2, 4 * cpad, outer_nc).astype(jnp.bfloat16)

    up_flops = 2 * (4 * n * oh * ow) * (4 * cpad) * outer_nc + 10 * n * h * w * outer_nc
    up_bytes = down_padded.size * 4 + wu.size * 2 + 2 * 4 * n * oh * ow * outer_nc * 4
    up3 = pl.pallas_call(
        _up_kernel,
        grid=(n,),
        in_specs=[
            pl.BlockSpec((1, oh + 2, ow + 2, cpad), lambda b: (b, 0, 0, 0)),
            pl.BlockSpec((2, 2, 4 * cpad, outer_nc), lambda b: (0, 0, 0, 0)),
            pl.BlockSpec((1, outer_nc), lambda b: (0, 0)),
            pl.BlockSpec((1, outer_nc), lambda b: (0, 0)),
        ],
        out_specs=pl.BlockSpec((4 * n, oh * ow, outer_nc), lambda b: (0, 0, 0)),
        out_shape=jax.ShapeDtypeStruct((4 * n, oh * ow, outer_nc), jnp.float32),
        compiler_params=pltpu.CompilerParams(
            dimension_semantics=("arbitrary",),         # BN reduction + resident output
            vmem_limit_bytes=32 * 1024 * 1024),
        cost_estimate=pl.CostEstimate(flops=int(up_flops), transcendentals=int(outer_nc),
                                      bytes_accessed=int(up_bytes)),
    )(down_padded, wu, gamma, beta)

    # de-parity (pixel shuffle) + NHWC->NCHW in a single transpose, then the skip concat.
    up_nchw = (up3.reshape(n, 2, 2, oh, ow, outer_nc)
                  .transpose(0, 5, 3, 1, 4, 2)
                  .reshape(n, outer_nc, h, w))
    # TODO(synk): at real sizes, write the up output straight into the channel-offset slice
    # of a preallocated (n, h, w, 2*outer_nc) buffer instead of a separate concatenate.
    return jnp.concatenate([x32, up_nchw], axis=1)


# ------------------------------ validation ref ------------------------------
def _reference_forward(x_nchw, params):
    """Pure-JAX (XLA conv) reference with the same bf16 operand / f32 accumulation points."""
    x32 = x_nchw.astype(jnp.float32)
    xb = x32.astype(jnp.bfloat16).astype(jnp.float32)
    h = jnp.where(xb >= 0.0, xb, LEAKY_SLOPE * xb)
    h = lax.conv_general_dilated(
        h.astype(jnp.bfloat16), params["down_w"].astype(jnp.bfloat16),
        window_strides=(2, 2), padding=((1, 1), (1, 1)),
        dimension_numbers=("NCHW", "OIHW", "NCHW"),
        preferred_element_type=jnp.float32)
    h = jnp.maximum(h, 0.0).astype(jnp.bfloat16)
    w_eq = jnp.transpose(jnp.flip(params["up_w"], axis=(2, 3)), (1, 0, 2, 3))
    h = lax.conv_general_dilated(
        h, w_eq.astype(jnp.bfloat16), window_strides=(1, 1),
        padding=((2, 2), (2, 2)), lhs_dilation=(2, 2),
        dimension_numbers=("NCHW", "OIHW", "NCHW"),
        preferred_element_type=jnp.float32)
    mean = jnp.mean(h, axis=(0, 2, 3), keepdims=True)
    var = jnp.mean(jnp.square(h - mean), axis=(0, 2, 3), keepdims=True)
    h = (h - mean) * lax.rsqrt(var + BN_EPS)
    h = h * params["bn_gamma"].reshape(1, -1, 1, 1) + params["bn_beta"].reshape(1, -1, 1, 1)
    return jnp.concatenate([x32, h], axis=1)


if __name__ == "__main__":
    key = jax.random.PRNGKey(0)
    kx, kd, ku = jax.random.split(key, 3)

    # innermost block: input_nc defaults to outer_nc; BatchNorm => use_bias = False
    N, outer_nc, inner_nc, H, W = 2, 4, 8, 16, 16
    x = jax.random.normal(kx, (N, outer_nc, H, W), dtype=jnp.float32)
    params = {
        "down_w": 0.1 * jax.random.normal(kd, (inner_nc, outer_nc, K, K), jnp.float32),
        "up_w": 0.1 * jax.random.normal(ku, (inner_nc, outer_nc, K, K), jnp.float32),
        "bn_gamma": jnp.ones((outer_nc,), jnp.float32),   # BatchNorm2d default init
        "bn_beta": jnp.zeros((outer_nc,), jnp.float32),
    }

    out = jax.jit(unet_skip_innermost)(x, params)
    out = jax.block_until_ready(out)
    assert out.shape == (N, 2 * outer_nc, H, W), out.shape

    ref = _reference_forward(x, params)
    err = float(jnp.max(jnp.abs(out - ref)))
    assert jnp.allclose(out, ref, rtol=2e-3, atol=2e-3), err

    print("KERNEL_OK")
</pallas_src>

<mosaic_0001>
module attributes {stable_mosaic.version = 11 : i64} {
  func.func @_down_kernel(%arg0: i32, %arg1: memref<1x8x8x64xbf16, #tpu.memory_space<vmem>>, %arg2: memref<64x128xbf16, #tpu.memory_space<vmem>>, %arg3: memref<1x10x10x128xf32, #tpu.memory_space<vmem>>) attributes {dimension_semantics = [#tpu.dimension_semantics<parallel>], iteration_bounds = array<i64: 2>, scalar_prefetch = 0 : i64, scratch_operands = 0 : i64, tpu.core_type = #tpu.core_type<tc>, window_params = [{transform_indices = @transform_0, window_bounds = array<i64: 1, 8, 8, 64>}, {pipeline_mode = #tpu.pipeline_mode<synchronous>, transform_indices = @transform_1, window_bounds = array<i64: 64, 128>}, {transform_indices = @transform_2, window_bounds = array<i64: 1, 10, 10, 128>}]} {
    %c0 = arith.constant 0 : index
    %c0_0 = arith.constant 0 : index
    %c0_1 = arith.constant 0 : index
    %c0_2 = arith.constant 0 : index
    %0 = vector.load %arg1[%c0, %c0_0, %c0_1, %c0_2] : memref<1x8x8x64xbf16, #tpu.memory_space<vmem>>, vector<1x8x8x64xbf16>
    %1 = vector.shape_cast %0 : vector<1x8x8x64xbf16> to vector<8x8x64xbf16>
    %2 = arith.extf %1 : vector<8x8x64xbf16> to vector<8x8x64xf32>
    %cst = arith.constant 0.000000e+00 : f32
    %3 = vector.broadcast %cst : f32 to vector<8x8x64xf32>
    %4 = arith.cmpf oge, %2, %3 : vector<8x8x64xf32>
    %cst_3 = arith.constant 2.000000e-01 : f32
    %5 = vector.broadcast %cst_3 : f32 to vector<8x8x64xf32>
    %6 = arith.mulf %5, %2 : vector<8x8x64xf32>
    %7 = arith.select %4, %2, %6 : vector<8x8x64xi1>, vector<8x8x64xf32>
    %8 = vector.shape_cast %7 : vector<8x8x64xf32> to vector<64x64xf32>
    %9 = arith.truncf %8 : vector<64x64xf32> to vector<64x64xbf16>
    %c0_4 = arith.constant 0 : index
    %c0_5 = arith.constant 0 : index
    %10 = vector.load %arg2[%c0_4, %c0_5] : memref<64x128xbf16, #tpu.memory_space<vmem>>, vector<64x128xbf16>
    %cst_6 = arith.constant dense<0.000000e+00> : vector<64x128xf32>
    %11 = tpu.matmul %9, %10, %cst_6 {dimension_numbers = #tpu.dot_dimension_numbers<[1], [0], [0], [1], [0, 0, 1, 1], [], []>} : vector<64x64xbf16>, vector<64x128xbf16>, vector<64x128xf32> -> vector<64x128xf32>
    %cst_7 = arith.constant 0.000000e+00 : f32
    %12 = vector.broadcast %cst_7 : f32 to vector<64x128xf32>
    %13 = arith.maximumf %11, %12 : vector<64x128xf32>
    %cst_8 = arith.constant 0.000000e+00 : f32
    %14 = vector.broadcast %cst_8 : f32 to vector<1x10x10x128xf32>
    %c0_9 = arith.constant 0 : index
    %c0_10 = arith.constant 0 : index
    %c0_11 = arith.constant 0 : index
    %c0_12 = arith.constant 0 : index
    %15 = vector.load %arg3[%c0_9, %c0_10, %c0_11, %c0_12] : memref<1x10x10x128xf32, #tpu.memory_space<vmem>>, vector<1x10x10x128xf32>
    tpu.vector_store %arg3[%c0_9, %c0_10, %c0_11, %c0_12], %14 {strides = array<i32>} : memref<1x10x10x128xf32, #tpu.memory_space<vmem>>, vector<1x10x10x128xf32>,
    %16 = vector.shape_cast %13 : vector<64x128xf32> to vector<8x8x128xf32>
    %c0_13 = arith.constant 0 : index
    %c1 = arith.constant 1 : index
    %c1_14 = arith.constant 1 : index
    %c0_15 = arith.constant 0 : index
    %17 = vector.load %arg3[%c0_13, %c1, %c1_14, %c0_15] : memref<1x10x10x128xf32, #tpu.memory_space<vmem>>, vector<1x8x8x128xf32>
    %18 = vector.shape_cast %17 : vector<1x8x8x128xf32> to vector<8x8x128xf32>
    %19 = vector.shape_cast %16 : vector<8x8x128xf32> to vector<1x8x8x128xf32>
    tpu.vector_store %arg3[%c0_13, %c1, %c1_14, %c0_15], %19 {strides = array<i32>} : memref<1x10x10x128xf32, #tpu.memory_space<vmem>>, vector<1x8x8x128xf32>,
    return
  }
  func.func @transform_0(%arg0: i32) -> (i32, i32, i32, i32) {
    %c0_i32 = arith.constant 0 : i32
    %c0_i32_0 = arith.constant 0 : i32
    %c0_i32_1 = arith.constant 0 : i32
    %c0_i32_2 = arith.constant 0 : i32
    return %arg0, %c0_i32, %c0_i32_0, %c0_i32_1 : i32, i32, i32, i32
  }
  func.func @transform_1(%arg0: i32) -> (i32, i32) {
    %c0_i32 = arith.constant 0 : i32
    %c0_i32_0 = arith.constant 0 : i32
    %c0_i32_1 = arith.constant 0 : i32
    return %c0_i32, %c0_i32_0 : i32, i32
  }
  func.func @transform_2(%arg0: i32) -> (i32, i32, i32, i32) {
    %c0_i32 = arith.constant 0 : i32
    %c0_i32_0 = arith.constant 0 : i32
    %c0_i32_1 = arith.constant 0 : i32
    %c0_i32_2 = arith.constant 0 : i32
    return %arg0, %c0_i32, %c0_i32_0, %c0_i32_1 : i32, i32, i32, i32
  }
}

module attributes {stable_mosaic.version = 11 : i64} {
  func.func @_up_kernel(%arg0: i32, %arg1: memref<1x10x10x128xf32, #tpu.memory_space<vmem>>, %arg2: memref<2x2x512x4xbf16, #tpu.memory_space<vmem>>, %arg3: memref<1x4xf32, #tpu.memory_space<vmem>>, %arg4: memref<1x4xf32, #tpu.memory_space<vmem>>, %arg5: memref<8x64x4xf32, #tpu.memory_space<vmem>>) attributes {dimension_semantics = [#tpu.dimension_semantics<arbitrary>], iteration_bounds = array<i64: 2>, scalar_prefetch = 0 : i64, scratch_operands = 0 : i64, tpu.core_type = #tpu.core_type<tc>, window_params = [{transform_indices = @transform_0, window_bounds = array<i64: 1, 10, 10, 128>}, {pipeline_mode = #tpu.pipeline_mode<synchronous>, transform_indices = @transform_1, window_bounds = array<i64: 2, 2, 512, 4>}, {pipeline_mode = #tpu.pipeline_mode<synchronous>, transform_indices = @transform_2, window_bounds = array<i64: 1, 4>}, {pipeline_mode = #tpu.pipeline_mode<synchronous>, transform_indices = @transform_3, window_bounds = array<i64: 1, 4>}, {pipeline_mode = #tpu.pipeline_mode<synchronous>, transform_indices = @transform_4, window_bounds = array<i64: 8, 64, 4>}]} {
    %c0 = arith.constant 0 : index
    %c0_0 = arith.constant 0 : index
    %c0_1 = arith.constant 0 : index
    %c0_2 = arith.constant 0 : index
    %0 = vector.load %arg1[%c0, %c0_0, %c0_1, %c0_2] : memref<1x10x10x128xf32, #tpu.memory_space<vmem>>, vector<1x8x8x128xf32>
    %1 = vector.shape_cast %0 : vector<1x8x8x128xf32> to vector<8x8x128xf32>
    %2 = vector.shape_cast %1 : vector<8x8x128xf32> to vector<64x128xf32>
    %3 = arith.truncf %2 : vector<64x128xf32> to vector<64x128xbf16>
    %c0_3 = arith.constant 0 : index
    %c0_4 = arith.constant 0 : index
    %c1 = arith.constant 1 : index
    %c0_5 = arith.constant 0 : index
    %4 = vector.load %arg1[%c0_3, %c0_4, %c1, %c0_5] : memref<1x10x10x128xf32, #tpu.memory_space<vmem>>, vector<1x8x8x128xf32>
    %5 = vector.shape_cast %4 : vector<1x8x8x128xf32> to vector<8x8x128xf32>
    %6 = vector.shape_cast %5 : vector<8x8x128xf32> to vector<64x128xf32>
    %7 = arith.truncf %6 : vector<64x128xf32> to vector<64x128xbf16>
    %c0_6 = arith.constant 0 : index
    %c1_7 = arith.constant 1 : index
    %c0_8 = arith.constant 0 : index
    %c0_9 = arith.constant 0 : index
    %8 = vector.load %arg1[%c0_6, %c1_7, %c0_8, %c0_9] : memref<1x10x10x128xf32, #tpu.memory_space<vmem>>, vector<1x8x8x128xf32>
    %9 = vector.shape_cast %8 : vector<1x8x8x128xf32> to vector<8x8x128xf32>
    %10 = vector.shape_cast %9 : vector<8x8x128xf32> to vector<64x128xf32>
    %11 = arith.truncf %10 : vector<64x128xf32> to vector<64x128xbf16>
    %c0_10 = arith.constant 0 : index
    %c1_11 = arith.constant 1 : index
    %c1_12 = arith.constant 1 : index
    %c0_13 = arith.constant 0 : index
    %12 = vector.load %arg1[%c0_10, %c1_11, %c1_12, %c0_13] : memref<1x10x10x128xf32, #tpu.memory_space<vmem>>, vector<1x8x8x128xf32>
    %13 = vector.shape_cast %12 : vector<1x8x8x128xf32> to vector<8x8x128xf32>
    %14 = vector.shape_cast %13 : vector<8x8x128xf32> to vector<64x128xf32>
    %15 = arith.truncf %14 : vector<64x128xf32> to vector<64x128xbf16>
    %16 = tpu.concatenate %3, %7, %11, %15 in 1 : vector<64x128xbf16>, vector<64x128xbf16>, vector<64x128xbf16>, vector<64x128xbf16> -> vector<64x512xbf16>
    %c0_14 = arith.constant 0 : index
    %c0_15 = arith.constant 0 : index
    %c0_16 = arith.constant 0 : index
    %c0_17 = arith.constant 0 : index
    %17 = vector.load %arg2[%c0_14, %c0_15, %c0_16, %c0_17] : memref<2x2x512x4xbf16, #tpu.memory_space<vmem>>, vector<1x1x512x4xbf16>
    %18 = vector.shape_cast %17 : vector<1x1x512x4xbf16> to vector<512x4xbf16>
    %cst = arith.constant dense<0.000000e+00> : vector<64x4xf32>
    %19 = tpu.matmul %16, %18, %cst {dimension_numbers = #tpu.dot_dimension_numbers<[1], [0], [0], [1], [0, 0, 1, 1], [], []>} : vector<64x512xbf16>, vector<512x4xbf16>, vector<64x4xf32> -> vector<64x4xf32>
    %c4_i32 = arith.constant 4 : i32
    %20 = arith.muli %c4_i32, %arg0 : i32
    %c0_i32 = arith.constant 0 : i32
    %21 = arith.addi %20, %c0_i32 : i32
    %c0_i32_18 = arith.constant 0 : i32
    %22 = arith.addi %21, %c0_i32_18 : i32
    %23 = arith.index_cast %22 : i32 to index
    %c0_19 = arith.constant 0 : index
    %c0_20 = arith.constant 0 : index
    %24 = vector.load %arg5[%23, %c0_19, %c0_20] : memref<8x64x4xf32, #tpu.memory_space<vmem>>, vector<1x64x4xf32>
    %25 = vector.shape_cast %24 : vector<1x64x4xf32> to vector<64x4xf32>
    %26 = vector.shape_cast %19 : vector<64x4xf32> to vector<1x64x4xf32>
    tpu.vector_store %arg5[%23, %c0_19, %c0_20], %26 {strides = array<i32>} : memref<8x64x4xf32, #tpu.memory_space<vmem>>, vector<1x64x4xf32>,
    %c0_21 = arith.constant 0 : index
    %c0_22 = arith.constant 0 : index
    %c1_23 = arith.constant 1 : index
    %c0_24 = arith.constant 0 : index
    %27 = vector.load %arg1[%c0_21, %c0_22, %c1_23, %c0_24] : memref<1x10x10x128xf32, #tpu.memory_space<vmem>>, vector<1x8x8x128xf32>
    %28 = vector.shape_cast %27 : vector<1x8x8x128xf32> to vector<8x8x128xf32>
    %29 = vector.shape_cast %28 : vector<8x8x128xf32> to vector<64x128xf32>
    %30 = arith.truncf %29 : vector<64x128xf32> to vector<64x128xbf16>
    %c0_25 = arith.constant 0 : index
    %c0_26 = arith.constant 0 : index
    %c2 = arith.constant 2 : index
    %c0_27 = arith.constant 0 : index
    %31 = vector.load %arg1[%c0_25, %c0_26, %c2, %c0_27] : memref<1x10x10x128xf32, #tpu.memory_space<vmem>>, vector<1x8x8x128xf32>
    %32 = vector.shape_cast %31 : vector<1x8x8x128xf32> to vector<8x8x128xf32>
    %33 = vector.shape_cast %32 : vector<8x8x128xf32> to vector<64x128xf32>
    %34 = arith.truncf %33 : vector<64x128xf32> to vector<64x128xbf16>
    %c0_28 = arith.constant 0 : index
    %c1_29 = arith.constant 1 : index
    %c1_30 = arith.constant 1 : index
    %c0_31 = arith.constant 0 : index
    %35 = vector.load %arg1[%c0_28, %c1_29, %c1_30, %c0_31] : memref<1x10x10x128xf32, #tpu.memory_space<vmem>>, vector<1x8x8x128xf32>
    %36 = vector.shape_cast %35 : vector<1x8x8x128xf32> to vector<8x8x128xf32>
    %37 = vector.shape_cast %36 : vector<8x8x128xf32> to vector<64x128xf32>
    %38 = arith.truncf %37 : vector<64x128xf32> to vector<64x128xbf16>
    %c0_32 = arith.constant 0 : index
    %c1_33 = arith.constant 1 : index
    %c2_34 = arith.constant 2 : index
    %c0_35 = arith.constant 0 : index
    %39 = vector.load %arg1[%c0_32, %c1_33, %c2_34, %c0_35] : memref<1x10x10x128xf32, #tpu.memory_space<vmem>>, vector<1x8x8x128xf32>
    %40 = vector.shape_cast %39 : vector<1x8x8x128xf32> to vector<8x8x128xf32>
    %41 = vector.shape_cast %40 : vector<8x8x128xf32> to vector<64x128xf32>
    %42 = arith.truncf %41 : vector<64x128xf32> to vector<64x128xbf16>
    %43 = tpu.concatenate %30, %34, %38, %42 in 1 : vector<64x128xbf16>, vector<64x128xbf16>, vector<64x128xbf16>, vector<64x128xbf16> -> vector<64x512xbf16>
    %c0_36 = arith.constant 0 : index
    %c1_37 = arith.constant 1 : index
    %c0_38 = arith.constant 0 : index
    %c0_39 = arith.constant 0 : index
    %44 = vector.load %arg2[%c0_36, %c1_37, %c0_38, %c0_39] : memref<2x2x512x4xbf16, #tpu.memory_space<vmem>>, vector<1x1x512x4xbf16>
    %45 = vector.shape_cast %44 : vector<1x1x512x4xbf16> to vector<512x4xbf16>
    %cst_40 = arith.constant dense<0.000000e+00> : vector<64x4xf32>
    %46 = tpu.matmul %43, %45, %cst_40 {dimension_numbers = #tpu.dot_dimension_numbers<[1], [0], [0], [1], [0, 0, 1, 1], [], []>} : vector<64x512xbf16>, vector<512x4xbf16>, vector<64x4xf32> -> vector<64x4xf32>
    %c4_i32_41 = arith.constant 4 : i32
    %47 = arith.muli %c4_i32_41, %arg0 : i32
    %c0_i32_42 = arith.constant 0 : i32
    %48 = arith.addi %47, %c0_i32_42 : i32
    %c1_i32 = arith.constant 1 : i32
    %49 = arith.addi %48, %c1_i32 : i32
    %50 = arith.index_cast %49 : i32 to index
    %c0_43 = arith.constant 0 : index
    %c0_44 = arith.constant 0 : index
    %51 = vector.load %arg5[%50, %c0_43, %c0_44] : memref<8x64x4xf32, #tpu.memory_space<vmem>>, vector<1x64x4xf32>
    %52 = vector.shape_cast %51 : vector<1x64x4xf32> to vector<64x4xf32>
    %53 = vector.shape_cast %46 : vector<64x4xf32> to vector<1x64x4xf32>
    tpu.vector_store %arg5[%50, %c0_43, %c0_44], %53 {strides = array<i32>} : memref<8x64x4xf32, #tpu.memory_space<vmem>>, vector<1x64x4xf32>,
    %c0_45 = arith.constant 0 : index
    %c1_46 = arith.constant 1 : index
    %c0_47 = arith.constant 0 : index
    %c0_48 = arith.constant 0 : index
    %54 = vector.load %arg1[%c0_45, %c1_46, %c0_47, %c0_48] : memref<1x10x10x128xf32, #tpu.memory_space<vmem>>, vector<1x8x8x128xf32>
    %55 = vector.shape_cast %54 : vector<1x8x8x128xf32> to vector<8x8x128xf32>
    %56 = vector.shape_cast %55 : vector<8x8x128xf32> to vector<64x128xf32>
    %57 = arith.truncf %56 : vector<64x128xf32> to vector<64x128xbf16>
    %c0_49 = arith.constant 0 : index
    %c1_50 = arith.constant 1 : index
    %c1_51 = arith.constant 1 : index
    %c0_52 = arith.constant 0 : index
    %58 = vector.load %arg1[%c0_49, %c1_50, %c1_51, %c0_52] : memref<1x10x10x128xf32, #tpu.memory_space<vmem>>, vector<1x8x8x128xf32>
    %59 = vector.shape_cast %58 : vector<1x8x8x128xf32> to vector<8x8x128xf32>
    %60 = vector.shape_cast %59 : vector<8x8x128xf32> to vector<64x128xf32>
    %61 = arith.truncf %60 : vector<64x128xf32> to vector<64x128xbf16>
    %c0_53 = arith.constant 0 : index
    %c2_54 = arith.constant 2 : index
    %c0_55 = arith.constant 0 : index
    %c0_56 = arith.constant 0 : index
    %62 = vector.load %arg1[%c0_53, %c2_54, %c0_55, %c0_56] : memref<1x10x10x128xf32, #tpu.memory_space<vmem>>, vector<1x8x8x128xf32>
    %63 = vector.shape_cast %62 : vector<1x8x8x128xf32> to vector<8x8x128xf32>
    %64 = vector.shape_cast %63 : vector<8x8x128xf32> to vector<64x128xf32>
    %65 = arith.truncf %64 : vector<64x128xf32> to vector<64x128xbf16>
    %c0_57 = arith.constant 0 : index
    %c2_58 = arith.constant 2 : index
    %c1_59 = arith.constant 1 : index
    %c0_60 = arith.constant 0 : index
    %66 = vector.load %arg1[%c0_57, %c2_58, %c1_59, %c0_60] : memref<1x10x10x128xf32, #tpu.memory_space<vmem>>, vector<1x8x8x128xf32>
    %67 = vector.shape_cast %66 : vector<1x8x8x128xf32> to vector<8x8x128xf32>
    %68 = vector.shape_cast %67 : vector<8x8x128xf32> to vector<64x128xf32>
    %69 = arith.truncf %68 : vector<64x128xf32> to vector<64x128xbf16>
    %70 = tpu.concatenate %57, %61, %65, %69 in 1 : vector<64x128xbf16>, vector<64x128xbf16>, vector<64x128xbf16>, vector<64x128xbf16> -> vector<64x512xbf16>
    %c1_61 = arith.constant 1 : index
    %c0_62 = arith.constant 0 : index
    %c0_63 = arith.constant 0 : index
    %c0_64 = arith.constant 0 : index
    %71 = vector.load %arg2[%c1_61, %c0_62, %c0_63, %c0_64] : memref<2x2x512x4xbf16, #tpu.memory_space<vmem>>, vector<1x1x512x4xbf16>
    %72 = vector.shape_cast %71 : vector<1x1x512x4xbf16> to vector<512x4xbf16>
    %cst_65 = arith.constant dense<0.000000e+00> : vector<64x4xf32>
    %73 = tpu.matmul %70, %72, %cst_65 {dimension_numbers = #tpu.dot_dimension_numbers<[1], [0], [0], [1], [0, 0, 1, 1], [], []>} : vector<64x512xbf16>, vector<512x4xbf16>, vector<64x4xf32> -> vector<64x4xf32>
    %c4_i32_66 = arith.constant 4 : i32
    %74 = arith.muli %c4_i32_66, %arg0 : i32
    %c2_i32 = arith.constant 2 : i32
    %75 = arith.addi %74, %c2_i32 : i32
    %c0_i32_67 = arith.constant 0 : i32
    %76 = arith.addi %75, %c0_i32_67 : i32
    %77 = arith.index_cast %76 : i32 to index
    %c0_68 = arith.constant 0 : index
    %c0_69 = arith.constant 0 : index
    %78 = vector.load %arg5[%77, %c0_68, %c0_69] : memref<8x64x4xf32, #tpu.memory_space<vmem>>, vector<1x64x4xf32>
    %79 = vector.shape_cast %78 : vector<1x64x4xf32> to vector<64x4xf32>
    %80 = vector.shape_cast %73 : vector<64x4xf32> to vector<1x64x4xf32>
    tpu.vector_store %arg5[%77, %c0_68, %c0_69], %80 {strides = array<i32>} : memref<8x64x4xf32, #tpu.memory_space<vmem>>, vector<1x64x4xf32>,
    %c0_70 = arith.constant 0 : index
    %c1_71 = arith.constant 1 : index
    %c1_72 = arith.constant 1 : index
    %c0_73 = arith.constant 0 : index
    %81 = vector.load %arg1[%c0_70, %c1_71, %c1_72, %c0_73] : memref<1x10x10x128xf32, #tpu.memory_space<vmem>>, vector<1x8x8x128xf32>
    %82 = vector.shape_cast %81 : vector<1x8x8x128xf32> to vector<8x8x128xf32>
    %83 = vector.shape_cast %82 : vector<8x8x128xf32> to vector<64x128xf32>
    %84 = arith.truncf %83 : vector<64x128xf32> to vector<64x128xbf16>
    %c0_74 = arith.constant 0 : index
    %c1_75 = arith.constant 1 : index
    %c2_76 = arith.constant 2 : index
    %c0_77 = arith.constant 0 : index
    %85 = vector.load %arg1[%c0_74, %c1_75, %c2_76, %c0_77] : memref<1x10x10x128xf32, #tpu.memory_space<vmem>>, vector<1x8x8x128xf32>
    %86 = vector.shape_cast %85 : vector<1x8x8x128xf32> to vector<8x8x128xf32>
    %87 = vector.shape_cast %86 : vector<8x8x128xf32> to vector<64x128xf32>
    %88 = arith.truncf %87 : vector<64x128xf32> to vector<64x128xbf16>
    %c0_78 = arith.constant 0 : index
    %c2_79 = arith.constant 2 : index
    %c1_80 = arith.constant 1 : index
    %c0_81 = arith.constant 0 : index
    %89 = vector.load %arg1[%c0_78, %c2_79, %c1_80, %c0_81] : memref<1x10x10x128xf32, #tpu.memory_space<vmem>>, vector<1x8x8x128xf32>
    %90 = vector.shape_cast %89 : vector<1x8x8x128xf32> to vector<8x8x128xf32>
    %91 = vector.shape_cast %90 : vector<8x8x128xf32> to vector<64x128xf32>
    %92 = arith.truncf %91 : vector<64x128xf32> to vector<64x128xbf16>
    %c0_82 = arith.constant 0 : index
    %c2_83 = arith.constant 2 : index
    %c2_84 = arith.constant 2 : index
    %c0_85 = arith.constant 0 : index
    %93 = vector.load %arg1[%c0_82, %c2_83, %c2_84, %c0_85] : memref<1x10x10x128xf32, #tpu.memory_space<vmem>>, vector<1x8x8x128xf32>
    %94 = vector.shape_cast %93 : vector<1x8x8x128xf32> to vector<8x8x128xf32>
    %95 = vector.shape_cast %94 : vector<8x8x128xf32> to vector<64x128xf32>
    %96 = arith.truncf %95 : vector<64x128xf32> to vector<64x128xbf16>
    %97 = tpu.concatenate %84, %88, %92, %96 in 1 : vector<64x128xbf16>, vector<64x128xbf16>, vector<64x128xbf16>, vector<64x128xbf16> -> vector<64x512xbf16>
    %c1_86 = arith.constant 1 : index
    %c1_87 = arith.constant 1 : index
    %c0_88 = arith.constant 0 : index
    %c0_89 = arith.constant 0 : index
    %98 = vector.load %arg2[%c1_86, %c1_87, %c0_88, %c0_89] : memref<2x2x512x4xbf16, #tpu.memory_space<vmem>>, vector<1x1x512x4xbf16>
    %99 = vector.shape_cast %98 : vector<1x1x512x4xbf16> to vector<512x4xbf16>
    %cst_90 = arith.constant dense<0.000000e+00> : vector<64x4xf32>
    %100 = tpu.matmul %97, %99, %cst_90 {dimension_numbers = #tpu.dot_dimension_numbers<[1], [0], [0], [1], [0, 0, 1, 1], [], []>} : vector<64x512xbf16>, vector<512x4xbf16>, vector<64x4xf32> -> vector<64x4xf32>
    %c4_i32_91 = arith.constant 4 : i32
    %101 = arith.muli %c4_i32_91, %arg0 : i32
    %c2_i32_92 = arith.constant 2 : i32
    %102 = arith.addi %101, %c2_i32_92 : i32
    %c1_i32_93 = arith.constant 1 : i32
    %103 = arith.addi %102, %c1_i32_93 : i32
    %104 = arith.index_cast %103 : i32 to index
    %c0_94 = arith.constant 0 : index
    %c0_95 = arith.constant 0 : index
    %105 = vector.load %arg5[%104, %c0_94, %c0_95] : memref<8x64x4xf32, #tpu.memory_space<vmem>>, vector<1x64x4xf32>
    %106 = vector.shape_cast %105 : vector<1x64x4xf32> to vector<64x4xf32>
    %107 = vector.shape_cast %100 : vector<64x4xf32> to vector<1x64x4xf32>
    tpu.vector_store %arg5[%104, %c0_94, %c0_95], %107 {strides = array<i32>} : memref<8x64x4xf32, #tpu.memory_space<vmem>>, vector<1x64x4xf32>,
    %c1_i32_96 = arith.constant 1 : i32
    %108 = arith.cmpi eq, %arg0, %c1_i32_96 : i32
    %109 = arith.extui %108 : i1 to i32
    %c0_i32_97 = arith.constant 0 : i32
    %110 = arith.cmpi ne, %109, %c0_i32_97 : i32
    scf.if %110 {
      %c0_98 = arith.constant 0 : index
      %c0_99 = arith.constant 0 : index
      %c0_100 = arith.constant 0 : index
      %111 = vector.load %arg5[%c0_98, %c0_99, %c0_100] : memref<8x64x4xf32, #tpu.memory_space<vmem>>, vector<8x64x4xf32>
      %cst_101 = arith.constant dense<0.000000e+00> : vector<4xf32>
      %112 = vector.multi_reduction <add>, %111, %cst_101 [0, 1] : vector<8x64x4xf32> to vector<4xf32>
      %113 = vector.shape_cast %112 : vector<4xf32> to vector<1x1x4xf32>
      %cst_102 = arith.constant 5.120000e+02 : f32
      %114 = vector.broadcast %cst_102 : f32 to vector<1x1x4xf32>
      %115 = arith.divf %113, %114 : vector<1x1x4xf32>
      %116 = vector.broadcast %115 : vector<1x1x4xf32> to vector<8x64x4xf32>
      %117 = arith.subf %111, %116 : vector<8x64x4xf32>
      %118 = arith.mulf %117, %117 : vector<8x64x4xf32>
      %cst_103 = arith.constant dense<0.000000e+00> : vector<4xf32>
      %119 = vector.multi_reduction <add>, %118, %cst_103 [0, 1] : vector<8x64x4xf32> to vector<4xf32>
      %120 = vector.shape_cast %119 : vector<4xf32> to vector<1x1x4xf32>
      %cst_104 = arith.constant 5.120000e+02 : f32
      %121 = vector.broadcast %cst_104 : f32 to vector<1x1x4xf32>
      %122 = arith.divf %120, %121 : vector<1x1x4xf32>
      %c0_105 = arith.constant 0 : index
      %c0_106 = arith.constant 0 : index
      %123 = vector.load %arg3[%c0_105, %c0_106] : memref<1x4xf32, #tpu.memory_space<vmem>>, vector<1x4xf32>
      %124 = vector.shape_cast %123 : vector<1x4xf32> to vector<1x1x4xf32>
      %c0_107 = arith.constant 0 : index
      %c0_108 = arith.constant 0 : index
      %125 = vector.load %arg4[%c0_107, %c0_108] : memref<1x4xf32, #tpu.memory_space<vmem>>, vector<1x4xf32>
      %126 = vector.shape_cast %125 : vector<1x4xf32> to vector<1x1x4xf32>
      %127 = vector.broadcast %115 : vector<1x1x4xf32> to vector<8x64x4xf32>
      %128 = arith.subf %111, %127 : vector<8x64x4xf32>
      %cst_109 = arith.constant 9.99999974E-6 : f32
      %129 = vector.broadcast %cst_109 : f32 to vector<1x1x4xf32>
      %130 = arith.addf %122, %129 : vector<1x1x4xf32>
      %131 = math.rsqrt %130 : vector<1x1x4xf32>
      %132 = vector.broadcast %131 : vector<1x1x4xf32> to vector<8x64x4xf32>
      %133 = arith.mulf %128, %132 : vector<8x64x4xf32>
      %134 = vector.broadcast %124 : vector<1x1x4xf32> to vector<8x64x4xf32>
      %135 = arith.mulf %133, %134 : vector<8x64x4xf32>
      %136 = vector.broadcast %126 : vector<1x1x4xf32> to vector<8x64x4xf32>
      %137 = arith.addf %135, %136 : vector<8x64x4xf32>
      %c0_110 = arith.constant 0 : index
      %c0_111 = arith.constant 0 : index
      %c0_112 = arith.constant 0 : index
      %138 = vector.load %arg5[%c0_110, %c0_111, %c0_112] : memref<8x64x4xf32, #tpu.memory_space<vmem>>, vector<8x64x4xf32>
      tpu.vector_store %arg5[%c0_110, %c0_111, %c0_112], %137 {strides = array<i32>} : memref<8x64x4xf32, #tpu.memory_space<vmem>>, vector<8x64x4xf32>,
    } else {
    }
    return
  }
  func.func @transform_0(%arg0: i32) -> (i32, i32, i32, i32) {
    %c0_i32 = arith.constant 0 : i32
    %c0_i32_0 = arith.constant 0 : i32
    %c0_i32_1 = arith.constant 0 : i32
    %c0_i32_2 = arith.constant 0 : i32
    return %arg0, %c0_i32, %c0_i32_0, %c0_i32_1 : i32, i32, i32, i32
  }
  func.func @transform_1(%arg0: i32) -> (i32, i32, i32, i32) {
    %c0_i32 = arith.constant 0 : i32
    %c0_i32_0 = arith.constant 0 : i32
    %c0_i32_1 = arith.constant 0 : i32
    %c0_i32_2 = arith.constant 0 : i32
    %c0_i32_3 = arith.constant 0 : i32
    return %c0_i32, %c0_i32_0, %c0_i32_1, %c0_i32_2 : i32, i32, i32, i32
  }
  func.func @transform_2(%arg0: i32) -> (i32, i32) {
    %c0_i32 = arith.constant 0 : i32
    %c0_i32_0 = arith.constant 0 : i32
    %c0_i32_1 = arith.constant 0 : i32
    return %c0_i32, %c0_i32_0 : i32, i32
  }
  func.func @transform_3(%arg0: i32) -> (i32, i32) {
    %c0_i32 = arith.constant 0 : i32
    %c0_i32_0 = arith.constant 0 : i32
    %c0_i32_1 = arith.constant 0 : i32
    return %c0_i32, %c0_i32_0 : i32, i32
  }
  func.func @transform_4(%arg0: i32) -> (i32, i32, i32) {
    %c0_i32 = arith.constant 0 : i32
    %c0_i32_0 = arith.constant 0 : i32
    %c0_i32_1 = arith.constant 0 : i32
    %c0_i32_2 = arith.constant 0 : i32
    return %c0_i32, %c0_i32_0, %c0_i32_1 : i32, i32, i32
  }
}

</mosaic_0001>

<llo_original>
// kernel: unet_skip_innermost.2
$region0: #{unet_skip_innermost.2}
  #allocation0 [shape = 'u32[]', space=smem, size = 0x4, offset = 0x4, fixed_abs, tag = 'smem constant byte address 0x4 - core index']
  #allocation1 [shape = 'u32[144,128]{1,0:T(1,128)}', space=vmem, size = 0x12000, scoped, tag = 'internal scratch']
  %s0 = inlined_call_operand.vmem [shape: bf16[2,8,8,64], index: 0, kind: input, shape index: {}]
  %s1 = inlined_call_operand.vmem [shape: bf16[64,128], index: 1, kind: input, shape index: {}]
  %s2 = inlined_call_operand.vmem [shape: f32[2,10,10,128], index: 2, kind: output, shape index: {}]
  %s3 = sld [smem:[#allocation0]]
  $region41: #{unet_skip_innermost.2} parent=0
    _
  %s5 = ssub.s32 1, %s3
  %s6 = scalar_select 0, %s5, %s3
  loop: start=0, step=1, limit=4
  $region2: #{unet_skip_innermost.2} parent=0 // loop_pre_header
    _
  $region3: #{unet_skip_innermost.2} parent=0 // loop_header
    %s8 = sphi 0, %s12
    %p9 = scmp.ge.s32.totalorder %s8, 4
    %s18 = sphi 0, %s20
    %s21 = sphi 0, %s18
    %s22 = sphi 0, %s21
    %s38 = sphi 0, %s22
    %s42 = sphi 0, %s42
    %s44 = sphi 0, %s42
    %s45 = sphi 0, %s44
    %s59 = sphi 0, %s45
    %s65 = sphi 0, %s67
    %s68 = sphi 0, %s65
    %s69 = sphi 0, %s68
    %s85 = sphi 0, %s69
  $region4: #{unet_skip_innermost.2} parent=0 // loop_header_branch
    %11 = sbr.rel (%p9) target = $region8
  $region5: #{unet_skip_innermost.2} parent=0 // loop_body
    %s13 = ssub.s32 %s8, 1
    %s14 = ssub.s32 %s8, 2
    %s15 = sadd.s32 %s8, 1
    %s16 = ssub.s32 %s8, %s15
    %p17 = scmp.eq.s32.totalorder %s16, 0
    %s19 = sadd.s32 %s18, 1
    %s20 = scalar_select %p17, %s18, %s19
    %p23 = pneg %p17
    %p24 = scmp.eq.s32.totalorder %s8, 1
    %p25 = por %p23, %p24
    %p26 = scmp.ne.s32.totalorder %s18, %s21
    %p27 = scmp.eq.s32.totalorder %s8, 0
    %p28 = por %p26, %p27
    %p29 = scmp.ne.s32.totalorder %s18, %s21
    %p30 = scmp.eq.s32.totalorder %s13, 1
    %p31 = por %p29, %p30
    %p32 = scmp.ne.s32.totalorder %s21, %s22
    %p33 = scmp.eq.s32.totalorder %s13, 0
    %p34 = por %p32, %p33
    %p35 = scmp.ne.s32.totalorder %s21, %s22
    %p36 = scmp.eq.s32.totalorder %s14, 1
    %p37 = por %p35, %p36
    %p39 = scmp.ne.s32.totalorder %s22, %s38
    %p40 = scmp.eq.s32.totalorder %s14, 0
    %p41 = por %p39, %p40
    %s43 = sadd.s32 %s42, 1
    %p46 = scmp.eq.s32.totalorder %s8, 1
    %p47 = scmp.ne.s32.totalorder %s42, %s44
    %p48 = scmp.eq.s32.totalorder %s8, 0
    %p49 = por %p47, %p48
    %p50 = scmp.ne.s32.totalorder %s42, %s44
    %p51 = scmp.eq.s32.totalorder %s13, 1
    %p52 = por %p50, %p51
    %p53 = scmp.ne.s32.totalorder %s44, %s45
    %p54 = scmp.eq.s32.totalorder %s13, 0
    %p55 = por %p53, %p54
    %p56 = scmp.ne.s32.totalorder %s44, %s45
    %p57 = scmp.eq.s32.totalorder %s14, 1
    %p58 = por %p56, %p57
    %p60 = scmp.ne.s32.totalorder %s45, %s59
    %p61 = scmp.eq.s32.totalorder %s14, 0
    %p62 = por %p60, %p61
    %s63 = ssub.s32 %s8, %s15
    %p64 = scmp.eq.s32.totalorder %s63, 0
    %s66 = sadd.s32 %s65, 1
    %s67 = scalar_select %p64, %s65, %s66
    %p70 = pneg %p64
    %p71 = scmp.eq.s32.totalorder %s8, 1
    %p72 = por %p70, %p71
    %p73 = scmp.ne.s32.totalorder %s65, %s68
    %p74 = scmp.eq.s32.totalorder %s8, 0
    %p75 = por %p73, %p74
    %p76 = scmp.ne.s32.totalorder %s65, %s68
    %p77 = scmp.eq.s32.totalorder %s13, 1
    %p78 = por %p76, %p77
    %p79 = scmp.ne.s32.totalorder %s68, %s69
    %p80 = scmp.eq.s32.totalorder %s13, 0
    %p81 = por %p79, %p80
    %p82 = scmp.ne.s32.totalorder %s68, %s69
    %p83 = scmp.eq.s32.totalorder %s14, 1
    %p84 = por %p82, %p83
    %p86 = scmp.ne.s32.totalorder %s69, %s85
    %p87 = scmp.eq.s32.totalorder %s14, 0
    %p88 = por %p86, %p87
    %p89 = scmp.le.s32.totalorder 1, %s8
    %p90 = scmp.lt.s32.totalorder %s8, 3
    %p91 = pnand %p89, %p90
    %p92 = pneg %p91
    // Predicated region
    $region9: #{unet_skip_innermost.2} parent=5 // pred_check
      _
    $region10: #{unet_skip_innermost.2} parent=5 // pred_check_branch
      %94 = sbr.rel (%p91) target = $region12
    $region11: #{unet_skip_innermost.2} parent=5 // pred_region
      %s95 = ssub.s32 %s8, 1
      // Predicated region
      $region13: #{unet_skip_innermost.2} parent=11 // pred_check
        %p96 = pneg %p55
      $region14: #{unet_skip_innermost.2} parent=11 // pred_check_branch
        %98 = sbr.rel (%p96) target = $region16
      $region15: #{unet_skip_innermost.2} parent=11 // pred_region
        _
      $region16: #{unet_skip_innermost.2} parent=11 // pred_fallthru
        _
    $region12: #{unet_skip_innermost.2} parent=5 // pred_fallthru
      _
    %p99 = scmp.lt.s32.totalorder %s8, 2
    // Predicated region
    $region17: #{unet_skip_innermost.2} parent=5 // pred_check
      %p100 = pneg %p99
    $region18: #{unet_skip_innermost.2} parent=5 // pred_check_branch
      %102 = sbr.rel (%p100) target = $region20
    $region19: #{unet_skip_innermost.2} parent=5 // pred_region
      // Predicated region
      $region21: #{unet_skip_innermost.2} parent=19 // pred_check
        %p103 = pneg %p28
      $region22: #{unet_skip_innermost.2} parent=19 // pred_check_branch
        %105 = sbr.rel (%p103) target = $region24
      $region23: #{unet_skip_innermost.2} parent=19 // pred_region
        %p106 = scmp.lt.s32.totalorder %s8, 1
        %s107 = scalar_select %p106, %s8, 1
        %s108 = smul.addr %s107, 8
        %s109 = smul.addr %s108, 4
        %s110 = scalar_lea.vmem %s0, %s109
      $region24: #{unet_skip_innermost.2} parent=19 // pred_fallthru
        _
    $region20: #{unet_skip_innermost.2} parent=5 // pred_fallthru
      _
    %p111 = scmp.le.s32.totalorder 1, %s8
    %p112 = scmp.lt.s32.totalorder %s8, 3
    %p113 = pnand %p111, %p112
    %p114 = pneg %p113
    // Predicated region
    $region25: #{unet_skip_innermost.2} parent=5 // pred_check
      _
    $region26: #{unet_skip_innermost.2} parent=5 // pred_check_branch
      %116 = sbr.rel (%p113) target = $region28
    $region27: #{unet_skip_innermost.2} parent=5 // pred_region
      %s117 = ssub.s32 %s8, 1
      %p118 = scmp.lt.s32.totalorder %s13, 1
      %s119 = scalar_select %p118, %s13, 1
      %s120 = smul.addr %s119, 8
      %s121 = smul.addr %s120, 4
      %s122 = scalar_lea.vmem %s0, %s121
      %p123 = pneg %p34
      %p124 = pneg %p31
      %p125 = pneg %p55
      %p126 = pneg %p52
      %p127 = pneg %p81
      %p128 = pneg %p78
      %p129 = scmp.lt.s32.totalorder %s13, 1
      %s130 = scalar_select %p129, %s13, 1
      %s131 = smul.addr %s130, 20
      %s132 = smul.addr %s131, 8
      %s133 = scalar_lea.vmem %s2, %s132
      %p134 = scmp.lt.s32.totalorder %s13, 1
      %s135 = scalar_select %p134, %s13, 1
      %s136 = smul.addr %s135, 8
      %s137 = smul.addr %s136, 4
      %s138 = scalar_lea.vmem %s0, %s137
      %p139 = scmp.lt.s32.totalorder %s13, 1
      %s140 = scalar_select %p139, %s13, 1
      %s141 = smul.addr %s140, 20
      %s142 = smul.addr %s141, 8
      %s143 = scalar_lea.vmem %s2, %s142
      %v145 = vld [vmem:[%s138] sm:$0xf]
      %v146 = vld [vmem:[%s138 + $0x4] sm:$0xf]
      %v147 = vld [vmem:[%s138 + $0x8] sm:$0xf]
      %v148 = vld [vmem:[%s138 + $0xc] sm:$0xf]
      %v149 = vld [vmem:[%s138 + $0x10] sm:$0xf]
      %v150 = vld [vmem:[%s138 + $0x14] sm:$0xf]
      %v151 = vld [vmem:[%s138 + $0x18] sm:$0xf]
      %v152 = vld [vmem:[%s138 + $0x1c] sm:$0xf]
      %v153 = vunpack.c.l.bf16 %v145
      %v154 = vunpack.c.l.bf16 %v146
      %v155 = vunpack.c.l.bf16 %v147
      %v156 = vunpack.c.l.bf16 %v148
      %v157 = vunpack.c.l.bf16 %v149
      %v158 = vunpack.c.l.bf16 %v150
      %v159 = vunpack.c.l.bf16 %v151
      %v160 = vunpack.c.l.bf16 %v152
      %vm161 = vcmp.ge.f32.partialorder %v153, 0.0
      %vm162 = vcmp.ge.f32.partialorder %v154, 0.0
      %vm163 = vcmp.ge.f32.partialorder %v155, 0.0
      %vm164 = vcmp.ge.f32.partialorder %v156, 0.0
      %vm165 = vcmp.ge.f32.partialorder %v157, 0.0
      %vm166 = vcmp.ge.f32.partialorder %v158, 0.0
      %vm167 = vcmp.ge.f32.partialorder %v159, 0.0
      %vm168 = vcmp.ge.f32.partialorder %v160, 0.0
      %v169 = vmul.f32 %v153, 0.2
      %v170 = vmul.f32 %v154, 0.2
      %v171 = vmul.f32 %v155, 0.2
      %v172 = vmul.f32 %v156, 0.2
      %v173 = vmul.f32 %v157, 0.2
      %v174 = vmul.f32 %v158, 0.2
      %v175 = vmul.f32 %v159, 0.2
      %v176 = vmul.f32 %v160, 0.2
      %v177 = vsel %vm161, %v153, %v169
      %v178 = vsel %vm162, %v154, %v170
      %v179 = vsel %vm163, %v155, %v171
      %v180 = vsel %vm164, %v156, %v172
      %v181 = vsel %vm165, %v157, %v173
      %v182 = vsel %vm166, %v158, %v174
      %v183 = vsel %vm167, %v159, %v175
      %v184 = vsel %vm168, %v160, %v176
      %v185 = vpack.c.bf16 %v178, %v177
      %v186 = vpack.c.bf16 %v180, %v179
      %v187 = vpack.c.bf16 %v182, %v181
      %v188 = vpack.c.bf16 %v184, %v183
      %v189 = vld [vmem:[%s1] sm:$0xf]
      %v190 = vld [vmem:[%s1 + $0x4] sm:$0xf]
      %v191 = vld [vmem:[%s1 + $0x8] sm:$0xf]
      %v192 = vld [vmem:[%s1 + $0xc] sm:$0xf]
      %v193 = vld [vmem:[%s1 + $0x10] sm:$0xf]
      %v194 = vld [vmem:[%s1 + $0x14] sm:$0xf]
      %v195 = vld [vmem:[%s1 + $0x18] sm:$0xf]
      %v196 = vld [vmem:[%s1 + $0x1c] sm:$0xf]
      %v205 = vunpack.c.l.b16 %v189
      %v206 = vunpack.c.l.b16 %v190
      %v207 = vunpack.c.l.b16 %v191
      %v208 = vunpack.c.l.b16 %v192
      %v209 = vunpack.c.l.b16 %v193
      %v210 = vunpack.c.l.b16 %v194
      %v211 = vunpack.c.l.b16 %v195
      %v212 = vunpack.c.l.b16 %v196
      %v213 = vpack.c.b16 %v206, %v205
      %v214 = vpack.c.b16 %v208, %v207
      %v215 = vpack.c.b16 %v210, %v209
      %v216 = vpack.c.b16 %v212, %v211
      %vm221 = vcmask 523264
      %v223 = vsel %vm221, %v185, 0
      %v226 = vsel %vm221, %v186, 0
      %v229 = vsel %vm221, %v187, 0
      %v232 = vsel %vm221, %v188, 0
      %234 = vmatprep.subr.bf16.mxu0 0
      %235 = vmatpush1.bf16.msra.mxu0 %v213
      %236 = vmatprep.subr.bf16.mxu0 0
      %237 = vmatpush1.bf16.msra.mxu0 %v214
      %238 = vmatprep.subr.bf16.mxu0 0
      %239 = vmatpush1.bf16.msra.mxu0 %v215
      %240 = vmatprep.subr.bf16.mxu0 0
      %241 = vmatpush1.bf16.msra.mxu0 %v216
      %242 = vmatprep.subr.bf16.mxu0 0
      %243 = vmatpush1.bf16.msra.mxu0 0
      %244 = vmatprep.subr.bf16.mxu0 0
      %245 = vmatpush1.bf16.msra.mxu0 0
      %246 = vmatprep.subr.bf16.mxu0 0
      %247 = vmatpush1.bf16.msra.mxu0 0
      %248 = vmatprep.subr.bf16.mxu0 0
      %249 = vmatpush1.bf16.msra.mxu0 0
      %250 = vmatprep.subr.bf16.mxu0 0
      %251 = vmatpush1.bf16.msra.mxu0 0
      %252 = vmatprep.subr.bf16.mxu0 0
      %253 = vmatpush1.bf16.msra.mxu0 0
      %254 = vmatprep.subr.bf16.mxu0 0
      %255 = vmatpush1.bf16.msra.mxu0 0
      %256 = vmatprep.subr.bf16.mxu0 0
      %257 = vmatpush1.bf16.msra.mxu0 0
      %258 = vmatprep.subr.bf16.mxu0 0
      %259 = vmatpush1.bf16.msra.mxu0 0
      %260 = vmatprep.subr.bf16.mxu0 0
      %261 = vmatpush1.bf16.msra.mxu0 0
      %262 = vmatprep.subr.bf16.mxu0 0
      %263 = vmatpush1.bf16.msra.mxu0 0
      %264 = vmatprep.subr.bf16.mxu0 0
      %265 = vmatpush1.bf16.msra.mxu0 0
      %266 = vmatprep.mubr.bf16.mxu0 0
      %267 = vmatmul.mubr.bf16.gmra.mrb[0].mxu0 %v223
      %v268 = vpop.f32.mrb[0].mxu0
      %v269 = vadd.f32 0.0, %v268
      %v270 = vpop.f32.mrb[0].mxu0
      %v271 = vpop.f32.mrb[0].mxu0
      %v272 = vadd.f32 0.0, %v271
      %v273 = vpop.f32.mrb[0].mxu0
      %274 = vmatprep.mubr.bf16.mxu0 0
      %275 = vmatmul.mubr.bf16.gmra.mrb[0].mxu0 %v226
      %v276 = vpop.f32.mrb[0].mxu0
      %v277 = vadd.f32 0.0, %v276
      %v278 = vpop.f32.mrb[0].mxu0
      %v279 = vpop.f32.mrb[0].mxu0
      %v280 = vadd.f32 0.0, %v279
      %v281 = vpop.f32.mrb[0].mxu0
      %282 = vmatprep.mubr.bf16.mxu0 0
      %283 = vmatmul.mubr.bf16.gmra.mrb[0].mxu0 %v229
      %v284 = vpop.f32.mrb[0].mxu0
      %v285 = vadd.f32 0.0, %v284
      %v286 = vpop.f32.mrb[0].mxu0
      %v287 = vpop.f32.mrb[0].mxu0
      %v288 = vadd.f32 0.0, %v287
      %v289 = vpop.f32.mrb[0].mxu0
      %290 = vmatprep.mubr.bf16.mxu0 0
      %291 = vmatmul.mubr.bf16.gmra.mrb[0].mxu0 %v232
      %v292 = vpop.f32.mrb[0].mxu0
      %v293 = vadd.f32 0.0, %v292
      %v294 = vpop.f32.mrb[0].mxu0
      %v295 = vpop.f32.mrb[0].mxu0
      %v296 = vadd.f32 0.0, %v295
      %v297 = vpop.f32.mrb[0].mxu0
      %298 = vdwg.mxu0
      %v299 = vmax.f32 %v269, 0.0
      %v300 = vmax.f32 %v272, 0.0
      %v301 = vmax.f32 %v277, 0.0
      %v302 = vmax.f32 %v280, 0.0
      %v303 = vmax.f32 %v285, 0.0
      %v304 = vmax.f32 %v288, 0.0
      %v305 = vmax.f32 %v293, 0.0
      %v306 = vmax.f32 %v296, 0.0
      %307 = vst [vmem:[%s143] sm:$0xff] 0.0
      %308 = vst [vmem:[%s143 + $0x8] sm:$0x3] 0.0
      %309 = vst [vmem:[%s143 + $0x10] sm:$0xff] 0.0
      %310 = vst [vmem:[%s143 + $0x18] sm:$0x3] 0.0
      %311 = vst [vmem:[%s143 + $0x20] sm:$0xff] 0.0
      %312 = vst [vmem:[%s143 + $0x28] sm:$0x3] 0.0
      %313 = vst [vmem:[%s143 + $0x30] sm:$0xff] 0.0
      %314 = vst [vmem:[%s143 + $0x38] sm:$0x3] 0.0
      %315 = vst [vmem:[%s143 + $0x40] sm:$0xff] 0.0
      %316 = vst [vmem:[%s143 + $0x48] sm:$0x3] 0.0
      %317 = vst [vmem:[%s143 + $0x50] sm:$0xff] 0.0
      %318 = vst [vmem:[%s143 + $0x58] sm:$0x3] 0.0
      %319 = vst [vmem:[%s143 + $0x60] sm:$0xff] 0.0
      %320 = vst [vmem:[%s143 + $0x68] sm:$0x3] 0.0
      %321 = vst [vmem:[%s143 + $0x70] sm:$0xff] 0.0
      %322 = vst [vmem:[%s143 + $0x78] sm:$0x3] 0.0
      %323 = vst [vmem:[%s143 + $0x80] sm:$0xff] 0.0
      %324 = vst [vmem:[%s143 + $0x88] sm:$0x3] 0.0
      %325 = vst [vmem:[%s143 + $0x90] sm:$0xff] 0.0
      %326 = vst [vmem:[%s143 + $0x98] sm:$0x3] 0.0
      %s327 = scalar_lea.vmem %s143, 16
      %328 = vst [vmem:[%s327 + $0x1] sm:$0xff] %v299
      %329 = vst [vmem:[%s327 + $0x11] sm:$0xff] %v300
      %330 = vst [vmem:[%s327 + $0x21] sm:$0xff] %v301
      %331 = vst [vmem:[%s327 + $0x31] sm:$0xff] %v302
      %332 = vst [vmem:[%s327 + $0x41] sm:$0xff] %v303
      %333 = vst [vmem:[%s327 + $0x51] sm:$0xff] %v304
      %334 = vst [vmem:[%s327 + $0x61] sm:$0xff] %v305
      %335 = vst [vmem:[%s327 + $0x71] sm:$0xff] %v306
      %p336 = scmp.lt.s32.totalorder %s13, 1
      %s337 = scalar_select %p336, %s13, 1
      %s338 = smul.addr %s337, 20
      %s339 = smul.addr %s338, 8
      %s340 = scalar_lea.vmem %s2, %s339
      // Predicated region
      $region29: #{unet_skip_innermost.2} parent=27 // pred_check
        %p341 = pneg %p78
      $region30: #{unet_skip_innermost.2} parent=27 // pred_check_branch
        %343 = sbr.rel (%p341) target = $region32
      $region31: #{unet_skip_innermost.2} parent=27 // pred_region
        _
      $region32: #{unet_skip_innermost.2} parent=27 // pred_fallthru
        _
    $region28: #{unet_skip_innermost.2} parent=5 // pred_fallthru
      _
    %p344 = scmp.le.s32.totalorder 2, %s8
    // Predicated region
    $region33: #{unet_skip_innermost.2} parent=5 // pred_check
      %p345 = pneg %p344
    $region34: #{unet_skip_innermost.2} parent=5 // pred_check_branch
      %347 = sbr.rel (%p345) target = $region36
    $region35: #{unet_skip_innermost.2} parent=5 // pred_region
      %s348 = ssub.s32 %s8, 2
      // Predicated region
      $region37: #{unet_skip_innermost.2} parent=35 // pred_check
        %p349 = pneg %p84
      $region38: #{unet_skip_innermost.2} parent=35 // pred_check_branch
        %351 = sbr.rel (%p349) target = $region40
      $region39: #{unet_skip_innermost.2} parent=35 // pred_region
        %p352 = scmp.lt.s32.totalorder %s14, 1
        %s353 = scalar_select %p352, %s14, 1
        %s354 = smul.addr %s353, 20
        %s355 = smul.addr %s354, 8
        %s356 = scalar_lea.vmem %s2, %s355
      $region40: #{unet_skip_innermost.2} parent=35 // pred_fallthru
        _
    $region36: #{unet_skip_innermost.2} parent=5 // pred_fallthru
      _
  $region6: #{unet_skip_innermost.2} parent=0 // loop_footer
    %s12 = sadd.s32 1, %s8
  $region7: #{unet_skip_innermost.2} parent=0 // loop_footer_branch
    %7 = sbr.rel target = $region3
  $region8: #{unet_skip_innermost.2} parent=0 // loop_exit
    _

// kernel: unet_skip_innermost.3
$region0: #{unet_skip_innermost.3}
  #allocation0 [shape = 'u32[]', space=smem, size = 0x4, offset = 0x4, fixed_abs, tag = 'smem constant byte address 0x4 - core index']
  #allocation1 [shape = 'u32[144,128]{1,0:T(1,128)}', space=vmem, size = 0x12000, scoped, tag = 'internal scratch']
  %s0 = inlined_call_operand.vmem [shape: f32[2,10,10,128], index: 0, kind: input, shape index: {}]
  %s1 = inlined_call_operand.vmem [shape: bf16[2,2,512,4], index: 1, kind: input, shape index: {}]
  %s2 = inlined_call_operand.vmem [shape: f32[1,4], index: 2, kind: input, shape index: {}]
  %s3 = inlined_call_operand.vmem [shape: f32[1,4], index: 3, kind: input, shape index: {}]
  %s4 = inlined_call_operand.vmem [shape: f32[8,64,4], index: 4, kind: output, shape index: {}]
  %s5 = sld [smem:[#allocation0]]
  $region53: #{unet_skip_innermost.3} parent=0
    _
  %s7 = ssub.s32 1, %s5
  %s8 = scalar_select 0, %s7, %s5
  loop: start=0, step=1, limit=4
  $region2: #{unet_skip_innermost.3} parent=0 // loop_pre_header
    _
  $region3: #{unet_skip_innermost.3} parent=0 // loop_header
    %s10 = sphi 0, %s14
    %p11 = scmp.ge.s32.totalorder %s10, 4
    %s20 = sphi 0, %s22
    %s23 = sphi 0, %s20
    %s24 = sphi 0, %s23
    %s40 = sphi 0, %s24
    %s44 = sphi 0, %s44
    %s46 = sphi 0, %s44
    %s47 = sphi 0, %s46
    %s61 = sphi 0, %s47
    %s65 = sphi 0, %s65
    %s67 = sphi 0, %s65
    %s68 = sphi 0, %s67
    %s82 = sphi 0, %s68
    %s86 = sphi 0, %s86
    %s88 = sphi 0, %s86
    %s89 = sphi 0, %s88
    %s103 = sphi 0, %s89
    %s107 = sphi 0, %s107
    %s109 = sphi 0, %s107
    %s110 = sphi 0, %s109
    %s124 = sphi 0, %s110
  $region4: #{unet_skip_innermost.3} parent=0 // loop_header_branch
    %13 = sbr.rel (%p11) target = $region8
  $region5: #{unet_skip_innermost.3} parent=0 // loop_body
    %s15 = ssub.s32 %s10, 1
    %s16 = ssub.s32 %s10, 2
    %s17 = sadd.s32 %s10, 1
    %s18 = ssub.s32 %s10, %s17
    %p19 = scmp.eq.s32.totalorder %s18, 0
    %s21 = sadd.s32 %s20, 1
    %s22 = scalar_select %p19, %s20, %s21
    %p25 = pneg %p19
    %p26 = scmp.eq.s32.totalorder %s10, 1
    %p27 = por %p25, %p26
    %p28 = scmp.ne.s32.totalorder %s20, %s23
    %p29 = scmp.eq.s32.totalorder %s10, 0
    %p30 = por %p28, %p29
    %p31 = scmp.ne.s32.totalorder %s20, %s23
    %p32 = scmp.eq.s32.totalorder %s15, 1
    %p33 = por %p31, %p32
    %p34 = scmp.ne.s32.totalorder %s23, %s24
    %p35 = scmp.eq.s32.totalorder %s15, 0
    %p36 = por %p34, %p35
    %p37 = scmp.ne.s32.totalorder %s23, %s24
    %p38 = scmp.eq.s32.totalorder %s16, 1
    %p39 = por %p37, %p38
    %p41 = scmp.ne.s32.totalorder %s24, %s40
    %p42 = scmp.eq.s32.totalorder %s16, 0
    %p43 = por %p41, %p42
    %s45 = sadd.s32 %s44, 1
    %p48 = scmp.eq.s32.totalorder %s10, 1
    %p49 = scmp.ne.s32.totalorder %s44, %s46
    %p50 = scmp.eq.s32.totalorder %s10, 0
    %p51 = por %p49, %p50
    %p52 = scmp.ne.s32.totalorder %s44, %s46
    %p53 = scmp.eq.s32.totalorder %s15, 1
    %p54 = por %p52, %p53
    %p55 = scmp.ne.s32.totalorder %s46, %s47
    %p56 = scmp.eq.s32.totalorder %s15, 0
    %p57 = por %p55, %p56
    %p58 = scmp.ne.s32.totalorder %s46, %s47
    %p59 = scmp.eq.s32.totalorder %s16, 1
    %p60 = por %p58, %p59
    %p62 = scmp.ne.s32.totalorder %s47, %s61
    %p63 = scmp.eq.s32.totalorder %s16, 0
    %p64 = por %p62, %p63
    %s66 = sadd.s32 %s65, 1
    %p69 = scmp.eq.s32.totalorder %s10, 1
    %p70 = scmp.ne.s32.totalorder %s65, %s67
    %p71 = scmp.eq.s32.totalorder %s10, 0
    %p72 = por %p70, %p71
    %p73 = scmp.ne.s32.totalorder %s65, %s67
    %p74 = scmp.eq.s32.totalorder %s15, 1
    %p75 = por %p73, %p74
    %p76 = scmp.ne.s32.totalorder %s67, %s68
    %p77 = scmp.eq.s32.totalorder %s15, 0
    %p78 = por %p76, %p77
    %p79 = scmp.ne.s32.totalorder %s67, %s68
    %p80 = scmp.eq.s32.totalorder %s16, 1
    %p81 = por %p79, %p80
    %p83 = scmp.ne.s32.totalorder %s68, %s82
    %p84 = scmp.eq.s32.totalorder %s16, 0
    %p85 = por %p83, %p84
    %s87 = sadd.s32 %s86, 1
    %p90 = scmp.eq.s32.totalorder %s10, 1
    %p91 = scmp.ne.s32.totalorder %s86, %s88
    %p92 = scmp.eq.s32.totalorder %s10, 0
    %p93 = por %p91, %p92
    %p94 = scmp.ne.s32.totalorder %s86, %s88
    %p95 = scmp.eq.s32.totalorder %s15, 1
    %p96 = por %p94, %p95
    %p97 = scmp.ne.s32.totalorder %s88, %s89
    %p98 = scmp.eq.s32.totalorder %s15, 0
    %p99 = por %p97, %p98
    %p100 = scmp.ne.s32.totalorder %s88, %s89
    %p101 = scmp.eq.s32.totalorder %s16, 1
    %p102 = por %p100, %p101
    %p104 = scmp.ne.s32.totalorder %s89, %s103
    %p105 = scmp.eq.s32.totalorder %s16, 0
    %p106 = por %p104, %p105
    %s108 = sadd.s32 %s107, 1
    %p111 = scmp.eq.s32.totalorder %s10, 1
    %p112 = scmp.ne.s32.totalorder %s107, %s109
    %p113 = scmp.eq.s32.totalorder %s10, 0
    %p114 = por %p112, %p113
    %p115 = scmp.ne.s32.totalorder %s107, %s109
    %p116 = scmp.eq.s32.totalorder %s15, 1
    %p117 = por %p115, %p116
    %p118 = scmp.ne.s32.totalorder %s109, %s110
    %p119 = scmp.eq.s32.totalorder %s15, 0
    %p120 = por %p118, %p119
    %p121 = scmp.ne.s32.totalorder %s109, %s110
    %p122 = scmp.eq.s32.totalorder %s16, 1
    %p123 = por %p121, %p122
    %p125 = scmp.ne.s32.totalorder %s110, %s124
    %p126 = scmp.eq.s32.totalorder %s16, 0
    %p127 = por %p125, %p126
    %p128 = scmp.le.s32.totalorder 1, %s10
    %p129 = scmp.lt.s32.totalorder %s10, 3
    %p130 = pnand %p128, %p129
    %p131 = pneg %p130
    // Predicated region
    $region9: #{unet_skip_innermost.3} parent=5 // pred_check
      _
    $region10: #{unet_skip_innermost.3} parent=5 // pred_check_branch
      %133 = sbr.rel (%p130) target = $region12
    $region11: #{unet_skip_innermost.3} parent=5 // pred_region
      %s134 = ssub.s32 %s10, 1
      // Predicated region
      $region13: #{unet_skip_innermost.3} parent=11 // pred_check
        %p135 = pneg %p57
      $region14: #{unet_skip_innermost.3} parent=11 // pred_check_branch
        %137 = sbr.rel (%p135) target = $region16
      $region15: #{unet_skip_innermost.3} parent=11 // pred_region
        _
      $region16: #{unet_skip_innermost.3} parent=11 // pred_fallthru
        _
      // Predicated region
      $region17: #{unet_skip_innermost.3} parent=11 // pred_check
        %p138 = pneg %p78
      $region18: #{unet_skip_innermost.3} parent=11 // pred_check_branch
        %140 = sbr.rel (%p138) target = $region20
      $region19: #{unet_skip_innermost.3} parent=11 // pred_region
        _
      $region20: #{unet_skip_innermost.3} parent=11 // pred_fallthru
        _
      // Predicated region
      $region21: #{unet_skip_innermost.3} parent=11 // pred_check
        %p141 = pneg %p99
      $region22: #{unet_skip_innermost.3} parent=11 // pred_check_branch
        %143 = sbr.rel (%p141) target = $region24
      $region23: #{unet_skip_innermost.3} parent=11 // pred_region
        _
      $region24: #{unet_skip_innermost.3} parent=11 // pred_fallthru
        _
    $region12: #{unet_skip_innermost.3} parent=5 // pred_fallthru
      _
    %p144 = scmp.lt.s32.totalorder %s10, 2
    // Predicated region
    $region25: #{unet_skip_innermost.3} parent=5 // pred_check
      %p145 = pneg %p144
    $region26: #{unet_skip_innermost.3} parent=5 // pred_check_branch
      %147 = sbr.rel (%p145) target = $region28
    $region27: #{unet_skip_innermost.3} parent=5 // pred_region
      // Predicated region
      $region29: #{unet_skip_innermost.3} parent=27 // pred_check
        %p148 = pneg %p30
      $region30: #{unet_skip_innermost.3} parent=27 // pred_check_branch
        %150 = sbr.rel (%p148) target = $region32
      $region31: #{unet_skip_innermost.3} parent=27 // pred_region
        %p151 = scmp.lt.s32.totalorder %s10, 1
        %s152 = scalar_select %p151, %s10, 1
        %s153 = smul.addr %s152, 20
        %s154 = smul.addr %s153, 8
        %s155 = scalar_lea.vmem %s0, %s154
      $region32: #{unet_skip_innermost.3} parent=27 // pred_fallthru
        _
    $region28: #{unet_skip_innermost.3} parent=5 // pred_fallthru
      _
    %p156 = scmp.le.s32.totalorder 1, %s10
    %p157 = scmp.lt.s32.totalorder %s10, 3
    %p158 = pnand %p156, %p157
    %p159 = pneg %p158
    // Predicated region
    $region33: #{unet_skip_innermost.3} parent=5 // pred_check
      _
    $region34: #{unet_skip_innermost.3} parent=5 // pred_check_branch
      %161 = sbr.rel (%p158) target = $region36
    $region35: #{unet_skip_innermost.3} parent=5 // pred_region
      %s162 = ssub.s32 %s10, 1
      %p163 = scmp.lt.s32.totalorder %s15, 1
      %s164 = scalar_select %p163, %s15, 1
      %s165 = smul.addr %s164, 20
      %s166 = smul.addr %s165, 8
      %s167 = scalar_lea.vmem %s0, %s166
      %p168 = pneg %p36
      %p169 = pneg %p33
      %p170 = pneg %p57
      %p171 = pneg %p54
      %p172 = pneg %p78
      %p173 = pneg %p75
      %p174 = pneg %p99
      %p175 = pneg %p96
      %p176 = pneg %p120
      %p177 = pneg %p117
      %p178 = scmp.lt.s32.totalorder %s15, 1
      %s179 = scalar_select %p178, %s15, 1
      %s180 = smul.addr %s179, 20
      %s181 = smul.addr %s180, 8
      %s182 = scalar_lea.vmem %s0, %s181
      %v184 = vld [vmem:[%s182] sm:$0xff]
      %v185 = vld [vmem:[%s182 + $0x10] sm:$0xff]
      %v186 = vld [vmem:[%s182 + $0x20] sm:$0xff]
      %v187 = vld [vmem:[%s182 + $0x30] sm:$0xff]
      %v188 = vld [vmem:[%s182 + $0x40] sm:$0xff]
      %v189 = vld [vmem:[%s182 + $0x50] sm:$0xff]
      %v190 = vld [vmem:[%s182 + $0x60] sm:$0xff]
      %v191 = vld [vmem:[%s182 + $0x70] sm:$0xff]
      %v192 = vpack.c.bf16 %v185, %v184
      %v193 = vpack.c.bf16 %v187, %v186
      %v194 = vpack.c.bf16 %v189, %v188
      %v195 = vpack.c.bf16 %v191, %v190
      %v196 = vld [vmem:[%s182 + $0x1] sm:$0xff]
      %v197 = vld [vmem:[%s182 + $0x11] sm:$0xff]
      %v198 = vld [vmem:[%s182 + $0x21] sm:$0xff]
      %v199 = vld [vmem:[%s182 + $0x31] sm:$0xff]
      %v200 = vld [vmem:[%s182 + $0x41] sm:$0xff]
      %v201 = vld [vmem:[%s182 + $0x51] sm:$0xff]
      %v202 = vld [vmem:[%s182 + $0x61] sm:$0xff]
      %v203 = vld [vmem:[%s182 + $0x71] sm:$0xff]
      %v204 = vpack.c.bf16 %v197, %v196
      %v205 = vpack.c.bf16 %v199, %v198
      %v206 = vpack.c.bf16 %v201, %v200
      %v207 = vpack.c.bf16 %v203, %v202
      %s208 = scalar_lea.vmem %s182, 16
      %v209 = vld [vmem:[%s208] sm:$0xff]
      %v210 = vld [vmem:[%s208 + $0x10] sm:$0xff]
      %v211 = vld [vmem:[%s208 + $0x20] sm:$0xff]
      %v212 = vld [vmem:[%s208 + $0x30] sm:$0xff]
      %v213 = vld [vmem:[%s208 + $0x40] sm:$0xff]
      %v214 = vld [vmem:[%s208 + $0x50] sm:$0xff]
      %v215 = vld [vmem:[%s208 + $0x60] sm:$0xff]
      %v216 = vld [vmem:[%s208 + $0x70] sm:$0xff]
      %v217 = vpack.c.bf16 %v210, %v209
      %v218 = vpack.c.bf16 %v212, %v211
      %v219 = vpack.c.bf16 %v214, %v213
      %v220 = vpack.c.bf16 %v216, %v215
      %v221 = vld [vmem:[%s208 + $0x1] sm:$0xff]
      %v222 = vld [vmem:[%s208 + $0x11] sm:$0xff]
      %v223 = vld [vmem:[%s208 + $0x21] sm:$0xff]
      %v224 = vld [vmem:[%s208 + $0x31] sm:$0xff]
      %v225 = vld [vmem:[%s208 + $0x41] sm:$0xff]
      %v226 = vld [vmem:[%s208 + $0x51] sm:$0xff]
      %v227 = vld [vmem:[%s208 + $0x61] sm:$0xff]
      %v228 = vld [vmem:[%s208 + $0x71] sm:$0xff]
      %v229 = vpack.c.bf16 %v222, %v221
      %v230 = vpack.c.bf16 %v224, %v223
      %v231 = vpack.c.bf16 %v226, %v225
      %v232 = vpack.c.bf16 %v228, %v227
      %v233 = vld [vmem:[%s1] sm:$0xf]
      %v234 = vld [vmem:[%s1 + $0x4] sm:$0xf]
      %v235 = vld [vmem:[%s1 + $0x8] sm:$0xf]
      %v236 = vld [vmem:[%s1 + $0xc] sm:$0xf]
      %v237 = vld [vmem:[%s1 + $0x10] sm:$0xf]
      %v238 = vld [vmem:[%s1 + $0x14] sm:$0xf]
      %v239 = vld [vmem:[%s1 + $0x18] sm:$0xf]
      %v240 = vld [vmem:[%s1 + $0x1c] sm:$0xf]
      %v241 = vld [vmem:[%s1 + $0x20] sm:$0xf]
      %v242 = vld [vmem:[%s1 + $0x24] sm:$0xf]
      %v243 = vld [vmem:[%s1 + $0x28] sm:$0xf]
      %v244 = vld [vmem:[%s1 + $0x2c] sm:$0xf]
      %v245 = vld [vmem:[%s1 + $0x30] sm:$0xf]
      %v246 = vld [vmem:[%s1 + $0x34] sm:$0xf]
      %v247 = vld [vmem:[%s1 + $0x38] sm:$0xf]
      %v248 = vld [vmem:[%s1 + $0x3c] sm:$0xf]
      %v249 = vld [vmem:[%s1 + $0x40] sm:$0xf]
      %v250 = vld [vmem:[%s1 + $0x44] sm:$0xf]
      %v251 = vld [vmem:[%s1 + $0x48] sm:$0xf]
      %v252 = vld [vmem:[%s1 + $0x4c] sm:$0xf]
      %v253 = vld [vmem:[%s1 + $0x50] sm:$0xf]
      %v254 = vld [vmem:[%s1 + $0x54] sm:$0xf]
      %v255 = vld [vmem:[%s1 + $0x58] sm:$0xf]
      %v256 = vld [vmem:[%s1 + $0x5c] sm:$0xf]
      %v257 = vld [vmem:[%s1 + $0x60] sm:$0xf]
      %v258 = vld [vmem:[%s1 + $0x64] sm:$0xf]
      %v259 = vld [vmem:[%s1 + $0x68] sm:$0xf]
      %v260 = vld [vmem:[%s1 + $0x6c] sm:$0xf]
      %v261 = vld [vmem:[%s1 + $0x70] sm:$0xf]
      %v262 = vld [vmem:[%s1 + $0x74] sm:$0xf]
      %v263 = vld [vmem:[%s1 + $0x78] sm:$0xf]
      %v264 = vld [vmem:[%s1 + $0x7c] sm:$0xf]
      %v265 = vld [vmem:[%s1 + $0x80] sm:$0xf]
      %v266 = vld [vmem:[%s1 + $0x84] sm:$0xf]
      %v267 = vld [vmem:[%s1 + $0x88] sm:$0xf]
      %v268 = vld [vmem:[%s1 + $0x8c] sm:$0xf]
      %v269 = vld [vmem:[%s1 + $0x90] sm:$0xf]
      %v270 = vld [vmem:[%s1 + $0x94] sm:$0xf]
      %v271 = vld [vmem:[%s1 + $0x98] sm:$0xf]
      %v272 = vld [vmem:[%s1 + $0x9c] sm:$0xf]
      %v273 = vld [vmem:[%s1 + $0xa0] sm:$0xf]
      %v274 = vld [vmem:[%s1 + $0xa4] sm:$0xf]
      %v275 = vld [vmem:[%s1 + $0xa8] sm:$0xf]
      %v276 = vld [vmem:[%s1 + $0xac] sm:$0xf]
      %v277 = vld [vmem:[%s1 + $0xb0] sm:$0xf]
      %v278 = vld [vmem:[%s1 + $0xb4] sm:$0xf]
      %v279 = vld [vmem:[%s1 + $0xb8] sm:$0xf]
      %v280 = vld [vmem:[%s1 + $0xbc] sm:$0xf]
      %v281 = vld [vmem:[%s1 + $0xc0] sm:$0xf]
      %v282 = vld [vmem:[%s1 + $0xc4] sm:$0xf]
      %v283 = vld [vmem:[%s1 + $0xc8] sm:$0xf]
      %v284 = vld [vmem:[%s1 + $0xcc] sm:$0xf]
      %v285 = vld [vmem:[%s1 + $0xd0] sm:$0xf]
      %v286 = vld [vmem:[%s1 + $0xd4] sm:$0xf]
      %v287 = vld [vmem:[%s1 + $0xd8] sm:$0xf]
      %v288 = vld [vmem:[%s1 + $0xdc] sm:$0xf]
      %v289 = vld [vmem:[%s1 + $0xe0] sm:$0xf]
      %v290 = vld [vmem:[%s1 + $0xe4] sm:$0xf]
      %v291 = vld [vmem:[%s1 + $0xe8] sm:$0xf]
      %v292 = vld [vmem:[%s1 + $0xec] sm:$0xf]
      %v293 = vld [vmem:[%s1 + $0xf0] sm:$0xf]
      %v294 = vld [vmem:[%s1 + $0xf4] sm:$0xf]
      %v295 = vld [vmem:[%s1 + $0xf8] sm:$0xf]
      %v296 = vld [vmem:[%s1 + $0xfc] sm:$0xf]
      %v361 = vunpack.c.l.b16 %v233
      %v362 = vunpack.c.l.b16 %v234
      %v363 = vunpack.c.l.b16 %v235
      %v364 = vunpack.c.l.b16 %v236
      %v365 = vunpack.c.l.b16 %v237
      %v366 = vunpack.c.l.b16 %v238
      %v367 = vunpack.c.l.b16 %v239
      %v368 = vunpack.c.l.b16 %v240
      %v369 = vunpack.c.l.b16 %v241
      %v370 = vunpack.c.l.b16 %v242
      %v371 = vunpack.c.l.b16 %v243
      %v372 = vunpack.c.l.b16 %v244
      %v373 = vunpack.c.l.b16 %v245
      %v374 = vunpack.c.l.b16 %v246
      %v375 = vunpack.c.l.b16 %v247
      %v376 = vunpack.c.l.b16 %v248
      %v377 = vunpack.c.l.b16 %v249
      %v378 = vunpack.c.l.b16 %v250
      %v379 = vunpack.c.l.b16 %v251
      %v380 = vunpack.c.l.b16 %v252
      %v381 = vunpack.c.l.b16 %v253
      %v382 = vunpack.c.l.b16 %v254
      %v383 = vunpack.c.l.b16 %v255
      %v384 = vunpack.c.l.b16 %v256
      %v385 = vunpack.c.l.b16 %v257
      %v386 = vunpack.c.l.b16 %v258
      %v387 = vunpack.c.l.b16 %v259
      %v388 = vunpack.c.l.b16 %v260
      %v389 = vunpack.c.l.b16 %v261
      %v390 = vunpack.c.l.b16 %v262
      %v391 = vunpack.c.l.b16 %v263
      %v392 = vunpack.c.l.b16 %v264
      %v393 = vunpack.c.l.b16 %v265
      %v394 = vunpack.c.l.b16 %v266
      %v395 = vunpack.c.l.b16 %v267
      %v396 = vunpack.c.l.b16 %v268
      %v397 = vunpack.c.l.b16 %v269
      %v398 = vunpack.c.l.b16 %v270
      %v399 = vunpack.c.l.b16 %v271
      %v400 = vunpack.c.l.b16 %v272
      %v401 = vunpack.c.l.b16 %v273
      %v402 = vunpack.c.l.b16 %v274
      %v403 = vunpack.c.l.b16 %v275
      %v404 = vunpack.c.l.b16 %v276
      %v405 = vunpack.c.l.b16 %v277
      %v406 = vunpack.c.l.b16 %v278
      %v407 = vunpack.c.l.b16 %v279
      %v408 = vunpack.c.l.b16 %v280
      %v409 = vunpack.c.l.b16 %v281
      %v410 = vunpack.c.l.b16 %v282
      %v411 = vunpack.c.l.b16 %v283
      %v412 = vunpack.c.l.b16 %v284
      %v413 = vunpack.c.l.b16 %v285
      %v414 = vunpack.c.l.b16 %v286
      %v415 = vunpack.c.l.b16 %v287
      %v416 = vunpack.c.l.b16 %v288
      %v417 = vunpack.c.l.b16 %v289
      %v418 = vunpack.c.l.b16 %v290
      %v419 = vunpack.c.l.b16 %v291
      %v420 = vunpack.c.l.b16 %v292
      %v421 = vunpack.c.l.b16 %v293
      %v422 = vunpack.c.l.b16 %v294
      %v423 = vunpack.c.l.b16 %v295
      %v424 = vunpack.c.l.b16 %v296
      %v425 = vpack.c.b16 %v362, %v361
      %v426 = vpack.c.b16 %v364, %v363
      %v427 = vpack.c.b16 %v366, %v365
      %v428 = vpack.c.b16 %v368, %v367
      %v429 = vpack.c.b16 %v370, %v369
      %v430 = vpack.c.b16 %v372, %v371
      %v431 = vpack.c.b16 %v374, %v373
      %v432 = vpack.c.b16 %v376, %v375
      %v433 = vpack.c.b16 %v378, %v377
      %v434 = vpack.c.b16 %v380, %v379
      %v435 = vpack.c.b16 %v382, %v381
      %v436 = vpack.c.b16 %v384, %v383
      %v437 = vpack.c.b16 %v386, %v385
      %v438 = vpack.c.b16 %v388, %v387
      %v439 = vpack.c.b16 %v390, %v389
      %v440 = vpack.c.b16 %v392, %v391
      %v441 = vpack.c.b16 %v394, %v393
      %v442 = vpack.c.b16 %v396, %v395
      %v443 = vpack.c.b16 %v398, %v397
      %v444 = vpack.c.b16 %v400, %v399
      %v445 = vpack.c.b16 %v402, %v401
      %v446 = vpack.c.b16 %v404, %v403
      %v447 = vpack.c.b16 %v406, %v405
      %v448 = vpack.c.b16 %v408, %v407
      %v449 = vpack.c.b16 %v410, %v409
      %v450 = vpack.c.b16 %v412, %v411
      %v451 = vpack.c.b16 %v414, %v413
      %v452 = vpack.c.b16 %v416, %v415
      %v453 = vpack.c.b16 %v418, %v417
      %v454 = vpack.c.b16 %v420, %v419
      %v455 = vpack.c.b16 %v422, %v421
      %v456 = vpack.c.b16 %v424, %v423
      %489 = vmatprep.subr.bf16.mxu0 0
      %490 = vmatpush1.bf16.msra.mxu0 %v425
      %491 = vmatprep.subr.bf16.mxu0 0
      %492 = vmatpush1.bf16.msra.mxu0 %v426
      %493 = vmatprep.subr.bf16.mxu0 0
      %494 = vmatpush1.bf16.msra.mxu0 %v427
      %495 = vmatprep.subr.bf16.mxu0 0
      %496 = vmatpush1.bf16.msra.mxu0 %v428
      %497 = vmatprep.subr.bf16.mxu0 0
      %498 = vmatpush1.bf16.msra.mxu0 %v429
      %499 = vmatprep.subr.bf16.mxu0 0
      %500 = vmatpush1.bf16.msra.mxu0 %v430
      %501 = vmatprep.subr.bf16.mxu0 0
      %502 = vmatpush1.bf16.msra.mxu0 %v431
      %503 = vmatprep.subr.bf16.mxu0 0
      %504 = vmatpush1.bf16.msra.mxu0 %v432
      %505 = vmatprep.subr.bf16.mxu0 0
      %506 = vmatpush1.bf16.msra.mxu0 %v433
      %507 = vmatprep.subr.bf16.mxu0 0
      %508 = vmatpush1.bf16.msra.mxu0 %v434
      %509 = vmatprep.subr.bf16.mxu0 0
      %510 = vmatpush1.bf16.msra.mxu0 %v435
      %511 = vmatprep.subr.bf16.mxu0 0
      %512 = vmatpush1.bf16.msra.mxu0 %v436
      %513 = vmatprep.subr.bf16.mxu0 0
      %514 = vmatpush1.bf16.msra.mxu0 %v437
      %515 = vmatprep.subr.bf16.mxu0 0
      %516 = vmatpush1.bf16.msra.mxu0 %v438
      %517 = vmatprep.subr.bf16.mxu0 0
      %518 = vmatpush1.bf16.msra.mxu0 %v439
      %519 = vmatprep.subr.bf16.mxu0 0
      %520 = vmatpush1.bf16.msra.mxu0 %v440
      %521 = vmatprep.mubr.bf16.mxu0 %v204
      %522 = vmatmul.mubr.bf16.gmra.mrb[0].mxu0 %v192
      %v523 = vpop.f32.mrb[0].mxu0
      %v524 = vadd.f32 0.0, %v523
      %v525 = vpop.f32.mrb[0].mxu0
      %v526 = vpop.f32.mrb[0].mxu0
      %v527 = vadd.f32 0.0, %v526
      %v528 = vpop.f32.mrb[0].mxu0
      %529 = vmatprep.mubr.bf16.mxu0 %v205
      %530 = vmatmul.mubr.bf16.gmra.mrb[0].mxu0 %v193
      %v531 = vpop.f32.mrb[0].mxu0
      %v532 = vadd.f32 0.0, %v531
      %v533 = vpop.f32.mrb[0].mxu0
      %v534 = vpop.f32.mrb[0].mxu0
      %v535 = vadd.f32 0.0, %v534
      %v536 = vpop.f32.mrb[0].mxu0
      %537 = vmatprep.mubr.bf16.mxu0 %v206
      %538 = vmatmul.mubr.bf16.gmra.mrb[0].mxu0 %v194
      %v539 = vpop.f32.mrb[0].mxu0
      %v540 = vadd.f32 0.0, %v539
      %v541 = vpop.f32.mrb[0].mxu0
      %v542 = vpop.f32.mrb[0].mxu0
      %v543 = vadd.f32 0.0, %v542
      %v544 = vpop.f32.mrb[0].mxu0
      %545 = vmatprep.mubr.bf16.mxu0 %v207
      %546 = vmatmul.mubr.bf16.gmra.mrb[0].mxu0 %v195
      %v547 = vpop.f32.mrb[0].mxu0
      %v548 = vadd.f32 0.0, %v547
      %v549 = vpop.f32.mrb[0].mxu0
      %v550 = vpop.f32.mrb[0].mxu0
      %v551 = vadd.f32 0.0, %v550
      %v552 = vpop.f32.mrb[0].mxu0
      %553 = vdwg.mxu0
      %554 = vmatprep.subr.bf16.mxu0 0
      %555 = vmatpush1.bf16.msra.mxu0 %v441
      %556 = vmatprep.subr.bf16.mxu0 0
      %557 = vmatpush1.bf16.msra.mxu0 %v442
      %558 = vmatprep.subr.bf16.mxu0 0
      %559 = vmatpush1.bf16.msra.mxu0 %v443
      %560 = vmatprep.subr.bf16.mxu0 0
      %561 = vmatpush1.bf16.msra.mxu0 %v444
      %562 = vmatprep.subr.bf16.mxu0 0
      %563 = vmatpush1.bf16.msra.mxu0 %v445
      %564 = vmatprep.subr.bf16.mxu0 0
      %565 = vmatpush1.bf16.msra.mxu0 %v446
      %566 = vmatprep.subr.bf16.mxu0 0
      %567 = vmatpush1.bf16.msra.mxu0 %v447
      %568 = vmatprep.subr.bf16.mxu0 0
      %569 = vmatpush1.bf16.msra.mxu0 %v448
      %570 = vmatprep.subr.bf16.mxu0 0
      %571 = vmatpush1.bf16.msra.mxu0 %v449
      %572 = vmatprep.subr.bf16.mxu0 0
      %573 = vmatpush1.bf16.msra.mxu0 %v450
      %574 = vmatprep.subr.bf16.mxu0 0
      %575 = vmatpush1.bf16.msra.mxu0 %v451
      %576 = vmatprep.subr.bf16.mxu0 0
      %577 = vmatpush1.bf16.msra.mxu0 %v452
      %578 = vmatprep.subr.bf16.mxu0 0
      %579 = vmatpush1.bf16.msra.mxu0 %v453
      %580 = vmatprep.subr.bf16.mxu0 0
      %581 = vmatpush1.bf16.msra.mxu0 %v454
      %582 = vmatprep.subr.bf16.mxu0 0
      %583 = vmatpush1.bf16.msra.mxu0 %v455
      %584 = vmatprep.subr.bf16.mxu0 0
      %585 = vmatpush1.bf16.msra.mxu0 %v456
      %586 = vmatprep.mubr.bf16.mxu0 %v229
      %587 = vmatmul.mubr.bf16.gmra.mrb[0].mxu0 %v217
      %v588 = vpop.f32.mrb[0].mxu0
      %v589 = vadd.f32 %v524, %v588
      %v590 = vpop.f32.mrb[0].mxu0
      %v591 = vpop.f32.mrb[0].mxu0
      %v592 = vadd.f32 %v527, %v591
      %v593 = vpop.f32.mrb[0].mxu0
      %594 = vmatprep.mubr.bf16.mxu0 %v230
      %595 = vmatmul.mubr.bf16.gmra.mrb[0].mxu0 %v218
      %v596 = vpop.f32.mrb[0].mxu0
      %v597 = vadd.f32 %v532, %v596
      %v598 = vpop.f32.mrb[0].mxu0
      %v599 = vpop.f32.mrb[0].mxu0
      %v600 = vadd.f32 %v535, %v599
      %v601 = vpop.f32.mrb[0].mxu0
      %602 = vmatprep.mubr.bf16.mxu0 %v231
      %603 = vmatmul.mubr.bf16.gmra.mrb[0].mxu0 %v219
      %v604 = vpop.f32.mrb[0].mxu0
      %v605 = vadd.f32 %v540, %v604
      %v606 = vpop.f32.mrb[0].mxu0
      %v607 = vpop.f32.mrb[0].mxu0
      %v608 = vadd.f32 %v543, %v607
      %v609 = vpop.f32.mrb[0].mxu0
      %610 = vmatprep.mubr.bf16.mxu0 %v232
      %611 = vmatmul.mubr.bf16.gmra.mrb[0].mxu0 %v220
      %v612 = vpop.f32.mrb[0].mxu0
      %v613 = vadd.f32 %v548, %v612
      %v614 = vpop.f32.mrb[0].mxu0
      %v615 = vpop.f32.mrb[0].mxu0
      %v616 = vadd.f32 %v551, %v615
      %v617 = vpop.f32.mrb[0].mxu0
      %618 = vdwg.mxu0
      %s619 = smul.u32 %s15, 4
      %s620 = smul.u32 %s619, 64
      %s621 = scalar_lea.vmem %s4, %s620
      %vm622 = vcmask 31744
      %623 = vst.msk [vmem:[%s621] sm:$0xff] %vm622, %v589
      %624 = vst.msk [vmem:[%s621 + $0x8] sm:$0xff] %vm622, %v592
      %625 = vst.msk [vmem:[%s621 + $0x10] sm:$0xff] %vm622, %v597
      %626 = vst.msk [vmem:[%s621 + $0x18] sm:$0xff] %vm622, %v600
      %627 = vst.msk [vmem:[%s621 + $0x20] sm:$0xff] %vm622, %v605
      %628 = vst.msk [vmem:[%s621 + $0x28] sm:$0xff] %vm622, %v608
      %629 = vst.msk [vmem:[%s621 + $0x30] sm:$0xff] %vm622, %v613
      %630 = vst.msk [vmem:[%s621 + $0x38] sm:$0xff] %vm622, %v616
      %v631 = vld [vmem:[%s182 + $0x1] sm:$0xff]
      %v632 = vld [vmem:[%s182 + $0x11] sm:$0xff]
      %v633 = vld [vmem:[%s182 + $0x21] sm:$0xff]
      %v634 = vld [vmem:[%s182 + $0x31] sm:$0xff]
      %v635 = vld [vmem:[%s182 + $0x41] sm:$0xff]
      %v636 = vld [vmem:[%s182 + $0x51] sm:$0xff]
      %v637 = vld [vmem:[%s182 + $0x61] sm:$0xff]
      %v638 = vld [vmem:[%s182 + $0x71] sm:$0xff]
      %v639 = vpack.c.bf16 %v632, %v631
      %v640 = vpack.c.bf16 %v634, %v633
      %v641 = vpack.c.bf16 %v636, %v635
      %v642 = vpack.c.bf16 %v638, %v637
      %v643 = vld [vmem:[%s182 + $0x2] sm:$0xff]
      %v644 = vld [vmem:[%s182 + $0x12] sm:$0xff]
      %v645 = vld [vmem:[%s182 + $0x22] sm:$0xff]
      %v646 = vld [vmem:[%s182 + $0x32] sm:$0xff]
      %v647 = vld [vmem:[%s182 + $0x42] sm:$0xff]
      %v648 = vld [vmem:[%s182 + $0x52] sm:$0xff]
      %v649 = vld [vmem:[%s182 + $0x62] sm:$0xff]
      %v650 = vld [vmem:[%s182 + $0x72] sm:$0xff]
      %v651 = vpack.c.bf16 %v644, %v643
      %v652 = vpack.c.bf16 %v646, %v645
      %v653 = vpack.c.bf16 %v648, %v647
      %v654 = vpack.c.bf16 %v650, %v649
      %v655 = vld [vmem:[%s208 + $0x1] sm:$0xff]
      %v656 = vld [vmem:[%s208 + $0x11] sm:$0xff]
      %v657 = vld [vmem:[%s208 + $0x21] sm:$0xff]
      %v658 = vld [vmem:[%s208 + $0x31] sm:$0xff]
      %v659 = vld [vmem:[%s208 + $0x41] sm:$0xff]
      %v660 = vld [vmem:[%s208 + $0x51] sm:$0xff]
      %v661 = vld [vmem:[%s208 + $0x61] sm:$0xff]
      %v662 = vld [vmem:[%s208 + $0x71] sm:$0xff]
      %v663 = vpack.c.bf16 %v656, %v655
      %v664 = vpack.c.bf16 %v658, %v657
      %v665 = vpack.c.bf16 %v660, %v659
      %v666 = vpack.c.bf16 %v662, %v661
      %v667 = vld [vmem:[%s208 + $0x2] sm:$0xff]
      %v668 = vld [vmem:[%s208 + $0x12] sm:$0xff]
      %v669 = vld [vmem:[%s208 + $0x22] sm:$0xff]
      %v670 = vld [vmem:[%s208 + $0x32] sm:$0xff]
      %v671 = vld [vmem:[%s208 + $0x42] sm:$0xff]
      %v672 = vld [vmem:[%s208 + $0x52] sm:$0xff]
      %v673 = vld [vmem:[%s208 + $0x62] sm:$0xff]
      %v674 = vld [vmem:[%s208 + $0x72] sm:$0xff]
      %v675 = vpack.c.bf16 %v668, %v667
      %v676 = vpack.c.bf16 %v670, %v669
      %v677 = vpack.c.bf16 %v672, %v671
      %v678 = vpack.c.bf16 %v674, %v673
      %s679 = scalar_lea.vmem %s1, 256
      %v680 = vld [vmem:[%s679] sm:$0xf]
      %v681 = vld [vmem:[%s679 + $0x4] sm:$0xf]
      %v682 = vld [vmem:[%s679 + $0x8] sm:$0xf]
      %v683 = vld [vmem:[%s679 + $0xc] sm:$0xf]
      %v684 = vld [vmem:[%s679 + $0x10] sm:$0xf]
      %v685 = vld [vmem:[%s679 + $0x14] sm:$0xf]
      %v686 = vld [vmem:[%s679 + $0x18] sm:$0xf]
      %v687 = vld [vmem:[%s679 + $0x1c] sm:$0xf]
      %v688 = vld [vmem:[%s679 + $0x20] sm:$0xf]
      %v689 = vld [vmem:[%s679 + $0x24] sm:$0xf]
      %v690 = vld [vmem:[%s679 + $0x28] sm:$0xf]
      %v691 = vld [vmem:[%s679 + $0x2c] sm:$0xf]
      %v692 = vld [vmem:[%s679 + $0x30] sm:$0xf]
      %v693 = vld [vmem:[%s679 + $0x34] sm:$0xf]
      %v694 = vld [vmem:[%s679 + $0x38] sm:$0xf]
      %v695 = vld [vmem:[%s679 + $0x3c] sm:$0xf]
      %v696 = vld [vmem:[%s679 + $0x40] sm:$0xf]
      %v697 = vld [vmem:[%s679 + $0x44] sm:$0xf]
      %v698 = vld [vmem:[%s679 + $0x48] sm:$0xf]
      %v699 = vld [vmem:[%s679 + $0x4c] sm:$0xf]
      %v700 = vld [vmem:[%s679 + $0x50] sm:$0xf]
      %v701 = vld [vmem:[%s679 + $0x54] sm:$0xf]
      %v702 = vld [vmem:[%s679 + $0x58] sm:$0xf]
      %v703 = vld [vmem:[%s679 + $0x5c] sm:$0xf]
      %v704 = vld [vmem:[%s679 + $0x60] sm:$0xf]
      %v705 = vld [vmem:[%s679 + $0x64] sm:$0xf]
      %v706 = vld [vmem:[%s679 + $0x68] sm:$0xf]
      %v707 = vld [vmem:[%s679 + $0x6c] sm:$0xf]
      %v708 = vld [vmem:[%s679 + $0x70] sm:$0xf]
      %v709 = vld [vmem:[%s679 + $0x74] sm:$0xf]
      %v710 = vld [vmem:[%s679 + $0x78] sm:$0xf]
      %v711 = vld [vmem:[%s679 + $0x7c] sm:$0xf]
      %v712 = vld [vmem:[%s679 + $0x80] sm:$0xf]
      %v713 = vld [vmem:[%s679 + $0x84] sm:$0xf]
      %v714 = vld [vmem:[%s679 + $0x88] sm:$0xf]
      %v715 = vld [vmem:[%s679 + $0x8c] sm:$0xf]
      %v716 = vld [vmem:[%s679 + $0x90] sm:$0xf]
      %v717 = vld [vmem:[%s679 + $0x94] sm:$0xf]
      %v718 = vld [vmem:[%s679 + $0x98] sm:$0xf]
      %v719 = vld [vmem:[%s679 + $0x9c] sm:$0xf]
      %v720 = vld [vmem:[%s679 + $0xa0] sm:$0xf]
      %v721 = vld [vmem:[%s679 + $0xa4] sm:$0xf]
      %v722 = vld [vmem:[%s679 + $0xa8] sm:$0xf]
      %v723 = vld [vmem:[%s679 + $0xac] sm:$0xf]
      %v724 = vld [vmem:[%s679 + $0xb0] sm:$0xf]
      %v725 = vld [vmem:[%s679 + $0xb4] sm:$0xf]
      %v726 = vld [vmem:[%s679 + $0xb8] sm:$0xf]
      %v727 = vld [vmem:[%s679 + $0xbc] sm:$0xf]
      %v728 = vld [vmem:[%s679 + $0xc0] sm:$0xf]
      %v729 = vld [vmem:[%s679 + $0xc4] sm:$0xf]
      %v730 = vld [vmem:[%s679 + $0xc8] sm:$0xf]
      %v731 = vld [vmem:[%s679 + $0xcc] sm:$0xf]
      %v732 = vld [vmem:[%s679 + $0xd0] sm:$0xf]
      %v733 = vld [vmem:[%s679 + $0xd4] sm:$0xf]
      %v734 = vld [vmem:[%s679 + $0xd8] sm:$0xf]
      %v735 = vld [vmem:[%s679 + $0xdc] sm:$0xf]
      %v736 = vld [vmem:[%s679 + $0xe0] sm:$0xf]
      %v737 = vld [vmem:[%s679 + $0xe4] sm:$0xf]
      %v738 = vld [vmem:[%s679 + $0xe8] sm:$0xf]
      %v739 = vld [vmem:[%s679 + $0xec] sm:$0xf]
      %v740 = vld [vmem:[%s679 + $0xf0] sm:$0xf]
      %v741 = vld [vmem:[%s679 + $0xf4] sm:$0xf]
      %v742 = vld [vmem:[%s679 + $0xf8] sm:$0xf]
      %v743 = vld [vmem:[%s679 + $0xfc] sm:$0xf]
      %v808 = vunpack.c.l.b16 %v680
      %v809 = vunpack.c.l.b16 %v681
      %v810 = vunpack.c.l.b16 %v682
      %v811 = vunpack.c.l.b16 %v683
      %v812 = vunpack.c.l.b16 %v684
      %v813 = vunpack.c.l.b16 %v685
      %v814 = vunpack.c.l.b16 %v686
      %v815 = vunpack.c.l.b16 %v687
      %v816 = vunpack.c.l.b16 %v688
      %v817 = vunpack.c.l.b16 %v689
      %v818 = vunpack.c.l.b16 %v690
      %v819 = vunpack.c.l.b16 %v691
      %v820 = vunpack.c.l.b16 %v692
      %v821 = vunpack.c.l.b16 %v693
      %v822 = vunpack.c.l.b16 %v694
      %v823 = vunpack.c.l.b16 %v695
      %v824 = vunpack.c.l.b16 %v696
      %v825 = vunpack.c.l.b16 %v697
      %v826 = vunpack.c.l.b16 %v698
      %v827 = vunpack.c.l.b16 %v699
      %v828 = vunpack.c.l.b16 %v700
      %v829 = vunpack.c.l.b16 %v701
      %v830 = vunpack.c.l.b16 %v702
      %v831 = vunpack.c.l.b16 %v703
      %v832 = vunpack.c.l.b16 %v704
      %v833 = vunpack.c.l.b16 %v705
      %v834 = vunpack.c.l.b16 %v706
      %v835 = vunpack.c.l.b16 %v707
      %v836 = vunpack.c.l.b16 %v708
      %v837 = vunpack.c.l.b16 %v709
      %v838 = vunpack.c.l.b16 %v710
      %v839 = vunpack.c.l.b16 %v711
      %v840 = vunpack.c.l.b16 %v712
      %v841 = vunpack.c.l.b16 %v713
      %v842 = vunpack.c.l.b16 %v714
      %v843 = vunpack.c.l.b16 %v715
      %v844 = vunpack.c.l.b16 %v716
      %v845 = vunpack.c.l.b16 %v717
      %v846 = vunpack.c.l.b16 %v718
      %v847 = vunpack.c.l.b16 %v719
      %v848 = vunpack.c.l.b16 %v720
      %v849 = vunpack.c.l.b16 %v721
      %v850 = vunpack.c.l.b16 %v722
      %v851 = vunpack.c.l.b16 %v723
      %v852 = vunpack.c.l.b16 %v724
      %v853 = vunpack.c.l.b16 %v725
      %v854 = vunpack.c.l.b16 %v726
      %v855 = vunpack.c.l.b16 %v727
      %v856 = vunpack.c.l.b16 %v728
      %v857 = vunpack.c.l.b16 %v729
      %v858 = vunpack.c.l.b16 %v730
      %v859 = vunpack.c.l.b16 %v731
      %v860 = vunpack.c.l.b16 %v732
      %v861 = vunpack.c.l.b16 %v733
      %v862 = vunpack.c.l.b16 %v734
      %v863 = vunpack.c.l.b16 %v735
      %v864 = vunpack.c.l.b16 %v736
      %v865 = vunpack.c.l.b16 %v737
      %v866 = vunpack.c.l.b16 %v738
      %v867 = vunpack.c.l.b16 %v739
      %v868 = vunpack.c.l.b16 %v740
      %v869 = vunpack.c.l.b16 %v741
      %v870 = vunpack.c.l.b16 %v742
      %v871 = vunpack.c.l.b16 %v743
      %v872 = vpack.c.b16 %v809, %v808
      %v873 = vpack.c.b16 %v811, %v810
      %v874 = vpack.c.b16 %v813, %v812
      %v875 = vpack.c.b16 %v815, %v814
      %v876 = vpack.c.b16 %v817, %v816
      %v877 = vpack.c.b16 %v819, %v818
      %v878 = vpack.c.b16 %v821, %v820
      %v879 = vpack.c.b16 %v823, %v822
      %v880 = vpack.c.b16 %v825, %v824
      %v881 = vpack.c.b16 %v827, %v826
      %v882 = vpack.c.b16 %v829, %v828
      %v883 = vpack.c.b16 %v831, %v830
      %v884 = vpack.c.b16 %v833, %v832
      %v885 = vpack.c.b16 %v835, %v834
      %v886 = vpack.c.b16 %v837, %v836
      %v887 = vpack.c.b16 %v839, %v838
      %v888 = vpack.c.b16 %v841, %v840
      %v889 = vpack.c.b16 %v843, %v842
      %v890 = vpack.c.b16 %v845, %v844
      %v891 = vpack.c.b16 %v847, %v846
      %v892 = vpack.c.b16 %v849, %v848
      %v893 = vpack.c.b16 %v851, %v850
      %v894 = vpack.c.b16 %v853, %v852
      %v895 = vpack.c.b16 %v855, %v854
      %v896 = vpack.c.b16 %v857, %v856
      %v897 = vpack.c.b16 %v859, %v858
      %v898 = vpack.c.b16 %v861, %v860
      %v899 = vpack.c.b16 %v863, %v862
      %v900 = vpack.c.b16 %v865, %v864
      %v901 = vpack.c.b16 %v867, %v866
      %v902 = vpack.c.b16 %v869, %v868
      %v903 = vpack.c.b16 %v871, %v870
      %936 = vmatprep.subr.bf16.mxu0 0
      %937 = vmatpush1.bf16.msra.mxu0 %v872
      %938 = vmatprep.subr.bf16.mxu0 0
      %939 = vmatpush1.bf16.msra.mxu0 %v873
      %940 = vmatprep.subr.bf16.mxu0 0
      %941 = vmatpush1.bf16.msra.mxu0 %v874
      %942 = vmatprep.subr.bf16.mxu0 0
      %943 = vmatpush1.bf16.msra.mxu0 %v875
      %944 = vmatprep.subr.bf16.mxu0 0
      %945 = vmatpush1.bf16.msra.mxu0 %v876
      %946 = vmatprep.subr.bf16.mxu0 0
      %947 = vmatpush1.bf16.msra.mxu0 %v877
      %948 = vmatprep.subr.bf16.mxu0 0
      %949 = vmatpush1.bf16.msra.mxu0 %v878
      %950 = vmatprep.subr.bf16.mxu0 0
      %951 = vmatpush1.bf16.msra.mxu0 %v879
      %952 = vmatprep.subr.bf16.mxu0 0
      %953 = vmatpush1.bf16.msra.mxu0 %v880
      %954 = vmatprep.subr.bf16.mxu0 0
      %955 = vmatpush1.bf16.msra.mxu0 %v881
      %956 = vmatprep.subr.bf16.mxu0 0
      %957 = vmatpush1.bf16.msra.mxu0 %v882
      %958 = vmatprep.subr.bf16.mxu0 0
      %959 = vmatpush1.bf16.msra.mxu0 %v883
      %960 = vmatprep.subr.bf16.mxu0 0
      %961 = vmatpush1.bf16.msra.mxu0 %v884
      %962 = vmatprep.subr.bf16.mxu0 0
      %963 = vmatpush1.bf16.msra.mxu0 %v885
      %964 = vmatprep.subr.bf16.mxu0 0
      %965 = vmatpush1.bf16.msra.mxu0 %v886
      %966 = vmatprep.subr.bf16.mxu0 0
      %967 = vmatpush1.bf16.msra.mxu0 %v887
      %968 = vmatprep.mubr.bf16.mxu0 %v651
      %969 = vmatmul.mubr.bf16.gmra.mrb[0].mxu0 %v639
      %v970 = vpop.f32.mrb[0].mxu0
      %v971 = vadd.f32 0.0, %v970
      %v972 = vpop.f32.mrb[0].mxu0
      %v973 = vpop.f32.mrb[0].mxu0
      %v974 = vadd.f32 0.0, %v973
      %v975 = vpop.f32.mrb[0].mxu0
      %976 = vmatprep.mubr.bf16.mxu0 %v652
      %977 = vmatmul.mubr.bf16.gmra.mrb[0].mxu0 %v640
      %v978 = vpop.f32.mrb[0].mxu0
      %v979 = vadd.f32 0.0, %v978
      %v980 = vpop.f32.mrb[0].mxu0
      %v981 = vpop.f32.mrb[0].mxu0
      %v982 = vadd.f32 0.0, %v981
      %v983 = vpop.f32.mrb[0].mxu0
      %984 = vmatprep.mubr.bf16.mxu0 %v653
      %985 = vmatmul.mubr.bf16.gmra.mrb[0].mxu0 %v641
      %v986 = vpop.f32.mrb[0].mxu0
      %v987 = vadd.f32 0.0, %v986
      %v988 = vpop.f32.mrb[0].mxu0
      %v989 = vpop.f32.mrb[0].mxu0
      %v990 = vadd.f32 0.0, %v989
      %v991 = vpop.f32.mrb[0].mxu0
      %992 = vmatprep.mubr.bf16.mxu0 %v654
      %993 = vmatmul.mubr.bf16.gmra.mrb[0].mxu0 %v642
      %v994 = vpop.f32.mrb[0].mxu0
      %v995 = vadd.f32 0.0, %v994
      %v996 = vpop.f32.mrb[0].mxu0
      %v997 = vpop.f32.mrb[0].mxu0
      %v998 = vadd.f32 0.0, %v997
      %v999 = vpop.f32.mrb[0].mxu0
      %1000 = vdwg.mxu0
      %1001 = vmatprep.subr.bf16.mxu0 0
      %1002 = vmatpush1.bf16.msra.mxu0 %v888
      %1003 = vmatprep.subr.bf16.mxu0 0
      %1004 = vmatpush1.bf16.msra.mxu0 %v889
      %1005 = vmatprep.subr.bf16.mxu0 0
      %1006 = vmatpush1.bf16.msra.mxu0 %v890
      %1007 = vmatprep.subr.bf16.mxu0 0
      %1008 = vmatpush1.bf16.msra.mxu0 %v891
      %1009 = vmatprep.subr.bf16.mxu0 0
      %1010 = vmatpush1.bf16.msra.mxu0 %v892
      %1011 = vmatprep.subr.bf16.mxu0 0
      %1012 = vmatpush1.bf16.msra.mxu0 %v893
      %1013 = vmatprep.subr.bf16.mxu0 0
      %1014 = vmatpush1.bf16.msra.mxu0 %v894
      %1015 = vmatprep.subr.bf16.mxu0 0
      %1016 = vmatpush1.bf16.msra.mxu0 %v895
      %1017 = vmatprep.subr.bf16.mxu0 0
      %1018 = vmatpush1.bf16.msra.mxu0 %v896
      %1019 = vmatprep.subr.bf16.mxu0 0
      %1020 = vmatpush1.bf16.msra.mxu0 %v897
      %1021 = vmatprep.subr.bf16.mxu0 0
      %1022 = vmatpush1.bf16.msra.mxu0 %v898
      %1023 = vmatprep.subr.bf16.mxu0 0
      %1024 = vmatpush1.bf16.msra.mxu0 %v899
      %1025 = vmatprep.subr.bf16.mxu0 0
      %1026 = vmatpush1.bf16.msra.mxu0 %v900
      %1027 = vmatprep.subr.bf16.mxu0 0
      %1028 = vmatpush1.bf16.msra.mxu0 %v901
      %1029 = vmatprep.subr.bf16.mxu0 0
      %1030 = vmatpush1.bf16.msra.mxu0 %v902
      %1031 = vmatprep.subr.bf16.mxu0 0
      %1032 = vmatpush1.bf16.msra.mxu0 %v903
      %1033 = vmatprep.mubr.bf16.mxu0 %v675
      %1034 = vmatmul.mubr.bf16.gmra.mrb[0].mxu0 %v663
      %v1035 = vpop.f32.mrb[0].mxu0
      %v1036 = vadd.f32 %v971, %v1035
      %v1037 = vpop.f32.mrb[0].mxu0
      %v1038 = vpop.f32.mrb[0].mxu0
      %v1039 = vadd.f32 %v974, %v1038
      %v1040 = vpop.f32.mrb[0].mxu0
      %1041 = vmatprep.mubr.bf16.mxu0 %v676
      %1042 = vmatmul.mubr.bf16.gmra.mrb[0].mxu0 %v664
      %v1043 = vpop.f32.mrb[0].mxu0
      %v1044 = vadd.f32 %v979, %v1043
      %v1045 = vpop.f32.mrb[0].mxu0
      %v1046 = vpop.f32.mrb[0].mxu0
      %v1047 = vadd.f32 %v982, %v1046
      %v1048 = vpop.f32.mrb[0].mxu0
      %1049 = vmatprep.mubr.bf16.mxu0 %v677
      %1050 = vmatmul.mubr.bf16.gmra.mrb[0].mxu0 %v665
      %v1051 = vpop.f32.mrb[0].mxu0
      %v1052 = vadd.f32 %v987, %v1051
      %v1053 = vpop.f32.mrb[0].mxu0
      %v1054 = vpop.f32.mrb[0].mxu0
      %v1055 = vadd.f32 %v990, %v1054
      %v1056 = vpop.f32.mrb[0].mxu0
      %1057 = vmatprep.mubr.bf16.mxu0 %v678
      %1058 = vmatmul.mubr.bf16.gmra.mrb[0].mxu0 %v666
      %v1059 = vpop.f32.mrb[0].mxu0
      %v1060 = vadd.f32 %v995, %v1059
      %v1061 = vpop.f32.mrb[0].mxu0
      %v1062 = vpop.f32.mrb[0].mxu0
      %v1063 = vadd.f32 %v998, %v1062
      %v1064 = vpop.f32.mrb[0].mxu0
      %1065 = vdwg.mxu0
      %s1066 = sadd.s32 %s619, 1
      %s1067 = smul.u32 %s1066, 64
      %s1068 = scalar_lea.vmem %s4, %s1067
      %1069 = vst.msk [vmem:[%s1068] sm:$0xff] %vm622, %v1036
      %1070 = vst.msk [vmem:[%s1068 + $0x8] sm:$0xff] %vm622, %v1039
      %1071 = vst.msk [vmem:[%s1068 + $0x10] sm:$0xff] %vm622, %v1044
      %1072 = vst.msk [vmem:[%s1068 + $0x18] sm:$0xff] %vm622, %v1047
      %1073 = vst.msk [vmem:[%s1068 + $0x20] sm:$0xff] %vm622, %v1052
      %1074 = vst.msk [vmem:[%s1068 + $0x28] sm:$0xff] %vm622, %v1055
      %1075 = vst.msk [vmem:[%s1068 + $0x30] sm:$0xff] %vm622, %v1060
      %1076 = vst.msk [vmem:[%s1068 + $0x38] sm:$0xff] %vm622, %v1063
      %v1077 = vld [vmem:[%s208] sm:$0xff]
      %v1078 = vld [vmem:[%s208 + $0x10] sm:$0xff]
      %v1079 = vld [vmem:[%s208 + $0x20] sm:$0xff]
      %v1080 = vld [vmem:[%s208 + $0x30] sm:$0xff]
      %v1081 = vld [vmem:[%s208 + $0x40] sm:$0xff]
      %v1082 = vld [vmem:[%s208 + $0x50] sm:$0xff]
      %v1083 = vld [vmem:[%s208 + $0x60] sm:$0xff]
      %v1084 = vld [vmem:[%s208 + $0x70] sm:$0xff]
      %v1085 = vpack.c.bf16 %v1078, %v1077
      %v1086 = vpack.c.bf16 %v1080, %v1079
      %v1087 = vpack.c.bf16 %v1082, %v1081
      %v1088 = vpack.c.bf16 %v1084, %v1083
      %v1089 = vld [vmem:[%s208 + $0x1] sm:$0xff]
      %v1090 = vld [vmem:[%s208 + $0x11] sm:$0xff]
      %v1091 = vld [vmem:[%s208 + $0x21] sm:$0xff]
      %v1092 = vld [vmem:[%s208 + $0x31] sm:$0xff]
      %v1093 = vld [vmem:[%s208 + $0x41] sm:$0xff]
      %v1094 = vld [vmem:[%s208 + $0x51] sm:$0xff]
      %v1095 = vld [vmem:[%s208 + $0x61] sm:$0xff]
      %v1096 = vld [vmem:[%s208 + $0x71] sm:$0xff]
      %v1097 = vpack.c.bf16 %v1090, %v1089
      %v1098 = vpack.c.bf16 %v1092, %v1091
      %v1099 = vpack.c.bf16 %v1094, %v1093
      %v1100 = vpack.c.bf16 %v1096, %v1095
      %s1101 = scalar_lea.vmem %s182, 32
      %v1102 = vld [vmem:[%s1101] sm:$0xff]
      %v1103 = vld [vmem:[%s1101 + $0x10] sm:$0xff]
      %v1104 = vld [vmem:[%s1101 + $0x20] sm:$0xff]
      %v1105 = vld [vmem:[%s1101 + $0x30] sm:$0xff]
      %v1106 = vld [vmem:[%s1101 + $0x40] sm:$0xff]
      %v1107 = vld [vmem:[%s1101 + $0x50] sm:$0xff]
      %v1108 = vld [vmem:[%s1101 + $0x60] sm:$0xff]
      %v1109 = vld [vmem:[%s1101 + $0x70] sm:$0xff]
      %v1110 = vpack.c.bf16 %v1103, %v1102
      %v1111 = vpack.c.bf16 %v1105, %v1104
      %v1112 = vpack.c.bf16 %v1107, %v1106
      %v1113 = vpack.c.bf16 %v1109, %v1108
      %v1114 = vld [vmem:[%s1101 + $0x1] sm:$0xff]
      %v1115 = vld [vmem:[%s1101 + $0x11] sm:$0xff]
      %v1116 = vld [vmem:[%s1101 + $0x21] sm:$0xff]
      %v1117 = vld [vmem:[%s1101 + $0x31] sm:$0xff]
      %v1118 = vld [vmem:[%s1101 + $0x41] sm:$0xff]
      %v1119 = vld [vmem:[%s1101 + $0x51] sm:$0xff]
      %v1120 = vld [vmem:[%s1101 + $0x61] sm:$0xff]
      %v1121 = vld [vmem:[%s1101 + $0x71] sm:$0xff]
      %v1122 = vpack.c.bf16 %v1115, %v1114
      %v1123 = vpack.c.bf16 %v1117, %v1116
      %v1124 = vpack.c.bf16 %v1119, %v1118
      %v1125 = vpack.c.bf16 %v1121, %v1120
      %s1126 = scalar_lea.vmem %s1, 512
      %v1127 = vld [vmem:[%s1126] sm:$0xf]
      %v1128 = vld [vmem:[%s1126 + $0x4] sm:$0xf]
      %v1129 = vld [vmem:[%s1126 + $0x8] sm:$0xf]
      %v1130 = vld [vmem:[%s1126 + $0xc] sm:$0xf]
      %v1131 = vld [vmem:[%s1126 + $0x10] sm:$0xf]
      %v1132 = vld [vmem:[%s1126 + $0x14] sm:$0xf]
      %v1133 = vld [vmem:[%s1126 + $0x18] sm:$0xf]
      %v1134 = vld [vmem:[%s1126 + $0x1c] sm:$0xf]
      %v1135 = vld [vmem:[%s1126 + $0x20] sm:$0xf]
      %v1136 = vld [vmem:[%s1126 + $0x24] sm:$0xf]
      %v1137 = vld [vmem:[%s1126 + $0x28] sm:$0xf]
      %v1138 = vld [vmem:[%s1126 + $0x2c] sm:$0xf]
      %v1139 = vld [vmem:[%s1126 + $0x30] sm:$0xf]
      %v1140 = vld [vmem:[%s1126 + $0x34] sm:$0xf]
      %v1141 = vld [vmem:[%s1126 + $0x38] sm:$0xf]
      %v1142 = vld [vmem:[%s1126 + $0x3c] sm:$0xf]
      %v1143 = vld [vmem:[%s1126 + $0x40] sm:$0xf]
      %v1144 = vld [vmem:[%s1126 + $0x44] sm:$0xf]
      %v1145 = vld [vmem:[%s1126 + $0x48] sm:$0xf]
      %v1146 = vld [vmem:[%s1126 + $0x4c] sm:$0xf]
      %v1147 = vld [vmem:[%s1126 + $0x50] sm:$0xf]
      %v1148 = vld [vmem:[%s1126 + $0x54] sm:$0xf]
      %v1149 = vld [vmem:[%s1126 + $0x58] sm:$0xf]
      %v1150 = vld [vmem:[%s1126 + $0x5c] sm:$0xf]
      %v1151 = vld [vmem:[%s1126 + $0x60] sm:$0xf]
      %v1152 = vld [vmem:[%s1126 + $0x64] sm:$0xf]
      %v1153 = vld [vmem:[%s1126 + $0x68] sm:$0xf]
      %v1154 = vld [vmem:[%s1126 + $0x6c] sm:$0xf]
      %v1155 = vld [vmem:[%s1126 + $0x70] sm:$0xf]
      %v1156 = vld [vmem:[%s1126 + $0x74] sm:$0xf]
      %v1157 = vld [vmem:[%s1126 + $0x78] sm:$0xf]
      %v1158 = vld [vmem:[%s1126 + $0x7c] sm:$0xf]
      %v1159 = vld [vmem:[%s1126 + $0x80] sm:$0xf]
      %v1160 = vld [vmem:[%s1126 + $0x84] sm:$0xf]
      %v1161 = vld [vmem:[%s1126 + $0x88] sm:$0xf]
      %v1162 = vld [vmem:[%s1126 + $0x8c] sm:$0xf]
      %v1163 = vld [vmem:[%s1126 + $0x90] sm:$0xf]
      %v1164 = vld [vmem:[%s1126 + $0x94] sm:$0xf]
      %v1165 = vld [vmem:[%s1126 + $0x98] sm:$0xf]
      %v1166 = vld [vmem:[%s1126 + $0x9c] sm:$0xf]
      %v1167 = vld [vmem:[%s1126 + $0xa0] sm:$0xf]
      %v1168 = vld [vmem:[%s1126 + $0xa4] sm:$0xf]
      %v1169 = vld [vmem:[%s1126 + $0xa8] sm:$0xf]
      %v1170 = vld [vmem:[%s1126 + $0xac] sm:$0xf]
      %v1171 = vld [vmem:[%s1126 + $0xb0] sm:$0xf]
      %v1172 = vld [vmem:[%s1126 + $0xb4] sm:$0xf]
      %v1173 = vld [vmem:[%s1126 + $0xb8] sm:$0xf]
      %v1174 = vld [vmem:[%s1126 + $0xbc] sm:$0xf]
      %v1175 = vld [vmem:[%s1126 + $0xc0] sm:$0xf]
      %v1176 = vld [vmem:[%s1126 + $0xc4] sm:$0xf]
      %v1177 = vld [vmem:[%s1126 + $0xc8] sm:$0xf]
      %v1178 = vld [vmem:[%s1126 + $0xcc] sm:$0xf]
      %v1179 = vld [vmem:[%s1126 + $0xd0] sm:$0xf]
      %v1180 = vld [vmem:[%s1126 + $0xd4] sm:$0xf]
      %v1181 = vld [vmem:[%s1126 + $0xd8] sm:$0xf]
      %v1182 = vld [vmem:[%s1126 + $0xdc] sm:$0xf]
      %v1183 = vld [vmem:[%s1126 + $0xe0] sm:$0xf]
      %v1184 = vld [vmem:[%s1126 + $0xe4] sm:$0xf]
      %v1185 = vld [vmem:[%s1126 + $0xe8] sm:$0xf]
      %v1186 = vld [vmem:[%s1126 + $0xec] sm:$0xf]
      %v1187 = vld [vmem:[%s1126 + $0xf0] sm:$0xf]
      %v1188 = vld [vmem:[%s1126 + $0xf4] sm:$0xf]
      %v1189 = vld [vmem:[%s1126 + $0xf8] sm:$0xf]
      %v1190 = vld [vmem:[%s1126 + $0xfc] sm:$0xf]
      %v1255 = vunpack.c.l.b16 %v1127
      %v1256 = vunpack.c.l.b16 %v1128
      %v1257 = vunpack.c.l.b16 %v1129
      %v1258 = vunpack.c.l.b16 %v1130
      %v1259 = vunpack.c.l.b16 %v1131
      %v1260 = vunpack.c.l.b16 %v1132
      %v1261 = vunpack.c.l.b16 %v1133
      %v1262 = vunpack.c.l.b16 %v1134
      %v1263 = vunpack.c.l.b16 %v1135
      %v1264 = vunpack.c.l.b16 %v1136
      %v1265 = vunpack.c.l.b16 %v1137
      %v1266 = vunpack.c.l.b16 %v1138
      %v1267 = vunpack.c.l.b16 %v1139
      %v1268 = vunpack.c.l.b16 %v1140
      %v1269 = vunpack.c.l.b16 %v1141
      %v1270 = vunpack.c.l.b16 %v1142
      %v1271 = vunpack.c.l.b16 %v1143
      %v1272 = vunpack.c.l.b16 %v1144
      %v1273 = vunpack.c.l.b16 %v1145
      %v1274 = vunpack.c.l.b16 %v1146
      %v1275 = vunpack.c.l.b16 %v1147
      %v1276 = vunpack.c.l.b16 %v1148
      %v1277 = vunpack.c.l.b16 %v1149
      %v1278 = vunpack.c.l.b16 %v1150
      %v1279 = vunpack.c.l.b16 %v1151
      %v1280 = vunpack.c.l.b16 %v1152
      %v1281 = vunpack.c.l.b16 %v1153
      %v1282 = vunpack.c.l.b16 %v1154
      %v1283 = vunpack.c.l.b16 %v1155
      %v1284 = vunpack.c.l.b16 %v1156
      %v1285 = vunpack.c.l.b16 %v1157
      %v1286 = vunpack.c.l.b16 %v1158
      %v1287 = vunpack.c.l.b16 %v1159
      %v1288 = vunpack.c.l.b16 %v1160
      %v1289 = vunpack.c.l.b16 %v1161
      %v1290 = vunpack.c.l.b16 %v1162
      %v1291 = vunpack.c.l.b16 %v1163
      %v1292 = vunpack.c.l.b16 %v1164
      %v1293 = vunpack.c.l.b16 %v1165
      %v1294 = vunpack.c.l.b16 %v1166
      %v1295 = vunpack.c.l.b16 %v1167
      %v1296 = vunpack.c.l.b16 %v1168
      %v1297 = vunpack.c.l.b16 %v1169
      %v1298 = vunpack.c.l.b16 %v1170
      %v1299 = vunpack.c.l.b16 %v1171
      %v1300 = vunpack.c.l.b16 %v1172
      %v1301 = vunpack.c.l.b16 %v1173
      %v1302 = vunpack.c.l.b16 %v1174
      %v1303 = vunpack.c.l.b16 %v1175
      %v1304 = vunpack.c.l.b16 %v1176
      %v1305 = vunpack.c.l.b16 %v1177
      %v1306 = vunpack.c.l.b16 %v1178
      %v1307 = vunpack.c.l.b16 %v1179
      %v1308 = vunpack.c.l.b16 %v1180
      %v1309 = vunpack.c.l.b16 %v1181
      %v1310 = vunpack.c.l.b16 %v1182
      %v1311 = vunpack.c.l.b16 %v1183
      %v1312 = vunpack.c.l.b16 %v1184
      %v1313 = vunpack.c.l.b16 %v1185
      %v1314 = vunpack.c.l.b16 %v1186
      %v1315 = vunpack.c.l.b16 %v1187
      %v1316 = vunpack.c.l.b16 %v1188
      %v1317 = vunpack.c.l.b16 %v1189
      %v1318 = vunpack.c.l.b16 %v1190
      %v1319 = vpack.c.b16 %v1256, %v1255
      %v1320 = vpack.c.b16 %v1258, %v1257
      %v1321 = vpack.c.b16 %v1260, %v1259
      %v1322 = vpack.c.b16 %v1262, %v1261
      %v1323 = vpack.c.b16 %v1264, %v1263
      %v1324 = vpack.c.b16 %v1266, %v1265
      %v1325 = vpack.c.b16 %v1268, %v1267
      %v1326 = vpack.c.b16 %v1270, %v1269
      %v1327 = vpack.c.b16 %v1272, %v1271
      %v1328 = vpack.c.b16 %v1274, %v1273
      %v1329 = vpack.c.b16 %v1276, %v1275
      %v1330 = vpack.c.b16 %v1278, %v1277
      %v1331 = vpack.c.b16 %v1280, %v1279
      %v1332 = vpack.c.b16 %v1282, %v1281
      %v1333 = vpack.c.b16 %v1284, %v1283
      %v1334 = vpack.c.b16 %v1286, %v1285
      %v1335 = vpack.c.b16 %v1288, %v1287
      %v1336 = vpack.c.b16 %v1290, %v1289
      %v1337 = vpack.c.b16 %v1292, %v1291
      %v1338 = vpack.c.b16 %v1294, %v1293
      %v1339 = vpack.c.b16 %v1296, %v1295
      %v1340 = vpack.c.b16 %v1298, %v1297
      %v1341 = vpack.c.b16 %v1300, %v1299
      %v1342 = vpack.c.b16 %v1302, %v1301
      %v1343 = vpack.c.b16 %v1304, %v1303
      %v1344 = vpack.c.b16 %v1306, %v1305
      %v1345 = vpack.c.b16 %v1308, %v1307
      %v1346 = vpack.c.b16 %v1310, %v1309
      %v1347 = vpack.c.b16 %v1312, %v1311
      %v1348 = vpack.c.b16 %v1314, %v1313
      %v1349 = vpack.c.b16 %v1316, %v1315
      %v1350 = vpack.c.b16 %v1318, %v1317
      %1383 = vmatprep.subr.bf16.mxu0 0
      %1384 = vmatpush1.bf16.msra.mxu0 %v1319
      %1385 = vmatprep.subr.bf16.mxu0 0
      %1386 = vmatpush1.bf16.msra.mxu0 %v1320
      %1387 = vmatprep.subr.bf16.mxu0 0
      %1388 = vmatpush1.bf16.msra.mxu0 %v1321
      %1389 = vmatprep.subr.bf16.mxu0 0
      %1390 = vmatpush1.bf16.msra.mxu0 %v1322
      %1391 = vmatprep.subr.bf16.mxu0 0
      %1392 = vmatpush1.bf16.msra.mxu0 %v1323
      %1393 = vmatprep.subr.bf16.mxu0 0
      %1394 = vmatpush1.bf16.msra.mxu0 %v1324
      %1395 = vmatprep.subr.bf16.mxu0 0
      %1396 = vmatpush1.bf16.msra.mxu0 %v1325
      %1397 = vmatprep.subr.bf16.mxu0 0
      %1398 = vmatpush1.bf16.msra.mxu0 %v1326
      %1399 = vmatprep.subr.bf16.mxu0 0
      %1400 = vmatpush1.bf16.msra.mxu0 %v1327
      %1401 = vmatprep.subr.bf16.mxu0 0
      %1402 = vmatpush1.bf16.msra.mxu0 %v1328
      %1403 = vmatprep.subr.bf16.mxu0 0
      %1404 = vmatpush1.bf16.msra.mxu0 %v1329
      %1405 = vmatprep.subr.bf16.mxu0 0
      %1406 = vmatpush1.bf16.msra.mxu0 %v1330
      %1407 = vmatprep.subr.bf16.mxu0 0
      %1408 = vmatpush1.bf16.msra.mxu0 %v1331
      %1409 = vmatprep.subr.bf16.mxu0 0
      %1410 = vmatpush1.bf16.msra.mxu0 %v1332
      %1411 = vmatprep.subr.bf16.mxu0 0
      %1412 = vmatpush1.bf16.msra.mxu0 %v1333
      %1413 = vmatprep.subr.bf16.mxu0 0
      %1414 = vmatpush1.bf16.msra.mxu0 %v1334
      %1415 = vmatprep.mubr.bf16.mxu0 %v1097
      %1416 = vmatmul.mubr.bf16.gmra.mrb[0].mxu0 %v1085
      %v1417 = vpop.f32.mrb[0].mxu0
      %v1418 = vadd.f32 0.0, %v1417
      %v1419 = vpop.f32.mrb[0].mxu0
      %v1420 = vpop.f32.mrb[0].mxu0
      %v1421 = vadd.f32 0.0, %v1420
      %v1422 = vpop.f32.mrb[0].mxu0
      %1423 = vmatprep.mubr.bf16.mxu0 %v1098
      %1424 = vmatmul.mubr.bf16.gmra.mrb[0].mxu0 %v1086
      %v1425 = vpop.f32.mrb[0].mxu0
      %v1426 = vadd.f32 0.0, %v1425
      %v1427 = vpop.f32.mrb[0].mxu0
      %v1428 = vpop.f32.mrb[0].mxu0
      %v1429 = vadd.f32 0.0, %v1428
      %v1430 = vpop.f32.mrb[0].mxu0
      %1431 = vmatprep.mubr.bf16.mxu0 %v1099
      %1432 = vmatmul.mubr.bf16.gmra.mrb[0].mxu0 %v1087
      %v1433 = vpop.f32.mrb[0].mxu0
      %v1434 = vadd.f32 0.0, %v1433
      %v1435 = vpop.f32.mrb[0].mxu0
      %v1436 = vpop.f32.mrb[0].mxu0
      %v1437 = vadd.f32 0.0, %v1436
      %v1438 = vpop.f32.mrb[0].mxu0
      %1439 = vmatprep.mubr.bf16.mxu0 %v1100
      %1440 = vmatmul.mubr.bf16.gmra.mrb[0].mxu0 %v1088
      %v1441 = vpop.f32.mrb[0].mxu0
      %v1442 = vadd.f32 0.0, %v1441
      %v1443 = vpop.f32.mrb[0].mxu0
      %v1444 = vpop.f32.mrb[0].mxu0
      %v1445 = vadd.f32 0.0, %v1444
      %v1446 = vpop.f32.mrb[0].mxu0
      %1447 = vdwg.mxu0
      %1448 = vmatprep.subr.bf16.mxu0 0
      %1449 = vmatpush1.bf16.msra.mxu0 %v1335
      %1450 = vmatprep.subr.bf16.mxu0 0
      %1451 = vmatpush1.bf16.msra.mxu0 %v1336
      %1452 = vmatprep.subr.bf16.mxu0 0
      %1453 = vmatpush1.bf16.msra.mxu0 %v1337
      %1454 = vmatprep.subr.bf16.mxu0 0
      %1455 = vmatpush1.bf16.msra.mxu0 %v1338
      %1456 = vmatprep.subr.bf16.mxu0 0
      %1457 = vmatpush1.bf16.msra.mxu0 %v1339
      %1458 = vmatprep.subr.bf16.mxu0 0
      %1459 = vmatpush1.bf16.msra.mxu0 %v1340
      %1460 = vmatprep.subr.bf16.mxu0 0
      %1461 = vmatpush1.bf16.msra.mxu0 %v1341
      %1462 = vmatprep.subr.bf16.mxu0 0
      %1463 = vmatpush1.bf16.msra.mxu0 %v1342
      %1464 = vmatprep.subr.bf16.mxu0 0
      %1465 = vmatpush1.bf16.msra.mxu0 %v1343
      %1466 = vmatprep.subr.bf16.mxu0 0
      %1467 = vmatpush1.bf16.msra.mxu0 %v1344
      %1468 = vmatprep.subr.bf16.mxu0 0
      %1469 = vmatpush1.bf16.msra.mxu0 %v1345
      %1470 = vmatprep.subr.bf16.mxu0 0
      %1471 = vmatpush1.bf16.msra.mxu0 %v1346
      %1472 = vmatprep.subr.bf16.mxu0 0
      %1473 = vmatpush1.bf16.msra.mxu0 %v1347
      %1474 = vmatprep.subr.bf16.mxu0 0
      %1475 = vmatpush1.bf16.msra.mxu0 %v1348
      %1476 = vmatprep.subr.bf16.mxu0 0
      %1477 = vmatpush1.bf16.msra.mxu0 %v1349
      %1478 = vmatprep.subr.bf16.mxu0 0
      %1479 = vmatpush1.bf16.msra.mxu0 %v1350
      %1480 = vmatprep.mubr.bf16.mxu0 %v1122
      %1481 = vmatmul.mubr.bf16.gmra.mrb[0].mxu0 %v1110
      %v1482 = vpop.f32.mrb[0].mxu0
      %v1483 = vadd.f32 %v1418, %v1482
      %v1484 = vpop.f32.mrb[0].mxu0
      %v1485 = vpop.f32.mrb[0].mxu0
      %v1486 = vadd.f32 %v1421, %v1485
      %v1487 = vpop.f32.mrb[0].mxu0
      %1488 = vmatprep.mubr.bf16.mxu0 %v1123
      %1489 = vmatmul.mubr.bf16.gmra.mrb[0].mxu0 %v1111
      %v1490 = vpop.f32.mrb[0].mxu0
      %v1491 = vadd.f32 %v1426, %v1490
      %v1492 = vpop.f32.mrb[0].mxu0
      %v1493 = vpop.f32.mrb[0].mxu0
      %v1494 = vadd.f32 %v1429, %v1493
      %v1495 = vpop.f32.mrb[0].mxu0
      %1496 = vmatprep.mubr.bf16.mxu0 %v1124
      %1497 = vmatmul.mubr.bf16.gmra.mrb[0].mxu0 %v1112
      %v1498 = vpop.f32.mrb[0].mxu0
      %v1499 = vadd.f32 %v1434, %v1498
      %v1500 = vpop.f32.mrb[0].mxu0
      %v1501 = vpop.f32.mrb[0].mxu0
      %v1502 = vadd.f32 %v1437, %v1501
      %v1503 = vpop.f32.mrb[0].mxu0
      %1504 = vmatprep.mubr.bf16.mxu0 %v1125
      %1505 = vmatmul.mubr.bf16.gmra.mrb[0].mxu0 %v1113
      %v1506 = vpop.f32.mrb[0].mxu0
      %v1507 = vadd.f32 %v1442, %v1506
      %v1508 = vpop.f32.mrb[0].mxu0
      %v1509 = vpop.f32.mrb[0].mxu0
      %v1510 = vadd.f32 %v1445, %v1509
      %v1511 = vpop.f32.mrb[0].mxu0
      %1512 = vdwg.mxu0
      %s1513 = sadd.s32 %s619, 2
      %s1514 = smul.u32 %s1513, 64
      %s1515 = scalar_lea.vmem %s4, %s1514
      %1516 = vst.msk [vmem:[%s1515] sm:$0xff] %vm622, %v1483
      %1517 = vst.msk [vmem:[%s1515 + $0x8] sm:$0xff] %vm622, %v1486
      %1518 = vst.msk [vmem:[%s1515 + $0x10] sm:$0xff] %vm622, %v1491
      %1519 = vst.msk [vmem:[%s1515 + $0x18] sm:$0xff] %vm622, %v1494
      %1520 = vst.msk [vmem:[%s1515 + $0x20] sm:$0xff] %vm622, %v1499
      %1521 = vst.msk [vmem:[%s1515 + $0x28] sm:$0xff] %vm622, %v1502
      %1522 = vst.msk [vmem:[%s1515 + $0x30] sm:$0xff] %vm622, %v1507
      %1523 = vst.msk [vmem:[%s1515 + $0x38] sm:$0xff] %vm622, %v1510
      %v1524 = vld [vmem:[%s208 + $0x1] sm:$0xff]
      %v1525 = vld [vmem:[%s208 + $0x11] sm:$0xff]
      %v1526 = vld [vmem:[%s208 + $0x21] sm:$0xff]
      %v1527 = vld [vmem:[%s208 + $0x31] sm:$0xff]
      %v1528 = vld [vmem:[%s208 + $0x41] sm:$0xff]
      %v1529 = vld [vmem:[%s208 + $0x51] sm:$0xff]
      %v1530 = vld [vmem:[%s208 + $0x61] sm:$0xff]
      %v1531 = vld [vmem:[%s208 + $0x71] sm:$0xff]
      %v1532 = vpack.c.bf16 %v1525, %v1524
      %v1533 = vpack.c.bf16 %v1527, %v1526
      %v1534 = vpack.c.bf16 %v1529, %v1528
      %v1535 = vpack.c.bf16 %v1531, %v1530
      %v1536 = vld [vmem:[%s208 + $0x2] sm:$0xff]
      %v1537 = vld [vmem:[%s208 + $0x12] sm:$0xff]
      %v1538 = vld [vmem:[%s208 + $0x22] sm:$0xff]
      %v1539 = vld [vmem:[%s208 + $0x32] sm:$0xff]
      %v1540 = vld [vmem:[%s208 + $0x42] sm:$0xff]
      %v1541 = vld [vmem:[%s208 + $0x52] sm:$0xff]
      %v1542 = vld [vmem:[%s208 + $0x62] sm:$0xff]
      %v1543 = vld [vmem:[%s208 + $0x72] sm:$0xff]
      %v1544 = vpack.c.bf16 %v1537, %v1536
      %v1545 = vpack.c.bf16 %v1539, %v1538
      %v1546 = vpack.c.bf16 %v1541, %v1540
      %v1547 = vpack.c.bf16 %v1543, %v1542
      %v1548 = vld [vmem:[%s1101 + $0x1] sm:$0xff]
      %v1549 = vld [vmem:[%s1101 + $0x11] sm:$0xff]
      %v1550 = vld [vmem:[%s1101 + $0x21] sm:$0xff]
      %v1551 = vld [vmem:[%s1101 + $0x31] sm:$0xff]
      %v1552 = vld [vmem:[%s1101 + $0x41] sm:$0xff]
      %v1553 = vld [vmem:[%s1101 + $0x51] sm:$0xff]
      %v1554 = vld [vmem:[%s1101 + $0x61] sm:$0xff]
      %v1555 = vld [vmem:[%s1101 + $0x71] sm:$0xff]
      %v1556 = vpack.c.bf16 %v1549, %v1548
      %v1557 = vpack.c.bf16 %v1551, %v1550
      %v1558 = vpack.c.bf16 %v1553, %v1552
      %v1559 = vpack.c.bf16 %v1555, %v1554
      %v1560 = vld [vmem:[%s1101 + $0x2] sm:$0xff]
      %v1561 = vld [vmem:[%s1101 + $0x12] sm:$0xff]
      %v1562 = vld [vmem:[%s1101 + $0x22] sm:$0xff]
      %v1563 = vld [vmem:[%s1101 + $0x32] sm:$0xff]
      %v1564 = vld [vmem:[%s1101 + $0x42] sm:$0xff]
      %v1565 = vld [vmem:[%s1101 + $0x52] sm:$0xff]
      %v1566 = vld [vmem:[%s1101 + $0x62] sm:$0xff]
      %v1567 = vld [vmem:[%s1101 + $0x72] sm:$0xff]
      %v1568 = vpack.c.bf16 %v1561, %v1560
      %v1569 = vpack.c.bf16 %v1563, %v1562
      %v1570 = vpack.c.bf16 %v1565, %v1564
      %v1571 = vpack.c.bf16 %v1567, %v1566
      %s1572 = scalar_lea.vmem %s1, 768
      %v1573 = vld [vmem:[%s1572] sm:$0xf]
      %v1574 = vld [vmem:[%s1572 + $0x4] sm:$0xf]
      %v1575 = vld [vmem:[%s1572 + $0x8] sm:$0xf]
      %v1576 = vld [vmem:[%s1572 + $0xc] sm:$0xf]
      %v1577 = vld [vmem:[%s1572 + $0x10] sm:$0xf]
      %v1578 = vld [vmem:[%s1572 + $0x14] sm:$0xf]
      %v1579 = vld [vmem:[%s1572 + $0x18] sm:$0xf]
      %v1580 = vld [vmem:[%s1572 + $0x1c] sm:$0xf]
      %v1581 = vld [vmem:[%s1572 + $0x20] sm:$0xf]
      %v1582 = vld [vmem:[%s1572 + $0x24] sm:$0xf]
      %v1583 = vld [vmem:[%s1572 + $0x28] sm:$0xf]
      %v1584 = vld [vmem:[%s1572 + $0x2c] sm:$0xf]
      %v1585 = vld [vmem:[%s1572 + $0x30] sm:$0xf]
      %v1586 = vld [vmem:[%s1572 + $0x34] sm:$0xf]
      %v1587 = vld [vmem:[%s1572 + $0x38] sm:$0xf]
      %v1588 = vld [vmem:[%s1572 + $0x3c] sm:$0xf]
      %v1589 = vld [vmem:[%s1572 + $0x40] sm:$0xf]
      %v1590 = vld [vmem:[%s1572 + $0x44] sm:$0xf]
      %v1591 = vld [vmem:[%s1572 + $0x48] sm:$0xf]
      %v1592 = vld [vmem:[%s1572 + $0x4c] sm:$0xf]
      %v1593 = vld [vmem:[%s1572 + $0x50] sm:$0xf]
      %v1594 = vld [vmem:[%s1572 + $0x54] sm:$0xf]
      %v1595 = vld [vmem:[%s1572 + $0x58] sm:$0xf]
      %v1596 = vld [vmem:[%s1572 + $0x5c] sm:$0xf]
      %v1597 = vld [vmem:[%s1572 + $0x60] sm:$0xf]
      %v1598 = vld [vmem:[%s1572 + $0x64] sm:$0xf]
      %v1599 = vld [vmem:[%s1572 + $0x68] sm:$0xf]
      %v1600 = vld [vmem:[%s1572 + $0x6c] sm:$0xf]
      %v1601 = vld [vmem:[%s1572 + $0x70] sm:$0xf]
      %v1602 = vld [vmem:[%s1572 + $0x74] sm:$0xf]
      %v1603 = vld [vmem:[%s1572 + $0x78] sm:$0xf]
      %v1604 = vld [vmem:[%s1572 + $0x7c] sm:$0xf]
      %v1605 = vld [vmem:[%s1572 + $0x80] sm:$0xf]
      %v1606 = vld [vmem:[%s1572 + $0x84] sm:$0xf]
      %v1607 = vld [vmem:[%s1572 + $0x88] sm:$0xf]
      %v1608 = vld [vmem:[%s1572 + $0x8c] sm:$0xf]
      %v1609 = vld [vmem:[%s1572 + $0x90] sm:$0xf]
      %v1610 = vld [vmem:[%s1572 + $0x94] sm:$0xf]
      %v1611 = vld [vmem:[%s1572 + $0x98] sm:$0xf]
      %v1612 = vld [vmem:[%s1572 + $0x9c] sm:$0xf]
      %v1613 = vld [vmem:[%s1572 + $0xa0] sm:$0xf]
      %v1614 = vld [vmem:[%s1572 + $0xa4] sm:$0xf]
      %v1615 = vld [vmem:[%s1572 + $0xa8] sm:$0xf]
      %v1616 = vld [vmem:[%s1572 + $0xac] sm:$0xf]
      %v1617 = vld [vmem:[%s1572 + $0xb0] sm:$0xf]
      %v1618 = vld [vmem:[%s1572 + $0xb4] sm:$0xf]
      %v1619 = vld [vmem:[%s1572 + $0xb8] sm:$0xf]
      %v1620 = vld [vmem:[%s1572 + $0xbc] sm:$0xf]
      %v1621 = vld [vmem:[%s1572 + $0xc0] sm:$0xf]
      %v1622 = vld [vmem:[%s1572 + $0xc4] sm:$0xf]
      %v1623 = vld [vmem:[%s1572 + $0xc8] sm:$0xf]
      %v1624 = vld [vmem:[%s1572 + $0xcc] sm:$0xf]
      %v1625 = vld [vmem:[%s1572 + $0xd0] sm:$0xf]
      %v1626 = vld [vmem:[%s1572 + $0xd4] sm:$0xf]
      %v1627 = vld [vmem:[%s1572 + $0xd8] sm:$0xf]
      %v1628 = vld [vmem:[%s1572 + $0xdc] sm:$0xf]
      %v1629 = vld [vmem:[%s1572 + $0xe0] sm:$0xf]
      %v1630 = vld [vmem:[%s1572 + $0xe4] sm:$0xf]
      %v1631 = vld [vmem:[%s1572 + $0xe8] sm:$0xf]
      %v1632 = vld [vmem:[%s1572 + $0xec] sm:$0xf]
      %v1633 = vld [vmem:[%s1572 + $0xf0] sm:$0xf]
      %v1634 = vld [vmem:[%s1572 + $0xf4] sm:$0xf]
      %v1635 = vld [vmem:[%s1572 + $0xf8] sm:$0xf]
      %v1636 = vld [vmem:[%s1572 + $0xfc] sm:$0xf]
      %v1701 = vunpack.c.l.b16 %v1573
      %v1702 = vunpack.c.l.b16 %v1574
      %v1703 = vunpack.c.l.b16 %v1575
      %v1704 = vunpack.c.l.b16 %v1576
      %v1705 = vunpack.c.l.b16 %v1577
      %v1706 = vunpack.c.l.b16 %v1578
      %v1707 = vunpack.c.l.b16 %v1579
      %v1708 = vunpack.c.l.b16 %v1580
      %v1709 = vunpack.c.l.b16 %v1581
      %v1710 = vunpack.c.l.b16 %v1582
      %v1711 = vunpack.c.l.b16 %v1583
      %v1712 = vunpack.c.l.b16 %v1584
      %v1713 = vunpack.c.l.b16 %v1585
      %v1714 = vunpack.c.l.b16 %v1586
      %v1715 = vunpack.c.l.b16 %v1587
      %v1716 = vunpack.c.l.b16 %v1588
      %v1717 = vunpack.c.l.b16 %v1589
      %v1718 = vunpack.c.l.b16 %v1590
      %v1719 = vunpack.c.l.b16 %v1591
      %v1720 = vunpack.c.l.b16 %v1592
      %v1721 = vunpack.c.l.b16 %v1593
      %v1722 = vunpack.c.l.b16 %v1594
      %v1723 = vunpack.c.l.b16 %v1595
      %v1724 = vunpack.c.l.b16 %v1596
      %v1725 = vunpack.c.l.b16 %v1597
      %v1726 = vunpack.c.l.b16 %v1598
      %v1727 = vunpack.c.l.b16 %v1599
      %v1728 = vunpack.c.l.b16 %v1600
      %v1729 = vunpack.c.l.b16 %v1601
      %v1730 = vunpack.c.l.b16 %v1602
      %v1731 = vunpack.c.l.b16 %v1603
      %v1732 = vunpack.c.l.b16 %v1604
      %v1733 = vunpack.c.l.b16 %v1605
      %v1734 = vunpack.c.l.b16 %v1606
      %v1735 = vunpack.c.l.b16 %v1607
      %v1736 = vunpack.c.l.b16 %v1608
      %v1737 = vunpack.c.l.b16 %v1609
      %v1738 = vunpack.c.l.b16 %v1610
      %v1739 = vunpack.c.l.b16 %v1611
      %v1740 = vunpack.c.l.b16 %v1612
      %v1741 = vunpack.c.l.b16 %v1613
      %v1742 = vunpack.c.l.b16 %v1614
      %v1743 = vunpack.c.l.b16 %v1615
      %v1744 = vunpack.c.l.b16 %v1616
      %v1745 = vunpack.c.l.b16 %v1617
      %v1746 = vunpack.c.l.b16 %v1618
      %v1747 = vunpack.c.l.b16 %v1619
      %v1748 = vunpack.c.l.b16 %v1620
      %v1749 = vunpack.c.l.b16 %v1621
      %v1750 = vunpack.c.l.b16 %v1622
      %v1751 = vunpack.c.l.b16 %v1623
      %v1752 = vunpack.c.l.b16 %v1624
      %v1753 = vunpack.c.l.b16 %v1625
      %v1754 = vunpack.c.l.b16 %v1626
      %v1755 = vunpack.c.l.b16 %v1627
      %v1756 = vunpack.c.l.b16 %v1628
      %v1757 = vunpack.c.l.b16 %v1629
      %v1758 = vunpack.c.l.b16 %v1630
      %v1759 = vunpack.c.l.b16 %v1631
      %v1760 = vunpack.c.l.b16 %v1632
      %v1761 = vunpack.c.l.b16 %v1633
      %v1762 = vunpack.c.l.b16 %v1634
      %v1763 = vunpack.c.l.b16 %v1635
      %v1764 = vunpack.c.l.b16 %v1636
      %v1765 = vpack.c.b16 %v1702, %v1701
      %v1766 = vpack.c.b16 %v1704, %v1703
      %v1767 = vpack.c.b16 %v1706, %v1705
      %v1768 = vpack.c.b16 %v1708, %v1707
      %v1769 = vpack.c.b16 %v1710, %v1709
      %v1770 = vpack.c.b16 %v1712, %v1711
      %v1771 = vpack.c.b16 %v1714, %v1713
      %v1772 = vpack.c.b16 %v1716, %v1715
      %v1773 = vpack.c.b16 %v1718, %v1717
      %v1774 = vpack.c.b16 %v1720, %v1719
      %v1775 = vpack.c.b16 %v1722, %v1721
      %v1776 = vpack.c.b16 %v1724, %v1723
      %v1777 = vpack.c.b16 %v1726, %v1725
      %v1778 = vpack.c.b16 %v1728, %v1727
      %v1779 = vpack.c.b16 %v1730, %v1729
      %v1780 = vpack.c.b16 %v1732, %v1731
      %v1781 = vpack.c.b16 %v1734, %v1733
      %v1782 = vpack.c.b16 %v1736, %v1735
      %v1783 = vpack.c.b16 %v1738, %v1737
      %v1784 = vpack.c.b16 %v1740, %v1739
      %v1785 = vpack.c.b16 %v1742, %v1741
      %v1786 = vpack.c.b16 %v1744, %v1743
      %v1787 = vpack.c.b16 %v1746, %v1745
      %v1788 = vpack.c.b16 %v1748, %v1747
      %v1789 = vpack.c.b16 %v1750, %v1749
      %v1790 = vpack.c.b16 %v1752, %v1751
      %v1791 = vpack.c.b16 %v1754, %v1753
      %v1792 = vpack.c.b16 %v1756, %v1755
      %v1793 = vpack.c.b16 %v1758, %v1757
      %v1794 = vpack.c.b16 %v1760, %v1759
      %v1795 = vpack.c.b16 %v1762, %v1761
      %v1796 = vpack.c.b16 %v1764, %v1763
      %1829 = vmatprep.subr.bf16.mxu0 0
      %1830 = vmatpush1.bf16.msra.mxu0 %v1765
      %1831 = vmatprep.subr.bf16.mxu0 0
      %1832 = vmatpush1.bf16.msra.mxu0 %v1766
      %1833 = vmatprep.subr.bf16.mxu0 0
      %1834 = vmatpush1.bf16.msra.mxu0 %v1767
      %1835 = vmatprep.subr.bf16.mxu0 0
      %1836 = vmatpush1.bf16.msra.mxu0 %v1768
      %1837 = vmatprep.subr.bf16.mxu0 0
      %1838 = vmatpush1.bf16.msra.mxu0 %v1769
      %1839 = vmatprep.subr.bf16.mxu0 0
      %1840 = vmatpush1.bf16.msra.mxu0 %v1770
      %1841 = vmatprep.subr.bf16.mxu0 0
      %1842 = vmatpush1.bf16.msra.mxu0 %v1771
      %1843 = vmatprep.subr.bf16.mxu0 0
      %1844 = vmatpush1.bf16.msra.mxu0 %v1772
      %1845 = vmatprep.subr.bf16.mxu0 0
      %1846 = vmatpush1.bf16.msra.mxu0 %v1773
      %1847 = vmatprep.subr.bf16.mxu0 0
      %1848 = vmatpush1.bf16.msra.mxu0 %v1774
      %1849 = vmatprep.subr.bf16.mxu0 0
      %1850 = vmatpush1.bf16.msra.mxu0 %v1775
      %1851 = vmatprep.subr.bf16.mxu0 0
      %1852 = vmatpush1.bf16.msra.mxu0 %v1776
      %1853 = vmatprep.subr.bf16.mxu0 0
      %1854 = vmatpush1.bf16.msra.mxu0 %v1777
      %1855 = vmatprep.subr.bf16.mxu0 0
      %1856 = vmatpush1.bf16.msra.mxu0 %v1778
      %1857 = vmatprep.subr.bf16.mxu0 0
      %1858 = vmatpush1.bf16.msra.mxu0 %v1779
      %1859 = vmatprep.subr.bf16.mxu0 0
      %1860 = vmatpush1.bf16.msra.mxu0 %v1780
      %1861 = vmatprep.mubr.bf16.mxu0 %v1544
      %1862 = vmatmul.mubr.bf16.gmra.mrb[0].mxu0 %v1532
      %v1863 = vpop.f32.mrb[0].mxu0
      %v1864 = vadd.f32 0.0, %v1863
      %v1865 = vpop.f32.mrb[0].mxu0
      %v1866 = vpop.f32.mrb[0].mxu0
      %v1867 = vadd.f32 0.0, %v1866
      %v1868 = vpop.f32.mrb[0].mxu0
      %1869 = vmatprep.mubr.bf16.mxu0 %v1545
      %1870 = vmatmul.mubr.bf16.gmra.mrb[0].mxu0 %v1533
      %v1871 = vpop.f32.mrb[0].mxu0
      %v1872 = vadd.f32 0.0, %v1871
      %v1873 = vpop.f32.mrb[0].mxu0
      %v1874 = vpop.f32.mrb[0].mxu0
      %v1875 = vadd.f32 0.0, %v1874
      %v1876 = vpop.f32.mrb[0].mxu0
      %1877 = vmatprep.mubr.bf16.mxu0 %v1546
      %1878 = vmatmul.mubr.bf16.gmra.mrb[0].mxu0 %v1534
      %v1879 = vpop.f32.mrb[0].mxu0
      %v1880 = vadd.f32 0.0, %v1879
      %v1881 = vpop.f32.mrb[0].mxu0
      %v1882 = vpop.f32.mrb[0].mxu0
      %v1883 = vadd.f32 0.0, %v1882
      %v1884 = vpop.f32.mrb[0].mxu0
      %1885 = vmatprep.mubr.bf16.mxu0 %v1547
      %1886 = vmatmul.mubr.bf16.gmra.mrb[0].mxu0 %v1535
      %v1887 = vpop.f32.mrb[0].mxu0
      %v1888 = vadd.f32 0.0, %v1887
      %v1889 = vpop.f32.mrb[0].mxu0
      %v1890 = vpop.f32.mrb[0].mxu0
      %v1891 = vadd.f32 0.0, %v1890
      %v1892 = vpop.f32.mrb[0].mxu0
      %1893 = vdwg.mxu0
      %1894 = vmatprep.subr.bf16.mxu0 0
      %1895 = vmatpush1.bf16.msra.mxu0 %v1781
      %1896 = vmatprep.subr.bf16.mxu0 0
      %1897 = vmatpush1.bf16.msra.mxu0 %v1782
      %1898 = vmatprep.subr.bf16.mxu0 0
      %1899 = vmatpush1.bf16.msra.mxu0 %v1783
      %1900 = vmatprep.subr.bf16.mxu0 0
      %1901 = vmatpush1.bf16.msra.mxu0 %v1784
      %1902 = vmatprep.subr.bf16.mxu0 0
      %1903 = vmatpush1.bf16.msra.mxu0 %v1785
      %1904 = vmatprep.subr.bf16.mxu0 0
      %1905 = vmatpush1.bf16.msra.mxu0 %v1786
      %1906 = vmatprep.subr.bf16.mxu0 0
      %1907 = vmatpush1.bf16.msra.mxu0 %v1787
      %1908 = vmatprep.subr.bf16.mxu0 0
      %1909 = vmatpush1.bf16.msra.mxu0 %v1788
      %1910 = vmatprep.subr.bf16.mxu0 0
      %1911 = vmatpush1.bf16.msra.mxu0 %v1789
      %1912 = vmatprep.subr.bf16.mxu0 0
      %1913 = vmatpush1.bf16.msra.mxu0 %v1790
      %1914 = vmatprep.subr.bf16.mxu0 0
      %1915 = vmatpush1.bf16.msra.mxu0 %v1791
      %1916 = vmatprep.subr.bf16.mxu0 0
      %1917 = vmatpush1.bf16.msra.mxu0 %v1792
      %1918 = vmatprep.subr.bf16.mxu0 0
      %1919 = vmatpush1.bf16.msra.mxu0 %v1793
      %1920 = vmatprep.subr.bf16.mxu0 0
      %1921 = vmatpush1.bf16.msra.mxu0 %v1794
      %1922 = vmatprep.subr.bf16.mxu0 0
      %1923 = vmatpush1.bf16.msra.mxu0 %v1795
      %1924 = vmatprep.subr.bf16.mxu0 0
      %1925 = vmatpush1.bf16.msra.mxu0 %v1796
      %1926 = vmatprep.mubr.bf16.mxu0 %v1568
      %1927 = vmatmul.mubr.bf16.gmra.mrb[0].mxu0 %v1556
      %v1928 = vpop.f32.mrb[0].mxu0
      %v1929 = vadd.f32 %v1864, %v1928
      %v1930 = vpop.f32.mrb[0].mxu0
      %v1931 = vpop.f32.mrb[0].mxu0
      %v1932 = vadd.f32 %v1867, %v1931
      %v1933 = vpop.f32.mrb[0].mxu0
      %1934 = vmatprep.mubr.bf16.mxu0 %v1569
      %1935 = vmatmul.mubr.bf16.gmra.mrb[0].mxu0 %v1557
      %v1936 = vpop.f32.mrb[0].mxu0
      %v1937 = vadd.f32 %v1872, %v1936
      %v1938 = vpop.f32.mrb[0].mxu0
      %v1939 = vpop.f32.mrb[0].mxu0
      %v1940 = vadd.f32 %v1875, %v1939
      %v1941 = vpop.f32.mrb[0].mxu0
      %1942 = vmatprep.mubr.bf16.mxu0 %v1570
      %1943 = vmatmul.mubr.bf16.gmra.mrb[0].mxu0 %v1558
      %v1944 = vpop.f32.mrb[0].mxu0
      %v1945 = vadd.f32 %v1880, %v1944
      %v1946 = vpop.f32.mrb[0].mxu0
      %v1947 = vpop.f32.mrb[0].mxu0
      %v1948 = vadd.f32 %v1883, %v1947
      %v1949 = vpop.f32.mrb[0].mxu0
      %1950 = vmatprep.mubr.bf16.mxu0 %v1571
      %1951 = vmatmul.mubr.bf16.gmra.mrb[0].mxu0 %v1559
      %v1952 = vpop.f32.mrb[0].mxu0
      %v1953 = vadd.f32 %v1888, %v1952
      %v1954 = vpop.f32.mrb[0].mxu0
      %v1955 = vpop.f32.mrb[0].mxu0
      %v1956 = vadd.f32 %v1891, %v1955
      %v1957 = vpop.f32.mrb[0].mxu0
      %1958 = vdwg.mxu0
      %s1959 = sadd.s32 %s619, 3
      %s1960 = smul.u32 %s1959, 64
      %s1961 = scalar_lea.vmem %s4, %s1960
      %1962 = vst.msk [vmem:[%s1961] sm:$0xff] %vm622, %v1929
      %1963 = vst.msk [vmem:[%s1961 + $0x8] sm:$0xff] %vm622, %v1932
      %1964 = vst.msk [vmem:[%s1961 + $0x10] sm:$0xff] %vm622, %v1937
      %1965 = vst.msk [vmem:[%s1961 + $0x18] sm:$0xff] %vm622, %v1940
      %1966 = vst.msk [vmem:[%s1961 + $0x20] sm:$0xff] %vm622, %v1945
      %1967 = vst.msk [vmem:[%s1961 + $0x28] sm:$0xff] %vm622, %v1948
      %1968 = vst.msk [vmem:[%s1961 + $0x30] sm:$0xff] %vm622, %v1953
      %1969 = vst.msk [vmem:[%s1961 + $0x38] sm:$0xff] %vm622, %v1956
      %p1970 = scmp.eq.s32.totalorder %s15, 1
      // Predicated region
      $region37: #{unet_skip_innermost.3} parent=35 // pred_check
        %p1971 = pneg %p1970
      $region38: #{unet_skip_innermost.3} parent=35 // pred_check_branch
        %1973 = sbr.rel (%p1971) target = $region40
      $region39: #{unet_skip_innermost.3} parent=35 // pred_region
        %v1974 = vld [vmem:[%s4] sm:$0xff]
        %v1975 = vld [vmem:[%s4 + $0x8] sm:$0xff]
        %v1976 = vld [vmem:[%s4 + $0x10] sm:$0xff]
        %v1977 = vld [vmem:[%s4 + $0x18] sm:$0xff]
        %v1978 = vld [vmem:[%s4 + $0x20] sm:$0xff]
        %v1979 = vld [vmem:[%s4 + $0x28] sm:$0xff]
        %v1980 = vld [vmem:[%s4 + $0x30] sm:$0xff]
        %v1981 = vld [vmem:[%s4 + $0x38] sm:$0xff]
        %v1982 = vld [vmem:[%s4 + $0x40] sm:$0xff]
        %v1983 = vld [vmem:[%s4 + $0x48] sm:$0xff]
        %v1984 = vld [vmem:[%s4 + $0x50] sm:$0xff]
        %v1985 = vld [vmem:[%s4 + $0x58] sm:$0xff]
        %v1986 = vld [vmem:[%s4 + $0x60] sm:$0xff]
        %v1987 = vld [vmem:[%s4 + $0x68] sm:$0xff]
        %v1988 = vld [vmem:[%s4 + $0x70] sm:$0xff]
        %v1989 = vld [vmem:[%s4 + $0x78] sm:$0xff]
        %v1990 = vld [vmem:[%s4 + $0x80] sm:$0xff]
        %v1991 = vld [vmem:[%s4 + $0x88] sm:$0xff]
        %v1992 = vld [vmem:[%s4 + $0x90] sm:$0xff]
        %v1993 = vld [vmem:[%s4 + $0x98] sm:$0xff]
        %v1994 = vld [vmem:[%s4 + $0xa0] sm:$0xff]
        %v1995 = vld [vmem:[%s4 + $0xa8] sm:$0xff]
        %v1996 = vld [vmem:[%s4 + $0xb0] sm:$0xff]
        %v1997 = vld [vmem:[%s4 + $0xb8] sm:$0xff]
        %v1998 = vld [vmem:[%s4 + $0xc0] sm:$0xff]
        %v1999 = vld [vmem:[%s4 + $0xc8] sm:$0xff]
        %v2000 = vld [vmem:[%s4 + $0xd0] sm:$0xff]
        %v2001 = vld [vmem:[%s4 + $0xd8] sm:$0xff]
        %v2002 = vld [vmem:[%s4 + $0xe0] sm:$0xff]
        %v2003 = vld [vmem:[%s4 + $0xe8] sm:$0xff]
        %v2004 = vld [vmem:[%s4 + $0xf0] sm:$0xff]
        %v2005 = vld [vmem:[%s4 + $0xf8] sm:$0xff]
        %v2006 = vld [vmem:[%s4 + $0x100] sm:$0xff]
        %v2007 = vld [vmem:[%s4 + $0x108] sm:$0xff]
        %v2008 = vld [vmem:[%s4 + $0x110] sm:$0xff]
        %v2009 = vld [vmem:[%s4 + $0x118] sm:$0xff]
        %v2010 = vld [vmem:[%s4 + $0x120] sm:$0xff]
        %v2011 = vld [vmem:[%s4 + $0x128] sm:$0xff]
        %v2012 = vld [vmem:[%s4 + $0x130] sm:$0xff]
        %v2013 = vld [vmem:[%s4 + $0x138] sm:$0xff]
        %v2014 = vld [vmem:[%s4 + $0x140] sm:$0xff]
        %v2015 = vld [vmem:[%s4 + $0x148] sm:$0xff]
        %v2016 = vld [vmem:[%s4 + $0x150] sm:$0xff]
        %v2017 = vld [vmem:[%s4 + $0x158] sm:$0xff]
        %v2018 = vld [vmem:[%s4 + $0x160] sm:$0xff]
        %v2019 = vld [vmem:[%s4 + $0x168] sm:$0xff]
        %v2020 = vld [vmem:[%s4 + $0x170] sm:$0xff]
        %v2021 = vld [vmem:[%s4 + $0x178] sm:$0xff]
        %v2022 = vld [vmem:[%s4 + $0x180] sm:$0xff]
        %v2023 = vld [vmem:[%s4 + $0x188] sm:$0xff]
        %v2024 = vld [vmem:[%s4 + $0x190] sm:$0xff]
        %v2025 = vld [vmem:[%s4 + $0x198] sm:$0xff]
        %v2026 = vld [vmem:[%s4 + $0x1a0] sm:$0xff]
        %v2027 = vld [vmem:[%s4 + $0x1a8] sm:$0xff]
        %v2028 = vld [vmem:[%s4 + $0x1b0] sm:$0xff]
        %v2029 = vld [vmem:[%s4 + $0x1b8] sm:$0xff]
        %v2030 = vld [vmem:[%s4 + $0x1c0] sm:$0xff]
        %v2031 = vld [vmem:[%s4 + $0x1c8] sm:$0xff]
        %v2032 = vld [vmem:[%s4 + $0x1d0] sm:$0xff]
        %v2033 = vld [vmem:[%s4 + $0x1d8] sm:$0xff]
        %v2034 = vld [vmem:[%s4 + $0x1e0] sm:$0xff]
        %v2035 = vld [vmem:[%s4 + $0x1e8] sm:$0xff]
        %v2036 = vld [vmem:[%s4 + $0x1f0] sm:$0xff]
        %v2037 = vld [vmem:[%s4 + $0x1f8] sm:$0xff]
        %v2038 = vsel %vm622, %v1974, 0.0
        %v2039 = vsel %vm622, %v1975, 0.0
        %v2040 = vadd.f32 %v2038, %v2039
        %v2041 = vsel %vm622, %v1976, 0.0
        %v2042 = vadd.f32 %v2040, %v2041
        %v2043 = vsel %vm622, %v1977, 0.0
        %v2044 = vadd.f32 %v2042, %v2043
        %v2045 = vsel %vm622, %v1978, 0.0
        %v2046 = vadd.f32 %v2044, %v2045
        %v2047 = vsel %vm622, %v1979, 0.0
        %v2048 = vadd.f32 %v2046, %v2047
        %v2049 = vsel %vm622, %v1980, 0.0
        %v2050 = vadd.f32 %v2048, %v2049
        %v2051 = vsel %vm622, %v1981, 0.0
        %v2052 = vadd.f32 %v2050, %v2051
        %v2053 = vsel %vm622, %v1982, 0.0
        %v2054 = vadd.f32 %v2052, %v2053
        %v2055 = vsel %vm622, %v1983, 0.0
        %v2056 = vadd.f32 %v2054, %v2055
        %v2057 = vsel %vm622, %v1984, 0.0
        %v2058 = vadd.f32 %v2056, %v2057
        %v2059 = vsel %vm622, %v1985, 0.0
        %v2060 = vadd.f32 %v2058, %v2059
        %v2061 = vsel %vm622, %v1986, 0.0
        %v2062 = vadd.f32 %v2060, %v2061
        %v2063 = vsel %vm622, %v1987, 0.0
        %v2064 = vadd.f32 %v2062, %v2063
        %v2065 = vsel %vm622, %v1988, 0.0
        %v2066 = vadd.f32 %v2064, %v2065
        %v2067 = vsel %vm622, %v1989, 0.0
        %v2068 = vadd.f32 %v2066, %v2067
        %v2069 = vsel %vm622, %v1990, 0.0
        %v2070 = vadd.f32 %v2068, %v2069
        %v2071 = vsel %vm622, %v1991, 0.0
        %v2072 = vadd.f32 %v2070, %v2071
        %v2073 = vsel %vm622, %v1992, 0.0
        %v2074 = vadd.f32 %v2072, %v2073
        %v2075 = vsel %vm622, %v1993, 0.0
        %v2076 = vadd.f32 %v2074, %v2075
        %v2077 = vsel %vm622, %v1994, 0.0
        %v2078 = vadd.f32 %v2076, %v2077
        %v2079 = vsel %vm622, %v1995, 0.0
        %v2080 = vadd.f32 %v2078, %v2079
        %v2081 = vsel %vm622, %v1996, 0.0
        %v2082 = vadd.f32 %v2080, %v2081
        %v2083 = vsel %vm622, %v1997, 0.0
        %v2084 = vadd.f32 %v2082, %v2083
        %v2085 = vsel %vm622, %v1998, 0.0
        %v2086 = vadd.f32 %v2084, %v2085
        %v2087 = vsel %vm622, %v1999, 0.0
        %v2088 = vadd.f32 %v2086, %v2087
        %v2089 = vsel %vm622, %v2000, 0.0
        %v2090 = vadd.f32 %v2088, %v2089
        %v2091 = vsel %vm622, %v2001, 0.0
        %v2092 = vadd.f32 %v2090, %v2091
        %v2093 = vsel %vm622, %v2002, 0.0
        %v2094 = vadd.f32 %v2092, %v2093
        %v2095 = vsel %vm622, %v2003, 0.0
        %v2096 = vadd.f32 %v2094, %v2095
        %v2097 = vsel %vm622, %v2004, 0.0
        %v2098 = vadd.f32 %v2096, %v2097
        %v2099 = vsel %vm622, %v2005, 0.0
        %v2100 = vadd.f32 %v2098, %v2099
        %v2101 = vsel %vm622, %v2006, 0.0
        %v2102 = vadd.f32 %v2100, %v2101
        %v2103 = vsel %vm622, %v2007, 0.0
        %v2104 = vadd.f32 %v2102, %v2103
        %v2105 = vsel %vm622, %v2008, 0.0
        %v2106 = vadd.f32 %v2104, %v2105
        %v2107 = vsel %vm622, %v2009, 0.0
        %v2108 = vadd.f32 %v2106, %v2107
        %v2109 = vsel %vm622, %v2010, 0.0
        %v2110 = vadd.f32 %v2108, %v2109
        %v2111 = vsel %vm622, %v2011, 0.0
        %v2112 = vadd.f32 %v2110, %v2111
        %v2113 = vsel %vm622, %v2012, 0.0
        %v2114 = vadd.f32 %v2112, %v2113
        %v2115 = vsel %vm622, %v2013, 0.0
        %v2116 = vadd.f32 %v2114, %v2115
        %v2117 = vsel %vm622, %v2014, 0.0
        %v2118 = vadd.f32 %v2116, %v2117
        %v2119 = vsel %vm622, %v2015, 0.0
        %v2120 = vadd.f32 %v2118, %v2119
        %v2121 = vsel %vm622, %v2016, 0.0
        %v2122 = vadd.f32 %v2120, %v2121
        %v2123 = vsel %vm622, %v2017, 0.0
        %v2124 = vadd.f32 %v2122, %v2123
        %v2125 = vsel %vm622, %v2018, 0.0
        %v2126 = vadd.f32 %v2124, %v2125
        %v2127 = vsel %vm622, %v2019, 0.0
        %v2128 = vadd.f32 %v2126, %v2127
        %v2129 = vsel %vm622, %v2020, 0.0
        %v2130 = vadd.f32 %v2128, %v2129
        %v2131 = vsel %vm622, %v2021, 0.0
        %v2132 = vadd.f32 %v2130, %v2131
        %v2133 = vsel %vm622, %v2022, 0.0
        %v2134 = vadd.f32 %v2132, %v2133
        %v2135 = vsel %vm622, %v2023, 0.0
        %v2136 = vadd.f32 %v2134, %v2135
        %v2137 = vsel %vm622, %v2024, 0.0
        %v2138 = vadd.f32 %v2136, %v2137
        %v2139 = vsel %vm622, %v2025, 0.0
        %v2140 = vadd.f32 %v2138, %v2139
        %v2141 = vsel %vm622, %v2026, 0.0
        %v2142 = vadd.f32 %v2140, %v2141
        %v2143 = vsel %vm622, %v2027, 0.0
        %v2144 = vadd.f32 %v2142, %v2143
        %v2145 = vsel %vm622, %v2028, 0.0
        %v2146 = vadd.f32 %v2144, %v2145
        %v2147 = vsel %vm622, %v2029, 0.0
        %v2148 = vadd.f32 %v2146, %v2147
        %v2149 = vsel %vm622, %v2030, 0.0
        %v2150 = vadd.f32 %v2148, %v2149
        %v2151 = vsel %vm622, %v2031, 0.0
        %v2152 = vadd.f32 %v2150, %v2151
        %v2153 = vsel %vm622, %v2032, 0.0
        %v2154 = vadd.f32 %v2152, %v2153
        %v2155 = vsel %vm622, %v2033, 0.0
        %v2156 = vadd.f32 %v2154, %v2155
        %v2157 = vsel %vm622, %v2034, 0.0
        %v2158 = vadd.f32 %v2156, %v2157
        %v2159 = vsel %vm622, %v2035, 0.0
        %v2160 = vadd.f32 %v2158, %v2159
        %v2161 = vsel %vm622, %v2036, 0.0
        %v2162 = vadd.f32 %v2160, %v2161
        %v2163 = vsel %vm622, %v2037, 0.0
        %v2164 = vadd.f32 %v2162, %v2163
        %v2165 = vrot.slane %v2164, 4
        %v2166 = vadd.f32 %v2164, %v2165
        %v2167 = vrot.slane %v2166, 2
        %v2168 = vadd.f32 %v2166, %v2167
        %v2169 = vrot.slane %v2168, 1
        %v2170 = vadd.f32 %v2168, %v2169
        %v2171 = vrcp.pop 512.0
        %v2172 = vmul.f32 %v2170, %v2171
        %v2173 = vsub.f32 %v1974, %v2172
        %v2174 = vsub.f32 %v1975, %v2172
        %v2175 = vsub.f32 %v1976, %v2172
        %v2176 = vsub.f32 %v1977, %v2172
        %v2177 = vsub.f32 %v1978, %v2172
        %v2178 = vsub.f32 %v1979, %v2172
        %v2179 = vsub.f32 %v1980, %v2172
        %v2180 = vsub.f32 %v1981, %v2172
        %v2181 = vsub.f32 %v1982, %v2172
        %v2182 = vsub.f32 %v1983, %v2172
        %v2183 = vsub.f32 %v1984, %v2172
        %v2184 = vsub.f32 %v1985, %v2172
        %v2185 = vsub.f32 %v1986, %v2172
        %v2186 = vsub.f32 %v1987, %v2172
        %v2187 = vsub.f32 %v1988, %v2172
        %v2188 = vsub.f32 %v1989, %v2172
        %v2189 = vsub.f32 %v1990, %v2172
        %v2190 = vsub.f32 %v1991, %v2172
        %v2191 = vsub.f32 %v1992, %v2172
        %v2192 = vsub.f32 %v1993, %v2172
        %v2193 = vsub.f32 %v1994, %v2172
        %v2194 = vsub.f32 %v1995, %v2172
        %v2195 = vsub.f32 %v1996, %v2172
        %v2196 = vsub.f32 %v1997, %v2172
        %v2197 = vsub.f32 %v1998, %v2172
        %v2198 = vsub.f32 %v1999, %v2172
        %v2199 = vsub.f32 %v2000, %v2172
        %v2200 = vsub.f32 %v2001, %v2172
        %v2201 = vsub.f32 %v2002, %v2172
        %v2202 = vsub.f32 %v2003, %v2172
        %v2203 = vsub.f32 %v2004, %v2172
        %v2204 = vsub.f32 %v2005, %v2172
        %v2205 = vsub.f32 %v2006, %v2172
        %v2206 = vsub.f32 %v2007, %v2172
        %v2207 = vsub.f32 %v2008, %v2172
        %v2208 = vsub.f32 %v2009, %v2172
        %v2209 = vsub.f32 %v2010, %v2172
        %v2210 = vsub.f32 %v2011, %v2172
        %v2211 = vsub.f32 %v2012, %v2172
        %v2212 = vsub.f32 %v2013, %v2172
        %v2213 = vsub.f32 %v2014, %v2172
        %v2214 = vsub.f32 %v2015, %v2172
        %v2215 = vsub.f32 %v2016, %v2172
        %v2216 = vsub.f32 %v2017, %v2172
        %v2217 = vsub.f32 %v2018, %v2172
        %v2218 = vsub.f32 %v2019, %v2172
        %v2219 = vsub.f32 %v2020, %v2172
        %v2220 = vsub.f32 %v2021, %v2172
        %v2221 = vsub.f32 %v2022, %v2172
        %v2222 = vsub.f32 %v2023, %v2172
        %v2223 = vsub.f32 %v2024, %v2172
        %v2224 = vsub.f32 %v2025, %v2172
        %v2225 = vsub.f32 %v2026, %v2172
        %v2226 = vsub.f32 %v2027, %v2172
        %v2227 = vsub.f32 %v2028, %v2172
        %v2228 = vsub.f32 %v2029, %v2172
        %v2229 = vsub.f32 %v2030, %v2172
        %v2230 = vsub.f32 %v2031, %v2172
        %v2231 = vsub.f32 %v2032, %v2172
        %v2232 = vsub.f32 %v2033, %v2172
        %v2233 = vsub.f32 %v2034, %v2172
        %v2234 = vsub.f32 %v2035, %v2172
        %v2235 = vsub.f32 %v2036, %v2172
        %v2236 = vsub.f32 %v2037, %v2172
        %v2237 = vmul.f32 %v2173, %v2173
        %v2238 = vmul.f32 %v2174, %v2174
        %v2239 = vmul.f32 %v2175, %v2175
        %v2240 = vmul.f32 %v2176, %v2176
        %v2241 = vmul.f32 %v2177, %v2177
        %v2242 = vmul.f32 %v2178, %v2178
        %v2243 = vmul.f32 %v2179, %v2179
        %v2244 = vmul.f32 %v2180, %v2180
        %v2245 = vmul.f32 %v2181, %v2181
        %v2246 = vmul.f32 %v2182, %v2182
        %v2247 = vmul.f32 %v2183, %v2183
        %v2248 = vmul.f32 %v2184, %v2184
        %v2249 = vmul.f32 %v2185, %v2185
        %v2250 = vmul.f32 %v2186, %v2186
        %v2251 = vmul.f32 %v2187, %v2187
        %v2252 = vmul.f32 %v2188, %v2188
        %v2253 = vmul.f32 %v2189, %v2189
        %v2254 = vmul.f32 %v2190, %v2190
        %v2255 = vmul.f32 %v2191, %v2191
        %v2256 = vmul.f32 %v2192, %v2192
        %v2257 = vmul.f32 %v2193, %v2193
        %v2258 = vmul.f32 %v2194, %v2194
        %v2259 = vmul.f32 %v2195, %v2195
        %v2260 = vmul.f32 %v2196, %v2196
        %v2261 = vmul.f32 %v2197, %v2197
        %v2262 = vmul.f32 %v2198, %v2198
        %v2263 = vmul.f32 %v2199, %v2199
        %v2264 = vmul.f32 %v2200, %v2200
        %v2265 = vmul.f32 %v2201, %v2201
        %v2266 = vmul.f32 %v2202, %v2202
        %v2267 = vmul.f32 %v2203, %v2203
        %v2268 = vmul.f32 %v2204, %v2204
        %v2269 = vmul.f32 %v2205, %v2205
        %v2270 = vmul.f32 %v2206, %v2206
        %v2271 = vmul.f32 %v2207, %v2207
        %v2272 = vmul.f32 %v2208, %v2208
        %v2273 = vmul.f32 %v2209, %v2209
        %v2274 = vmul.f32 %v2210, %v2210
        %v2275 = vmul.f32 %v2211, %v2211
        %v2276 = vmul.f32 %v2212, %v2212
        %v2277 = vmul.f32 %v2213, %v2213
        %v2278 = vmul.f32 %v2214, %v2214
        %v2279 = vmul.f32 %v2215, %v2215
        %v2280 = vmul.f32 %v2216, %v2216
        %v2281 = vmul.f32 %v2217, %v2217
        %v2282 = vmul.f32 %v2218, %v2218
        %v2283 = vmul.f32 %v2219, %v2219
        %v2284 = vmul.f32 %v2220, %v2220
        %v2285 = vmul.f32 %v2221, %v2221
        %v2286 = vmul.f32 %v2222, %v2222
        %v2287 = vmul.f32 %v2223, %v2223
        %v2288 = vmul.f32 %v2224, %v2224
        %v2289 = vmul.f32 %v2225, %v2225
        %v2290 = vmul.f32 %v2226, %v2226
        %v2291 = vmul.f32 %v2227, %v2227
        %v2292 = vmul.f32 %v2228, %v2228
        %v2293 = vmul.f32 %v2229, %v2229
        %v2294 = vmul.f32 %v2230, %v2230
        %v2295 = vmul.f32 %v2231, %v2231
        %v2296 = vmul.f32 %v2232, %v2232
        %v2297 = vmul.f32 %v2233, %v2233
        %v2298 = vmul.f32 %v2234, %v2234
        %v2299 = vmul.f32 %v2235, %v2235
        %v2300 = vmul.f32 %v2236, %v2236
        %v2301 = vsel %vm622, %v2237, 0.0
        %v2302 = vsel %vm622, %v2238, 0.0
        %v2303 = vadd.f32 %v2301, %v2302
        %v2304 = vsel %vm622, %v2239, 0.0
        %v2305 = vadd.f32 %v2303, %v2304
        %v2306 = vsel %vm622, %v2240, 0.0
        %v2307 = vadd.f32 %v2305, %v2306
        %v2308 = vsel %vm622, %v2241, 0.0
        %v2309 = vadd.f32 %v2307, %v2308
        %v2310 = vsel %vm622, %v2242, 0.0
        %v2311 = vadd.f32 %v2309, %v2310
        %v2312 = vsel %vm622, %v2243, 0.0
        %v2313 = vadd.f32 %v2311, %v2312
        %v2314 = vsel %vm622, %v2244, 0.0
        %v2315 = vadd.f32 %v2313, %v2314
        %v2316 = vsel %vm622, %v2245, 0.0
        %v2317 = vadd.f32 %v2315, %v2316
        %v2318 = vsel %vm622, %v2246, 0.0
        %v2319 = vadd.f32 %v2317, %v2318
        %v2320 = vsel %vm622, %v2247, 0.0
        %v2321 = vadd.f32 %v2319, %v2320
        %v2322 = vsel %vm622, %v2248, 0.0
        %v2323 = vadd.f32 %v2321, %v2322
        %v2324 = vsel %vm622, %v2249, 0.0
        %v2325 = vadd.f32 %v2323, %v2324
        %v2326 = vsel %vm622, %v2250, 0.0
        %v2327 = vadd.f32 %v2325, %v2326
        %v2328 = vsel %vm622, %v2251, 0.0
        %v2329 = vadd.f32 %v2327, %v2328
        %v2330 = vsel %vm622, %v2252, 0.0
        %v2331 = vadd.f32 %v2329, %v2330
        %v2332 = vsel %vm622, %v2253, 0.0
        %v2333 = vadd.f32 %v2331, %v2332
        %v2334 = vsel %vm622, %v2254, 0.0
        %v2335 = vadd.f32 %v2333, %v2334
        %v2336 = vsel %vm622, %v2255, 0.0
        %v2337 = vadd.f32 %v2335, %v2336
        %v2338 = vsel %vm622, %v2256, 0.0
        %v2339 = vadd.f32 %v2337, %v2338
        %v2340 = vsel %vm622, %v2257, 0.0
        %v2341 = vadd.f32 %v2339, %v2340
        %v2342 = vsel %vm622, %v2258, 0.0
        %v2343 = vadd.f32 %v2341, %v2342
        %v2344 = vsel %vm622, %v2259, 0.0
        %v2345 = vadd.f32 %v2343, %v2344
        %v2346 = vsel %vm622, %v2260, 0.0
        %v2347 = vadd.f32 %v2345, %v2346
        %v2348 = vsel %vm622, %v2261, 0.0
        %v2349 = vadd.f32 %v2347, %v2348
        %v2350 = vsel %vm622, %v2262, 0.0
        %v2351 = vadd.f32 %v2349, %v2350
        %v2352 = vsel %vm622, %v2263, 0.0
        %v2353 = vadd.f32 %v2351, %v2352
        %v2354 = vsel %vm622, %v2264, 0.0
        %v2355 = vadd.f32 %v2353, %v2354
        %v2356 = vsel %vm622, %v2265, 0.0
        %v2357 = vadd.f32 %v2355, %v2356
        %v2358 = vsel %vm622, %v2266, 0.0
        %v2359 = vadd.f32 %v2357, %v2358
        %v2360 = vsel %vm622, %v2267, 0.0
        %v2361 = vadd.f32 %v2359, %v2360
        %v2362 = vsel %vm622, %v2268, 0.0
        %v2363 = vadd.f32 %v2361, %v2362
        %v2364 = vsel %vm622, %v2269, 0.0
        %v2365 = vadd.f32 %v2363, %v2364
        %v2366 = vsel %vm622, %v2270, 0.0
        %v2367 = vadd.f32 %v2365, %v2366
        %v2368 = vsel %vm622, %v2271, 0.0
        %v2369 = vadd.f32 %v2367, %v2368
        %v2370 = vsel %vm622, %v2272, 0.0
        %v2371 = vadd.f32 %v2369, %v2370
        %v2372 = vsel %vm622, %v2273, 0.0
        %v2373 = vadd.f32 %v2371, %v2372
        %v2374 = vsel %vm622, %v2274, 0.0
        %v2375 = vadd.f32 %v2373, %v2374
        %v2376 = vsel %vm622, %v2275, 0.0
        %v2377 = vadd.f32 %v2375, %v2376
        %v2378 = vsel %vm622, %v2276, 0.0
        %v2379 = vadd.f32 %v2377, %v2378
        %v2380 = vsel %vm622, %v2277, 0.0
        %v2381 = vadd.f32 %v2379, %v2380
        %v2382 = vsel %vm622, %v2278, 0.0
        %v2383 = vadd.f32 %v2381, %v2382
        %v2384 = vsel %vm622, %v2279, 0.0
        %v2385 = vadd.f32 %v2383, %v2384
        %v2386 = vsel %vm622, %v2280, 0.0
        %v2387 = vadd.f32 %v2385, %v2386
        %v2388 = vsel %vm622, %v2281, 0.0
        %v2389 = vadd.f32 %v2387, %v2388
        %v2390 = vsel %vm622, %v2282, 0.0
        %v2391 = vadd.f32 %v2389, %v2390
        %v2392 = vsel %vm622, %v2283, 0.0
        %v2393 = vadd.f32 %v2391, %v2392
        %v2394 = vsel %vm622, %v2284, 0.0
        %v2395 = vadd.f32 %v2393, %v2394
        %v2396 = vsel %vm622, %v2285, 0.0
        %v2397 = vadd.f32 %v2395, %v2396
        %v2398 = vsel %vm622, %v2286, 0.0
        %v2399 = vadd.f32 %v2397, %v2398
        %v2400 = vsel %vm622, %v2287, 0.0
        %v2401 = vadd.f32 %v2399, %v2400
        %v2402 = vsel %vm622, %v2288, 0.0
        %v2403 = vadd.f32 %v2401, %v2402
        %v2404 = vsel %vm622, %v2289, 0.0
        %v2405 = vadd.f32 %v2403, %v2404
        %v2406 = vsel %vm622, %v2290, 0.0
        %v2407 = vadd.f32 %v2405, %v2406
        %v2408 = vsel %vm622, %v2291, 0.0
        %v2409 = vadd.f32 %v2407, %v2408
        %v2410 = vsel %vm622, %v2292, 0.0
        %v2411 = vadd.f32 %v2409, %v2410
        %v2412 = vsel %vm622, %v2293, 0.0
        %v2413 = vadd.f32 %v2411, %v2412
        %v2414 = vsel %vm622, %v2294, 0.0
        %v2415 = vadd.f32 %v2413, %v2414
        %v2416 = vsel %vm622, %v2295, 0.0
        %v2417 = vadd.f32 %v2415, %v2416
        %v2418 = vsel %vm622, %v2296, 0.0
        %v2419 = vadd.f32 %v2417, %v2418
        %v2420 = vsel %vm622, %v2297, 0.0
        %v2421 = vadd.f32 %v2419, %v2420
        %v2422 = vsel %vm622, %v2298, 0.0
        %v2423 = vadd.f32 %v2421, %v2422
        %v2424 = vsel %vm622, %v2299, 0.0
        %v2425 = vadd.f32 %v2423, %v2424
        %v2426 = vsel %vm622, %v2300, 0.0
        %v2427 = vadd.f32 %v2425, %v2426
        %v2428 = vrot.slane %v2427, 4
        %v2429 = vadd.f32 %v2427, %v2428
        %v2430 = vrot.slane %v2429, 2
        %v2431 = vadd.f32 %v2429, %v2430
        %v2432 = vrot.slane %v2431, 1
        %v2433 = vadd.f32 %v2431, %v2432
        %v2434 = vmul.f32 %v2433, %v2171
        %v2435 = vld [vmem:[%s2] sm:$0x1]
        %v2436 = vld [vmem:[%s3] sm:$0x1]
        %v2437 = vadd.f32 %v2434, 1e-05
        %v2438 = vrsqrt.pop %v2437
        %v2439 = vmul.f32 %v2173, %v2438
        %v2440 = vmul.f32 %v2174, %v2438
        %v2441 = vmul.f32 %v2175, %v2438
        %v2442 = vmul.f32 %v2176, %v2438
        %v2443 = vmul.f32 %v2177, %v2438
        %v2444 = vmul.f32 %v2178, %v2438
        %v2445 = vmul.f32 %v2179, %v2438
        %v2446 = vmul.f32 %v2180, %v2438
        %v2447 = vmul.f32 %v2181, %v2438
        %v2448 = vmul.f32 %v2182, %v2438
        %v2449 = vmul.f32 %v2183, %v2438
        %v2450 = vmul.f32 %v2184, %v2438
        %v2451 = vmul.f32 %v2185, %v2438
        %v2452 = vmul.f32 %v2186, %v2438
        %v2453 = vmul.f32 %v2187, %v2438
        %v2454 = vmul.f32 %v2188, %v2438
        %v2455 = vmul.f32 %v2189, %v2438
        %v2456 = vmul.f32 %v2190, %v2438
        %v2457 = vmul.f32 %v2191, %v2438
        %v2458 = vmul.f32 %v2192, %v2438
        %v2459 = vmul.f32 %v2193, %v2438
        %v2460 = vmul.f32 %v2194, %v2438
        %v2461 = vmul.f32 %v2195, %v2438
        %v2462 = vmul.f32 %v2196, %v2438
        %v2463 = vmul.f32 %v2197, %v2438
        %v2464 = vmul.f32 %v2198, %v2438
        %v2465 = vmul.f32 %v2199, %v2438
        %v2466 = vmul.f32 %v2200, %v2438
        %v2467 = vmul.f32 %v2201, %v2438
        %v2468 = vmul.f32 %v2202, %v2438
        %v2469 = vmul.f32 %v2203, %v2438
        %v2470 = vmul.f32 %v2204, %v2438
        %v2471 = vmul.f32 %v2205, %v2438
        %v2472 = vmul.f32 %v2206, %v2438
        %v2473 = vmul.f32 %v2207, %v2438
        %v2474 = vmul.f32 %v2208, %v2438
        %v2475 = vmul.f32 %v2209, %v2438
        %v2476 = vmul.f32 %v2210, %v2438
        %v2477 = vmul.f32 %v2211, %v2438
        %v2478 = vmul.f32 %v2212, %v2438
        %v2479 = vmul.f32 %v2213, %v2438
        %v2480 = vmul.f32 %v2214, %v2438
        %v2481 = vmul.f32 %v2215, %v2438
        %v2482 = vmul.f32 %v2216, %v2438
        %v2483 = vmul.f32 %v2217, %v2438
        %v2484 = vmul.f32 %v2218, %v2438
        %v2485 = vmul.f32 %v2219, %v2438
        %v2486 = vmul.f32 %v2220, %v2438
        %v2487 = vmul.f32 %v2221, %v2438
        %v2488 = vmul.f32 %v2222, %v2438
        %v2489 = vmul.f32 %v2223, %v2438
        %v2490 = vmul.f32 %v2224, %v2438
        %v2491 = vmul.f32 %v2225, %v2438
        %v2492 = vmul.f32 %v2226, %v2438
        %v2493 = vmul.f32 %v2227, %v2438
        %v2494 = vmul.f32 %v2228, %v2438
        %v2495 = vmul.f32 %v2229, %v2438
        %v2496 = vmul.f32 %v2230, %v2438
        %v2497 = vmul.f32 %v2231, %v2438
        %v2498 = vmul.f32 %v2232, %v2438
        %v2499 = vmul.f32 %v2233, %v2438
        %v2500 = vmul.f32 %v2234, %v2438
        %v2501 = vmul.f32 %v2235, %v2438
        %v2502 = vmul.f32 %v2236, %v2438
        %v2504 = vlaneseq
        %v2505 = vshrl.u32 %v2504, 7
        %v2506 = vsub.s32 0, %v2505
        %v2507 = vrot.slane %v2435, %v2506
        %v2509 = vmul.f32 %v2439, %v2507
        %v2510 = vmul.f32 %v2440, %v2507
        %v2511 = vmul.f32 %v2441, %v2507
        %v2512 = vmul.f32 %v2442, %v2507
        %v2513 = vmul.f32 %v2443, %v2507
        %v2514 = vmul.f32 %v2444, %v2507
        %v2515 = vmul.f32 %v2445, %v2507
        %v2516 = vmul.f32 %v2446, %v2507
        %v2517 = vmul.f32 %v2447, %v2507
        %v2518 = vmul.f32 %v2448, %v2507
        %v2519 = vmul.f32 %v2449, %v2507
        %v2520 = vmul.f32 %v2450, %v2507
        %v2521 = vmul.f32 %v2451, %v2507
        %v2522 = vmul.f32 %v2452, %v2507
        %v2523 = vmul.f32 %v2453, %v2507
        %v2524 = vmul.f32 %v2454, %v2507
        %v2525 = vmul.f32 %v2455, %v2507
        %v2526 = vmul.f32 %v2456, %v2507
        %v2527 = vmul.f32 %v2457, %v2507
        %v2528 = vmul.f32 %v2458, %v2507
        %v2529 = vmul.f32 %v2459, %v2507
        %v2530 = vmul.f32 %v2460, %v2507
        %v2531 = vmul.f32 %v2461, %v2507
        %v2532 = vmul.f32 %v2462, %v2507
        %v2533 = vmul.f32 %v2463, %v2507
        %v2534 = vmul.f32 %v2464, %v2507
        %v2535 = vmul.f32 %v2465, %v2507
        %v2536 = vmul.f32 %v2466, %v2507
        %v2537 = vmul.f32 %v2467, %v2507
        %v2538 = vmul.f32 %v2468, %v2507
        %v2539 = vmul.f32 %v2469, %v2507
        %v2540 = vmul.f32 %v2470, %v2507
        %v2541 = vmul.f32 %v2471, %v2507
        %v2542 = vmul.f32 %v2472, %v2507
        %v2543 = vmul.f32 %v2473, %v2507
        %v2544 = vmul.f32 %v2474, %v2507
        %v2545 = vmul.f32 %v2475, %v2507
        %v2546 = vmul.f32 %v2476, %v2507
        %v2547 = vmul.f32 %v2477, %v2507
        %v2548 = vmul.f32 %v2478, %v2507
        %v2549 = vmul.f32 %v2479, %v2507
        %v2550 = vmul.f32 %v2480, %v2507
        %v2551 = vmul.f32 %v2481, %v2507
        %v2552 = vmul.f32 %v2482, %v2507
        %v2553 = vmul.f32 %v2483, %v2507
        %v2554 = vmul.f32 %v2484, %v2507
        %v2555 = vmul.f32 %v2485, %v2507
        %v2556 = vmul.f32 %v2486, %v2507
        %v2557 = vmul.f32 %v2487, %v2507
        %v2558 = vmul.f32 %v2488, %v2507
        %v2559 = vmul.f32 %v2489, %v2507
        %v2560 = vmul.f32 %v2490, %v2507
        %v2561 = vmul.f32 %v2491, %v2507
        %v2562 = vmul.f32 %v2492, %v2507
        %v2563 = vmul.f32 %v2493, %v2507
        %v2564 = vmul.f32 %v2494, %v2507
        %v2565 = vmul.f32 %v2495, %v2507
        %v2566 = vmul.f32 %v2496, %v2507
        %v2567 = vmul.f32 %v2497, %v2507
        %v2568 = vmul.f32 %v2498, %v2507
        %v2569 = vmul.f32 %v2499, %v2507
        %v2570 = vmul.f32 %v2500, %v2507
        %v2571 = vmul.f32 %v2501, %v2507
        %v2572 = vmul.f32 %v2502, %v2507
        %v2574 = vlaneseq
        %v2575 = vshrl.u32 %v2574, 7
        %v2576 = vsub.s32 0, %v2575
        %v2577 = vrot.slane %v2436, %v2576
        %v2579 = vadd.f32 %v2509, %v2577
        %v2580 = vadd.f32 %v2510, %v2577
        %v2581 = vadd.f32 %v2511, %v2577
        %v2582 = vadd.f32 %v2512, %v2577
        %v2583 = vadd.f32 %v2513, %v2577
        %v2584 = vadd.f32 %v2514, %v2577
        %v2585 = vadd.f32 %v2515, %v2577
        %v2586 = vadd.f32 %v2516, %v2577
        %v2587 = vadd.f32 %v2517, %v2577
        %v2588 = vadd.f32 %v2518, %v2577
        %v2589 = vadd.f32 %v2519, %v2577
        %v2590 = vadd.f32 %v2520, %v2577
        %v2591 = vadd.f32 %v2521, %v2577
        %v2592 = vadd.f32 %v2522, %v2577
        %v2593 = vadd.f32 %v2523, %v2577
        %v2594 = vadd.f32 %v2524, %v2577
        %v2595 = vadd.f32 %v2525, %v2577
        %v2596 = vadd.f32 %v2526, %v2577
        %v2597 = vadd.f32 %v2527, %v2577
        %v2598 = vadd.f32 %v2528, %v2577
        %v2599 = vadd.f32 %v2529, %v2577
        %v2600 = vadd.f32 %v2530, %v2577
        %v2601 = vadd.f32 %v2531, %v2577
        %v2602 = vadd.f32 %v2532, %v2577
        %v2603 = vadd.f32 %v2533, %v2577
        %v2604 = vadd.f32 %v2534, %v2577
        %v2605 = vadd.f32 %v2535, %v2577
        %v2606 = vadd.f32 %v2536, %v2577
        %v2607 = vadd.f32 %v2537, %v2577
        %v2608 = vadd.f32 %v2538, %v2577
        %v2609 = vadd.f32 %v2539, %v2577
        %v2610 = vadd.f32 %v2540, %v2577
        %v2611 = vadd.f32 %v2541, %v2577
        %v2612 = vadd.f32 %v2542, %v2577
        %v2613 = vadd.f32 %v2543, %v2577
        %v2614 = vadd.f32 %v2544, %v2577
        %v2615 = vadd.f32 %v2545, %v2577
        %v2616 = vadd.f32 %v2546, %v2577
        %v2617 = vadd.f32 %v2547, %v2577
        %v2618 = vadd.f32 %v2548, %v2577
        %v2619 = vadd.f32 %v2549, %v2577
        %v2620 = vadd.f32 %v2550, %v2577
        %v2621 = vadd.f32 %v2551, %v2577
        %v2622 = vadd.f32 %v2552, %v2577
        %v2623 = vadd.f32 %v2553, %v2577
        %v2624 = vadd.f32 %v2554, %v2577
        %v2625 = vadd.f32 %v2555, %v2577
        %v2626 = vadd.f32 %v2556, %v2577
        %v2627 = vadd.f32 %v2557, %v2577
        %v2628 = vadd.f32 %v2558, %v2577
        %v2629 = vadd.f32 %v2559, %v2577
        %v2630 = vadd.f32 %v2560, %v2577
        %v2631 = vadd.f32 %v2561, %v2577
        %v2632 = vadd.f32 %v2562, %v2577
        %v2633 = vadd.f32 %v2563, %v2577
        %v2634 = vadd.f32 %v2564, %v2577
        %v2635 = vadd.f32 %v2565, %v2577
        %v2636 = vadd.f32 %v2566, %v2577
        %v2637 = vadd.f32 %v2567, %v2577
        %v2638 = vadd.f32 %v2568, %v2577
        %v2639 = vadd.f32 %v2569, %v2577
        %v2640 = vadd.f32 %v2570, %v2577
        %v2641 = vadd.f32 %v2571, %v2577
        %v2642 = vadd.f32 %v2572, %v2577
        %2643 = vst.msk [vmem:[%s4] sm:$0xff] %vm622, %v2579
        %2644 = vst.msk [vmem:[%s4 + $0x8] sm:$0xff] %vm622, %v2580
        %2645 = vst.msk [vmem:[%s4 + $0x10] sm:$0xff] %vm622, %v2581
        %2646 = vst.msk [vmem:[%s4 + $0x18] sm:$0xff] %vm622, %v2582
        %2647 = vst.msk [vmem:[%s4 + $0x20] sm:$0xff] %vm622, %v2583
        %2648 = vst.msk [vmem:[%s4 + $0x28] sm:$0xff] %vm622, %v2584
        %2649 = vst.msk [vmem:[%s4 + $0x30] sm:$0xff] %vm622, %v2585
        %2650 = vst.msk [vmem:[%s4 + $0x38] sm:$0xff] %vm622, %v2586
        %2651 = vst.msk [vmem:[%s4 + $0x40] sm:$0xff] %vm622, %v2587
        %2652 = vst.msk [vmem:[%s4 + $0x48] sm:$0xff] %vm622, %v2588
        %2653 = vst.msk [vmem:[%s4 + $0x50] sm:$0xff] %vm622, %v2589
        %2654 = vst.msk [vmem:[%s4 + $0x58] sm:$0xff] %vm622, %v2590
        %2655 = vst.msk [vmem:[%s4 + $0x60] sm:$0xff] %vm622, %v2591
        %2656 = vst.msk [vmem:[%s4 + $0x68] sm:$0xff] %vm622, %v2592
        %2657 = vst.msk [vmem:[%s4 + $0x70] sm:$0xff] %vm622, %v2593
        %2658 = vst.msk [vmem:[%s4 + $0x78] sm:$0xff] %vm622, %v2594
        %2659 = vst.msk [vmem:[%s4 + $0x80] sm:$0xff] %vm622, %v2595
        %2660 = vst.msk [vmem:[%s4 + $0x88] sm:$0xff] %vm622, %v2596
        %2661 = vst.msk [vmem:[%s4 + $0x90] sm:$0xff] %vm622, %v2597
        %2662 = vst.msk [vmem:[%s4 + $0x98] sm:$0xff] %vm622, %v2598
        %2663 = vst.msk [vmem:[%s4 + $0xa0] sm:$0xff] %vm622, %v2599
        %2664 = vst.msk [vmem:[%s4 + $0xa8] sm:$0xff] %vm622, %v2600
        %2665 = vst.msk [vmem:[%s4 + $0xb0] sm:$0xff] %vm622, %v2601
        %2666 = vst.msk [vmem:[%s4 + $0xb8] sm:$0xff] %vm622, %v2602
        %2667 = vst.msk [vmem:[%s4 + $0xc0] sm:$0xff] %vm622, %v2603
        %2668 = vst.msk [vmem:[%s4 + $0xc8] sm:$0xff] %vm622, %v2604
        %2669 = vst.msk [vmem:[%s4 + $0xd0] sm:$0xff] %vm622, %v2605
        %2670 = vst.msk [vmem:[%s4 + $0xd8] sm:$0xff] %vm622, %v2606
        %2671 = vst.msk [vmem:[%s4 + $0xe0] sm:$0xff] %vm622, %v2607
        %2672 = vst.msk [vmem:[%s4 + $0xe8] sm:$0xff] %vm622, %v2608
        %2673 = vst.msk [vmem:[%s4 + $0xf0] sm:$0xff] %vm622, %v2609
        %2674 = vst.msk [vmem:[%s4 + $0xf8] sm:$0xff] %vm622, %v2610
        %2675 = vst.msk [vmem:[%s4 + $0x100] sm:$0xff] %vm622, %v2611
        %2676 = vst.msk [vmem:[%s4 + $0x108] sm:$0xff] %vm622, %v2612
        %2677 = vst.msk [vmem:[%s4 + $0x110] sm:$0xff] %vm622, %v2613
        %2678 = vst.msk [vmem:[%s4 + $0x118] sm:$0xff] %vm622, %v2614
        %2679 = vst.msk [vmem:[%s4 + $0x120] sm:$0xff] %vm622, %v2615
        %2680 = vst.msk [vmem:[%s4 + $0x128] sm:$0xff] %vm622, %v2616
        %2681 = vst.msk [vmem:[%s4 + $0x130] sm:$0xff] %vm622, %v2617
        %2682 = vst.msk [vmem:[%s4 + $0x138] sm:$0xff] %vm622, %v2618
        %2683 = vst.msk [vmem:[%s4 + $0x140] sm:$0xff] %vm622, %v2619
        %2684 = vst.msk [vmem:[%s4 + $0x148] sm:$0xff] %vm622, %v2620
        %2685 = vst.msk [vmem:[%s4 + $0x150] sm:$0xff] %vm622, %v2621
        %2686 = vst.msk [vmem:[%s4 + $0x158] sm:$0xff] %vm622, %v2622
        %2687 = vst.msk [vmem:[%s4 + $0x160] sm:$0xff] %vm622, %v2623
        %2688 = vst.msk [vmem:[%s4 + $0x168] sm:$0xff] %vm622, %v2624
        %2689 = vst.msk [vmem:[%s4 + $0x170] sm:$0xff] %vm622, %v2625
        %2690 = vst.msk [vmem:[%s4 + $0x178] sm:$0xff] %vm622, %v2626
        %2691 = vst.msk [vmem:[%s4 + $0x180] sm:$0xff] %vm622, %v2627
        %2692 = vst.msk [vmem:[%s4 + $0x188] sm:$0xff] %vm622, %v2628
        %2693 = vst.msk [vmem:[%s4 + $0x190] sm:$0xff] %vm622, %v2629
        %2694 = vst.msk [vmem:[%s4 + $0x198] sm:$0xff] %vm622, %v2630
        %2695 = vst.msk [vmem:[%s4 + $0x1a0] sm:$0xff] %vm622, %v2631
        %2696 = vst.msk [vmem:[%s4 + $0x1a8] sm:$0xff] %vm622, %v2632
        %2697 = vst.msk [vmem:[%s4 + $0x1b0] sm:$0xff] %vm622, %v2633
        %2698 = vst.msk [vmem:[%s4 + $0x1b8] sm:$0xff] %vm622, %v2634
        %2699 = vst.msk [vmem:[%s4 + $0x1c0] sm:$0xff] %vm622, %v2635
        %2700 = vst.msk [vmem:[%s4 + $0x1c8] sm:$0xff] %vm622, %v2636
        %2701 = vst.msk [vmem:[%s4 + $0x1d0] sm:$0xff] %vm622, %v2637
        %2702 = vst.msk [vmem:[%s4 + $0x1d8] sm:$0xff] %vm622, %v2638
        %2703 = vst.msk [vmem:[%s4 + $0x1e0] sm:$0xff] %vm622, %v2639
        %2704 = vst.msk [vmem:[%s4 + $0x1e8] sm:$0xff] %vm622, %v2640
        %2705 = vst.msk [vmem:[%s4 + $0x1f0] sm:$0xff] %vm622, %v2641
        %2706 = vst.msk [vmem:[%s4 + $0x1f8] sm:$0xff] %vm622, %v2642
      $region40: #{unet_skip_innermost.3} parent=35 // pred_fallthru
        _
      // Predicated region
      $region41: #{unet_skip_innermost.3} parent=35 // pred_check
        %p2707 = pneg %p117
      $region42: #{unet_skip_innermost.3} parent=35 // pred_check_branch
        %2709 = sbr.rel (%p2707) target = $region44
      $region43: #{unet_skip_innermost.3} parent=35 // pred_region
        _
      $region44: #{unet_skip_innermost.3} parent=35 // pred_fallthru
        _
      // Predicated region
      $region45: #{unet_skip_innermost.3} parent=35 // pred_check
        %p2710 = pneg %p117
      $region46: #{unet_skip_innermost.3} parent=35 // pred_check_branch
        %2712 = sbr.rel (%p2710) target = $region48
      $region47: #{unet_skip_innermost.3} parent=35 // pred_region
        _
      $region48: #{unet_skip_innermost.3} parent=35 // pred_fallthru
        _
    $region36: #{unet_skip_innermost.3} parent=5 // pred_fallthru
      _
    %p2713 = scmp.le.s32.totalorder 2, %s10
    // Predicated region
    $region49: #{unet_skip_innermost.3} parent=5 // pred_check
      %p2714 = pneg %p2713
    $region50: #{unet_skip_innermost.3} parent=5 // pred_check_branch
      %2716 = sbr.rel (%p2714) target = $region52
    $region51: #{unet_skip_innermost.3} parent=5 // pred_region
      %s2717 = ssub.s32 %s10, 2
    $region52: #{unet_skip_innermost.3} parent=5 // pred_fallthru
      _
  $region6: #{unet_skip_innermost.3} parent=0 // loop_footer
    %s14 = sadd.s32 1, %s10
  $region7: #{unet_skip_innermost.3} parent=0 // loop_footer_branch
    %9 = sbr.rel target = $region3
  $region8: #{unet_skip_innermost.3} parent=0 // loop_exit
    _

</llo_original>
